<compile_context>
chip_gen: v7x
topology: tpu7x:2x2x1
jax: 0.10.0
libtpu: 0.0.40
codegen_flags: <defaults>
</compile_context>

<pallas_src>
import functools

import jax
import jax.numpy as jnp
from jax import lax
from jax.experimental import pallas as pl
from jax.experimental.pallas import tpu as pltpu

# ---- small config (consistent with the module, scaled down) -----------------
NUM_EMB = 100          # num_embeddings
E       = 16           # embedding_dim
H       = 32           # hidden_dim[0] == hidden_dim[1] == hidden_dim[2]
MLP     = 64           # mlp_dim
MAXLEN  = 60           # max_sequence_len
TCHUNK  = 8            # time chunk for the hoisted input projection


# ---- fused encoder + classifier kernel ---------------------------------------
def _fused_kernel(lens_ref, x_ref, wx_ref, wprev_ref, whh_ref, bias_ref,
                  w1_ref, b1_ref, w2_ref, b2_ref, o_ref,
                  xg_ref, o1f_ref, o1b_ref, o2f_ref, o2b_ref,
                  *, T, B, Bp, H, E, TC):
    f32 = jnp.float32
    lens = lens_ref[...]                                   # (Bp, 1) int32, loaded once

    # -- hoisted input projection: xg[t] = x[t]@Wx (+ prev[t]@Wprev) + bias ----
    # Gates for both directions are produced together: lanes [0:4H) fwd,
    # [4H:8H) bwd, so the recurrence only slices at vreg-aligned boundaries.
    def project(layer, prev_chunk_fn):
        wx = wx_ref[layer]                                 # (E, 8H)
        bias = bias_ref[layer]                             # (1, 8H)
        if prev_chunk_fn is not None:
            wpf = wprev_ref[layer - 1, 0]                  # (H, 8H)
            wpb = wprev_ref[layer - 1, 1]                  # (H, 8H)
        for ci in range(T // TC):                          # static unrolled chunk loop
            t0 = ci * TC
            xc = x_ref[t0:t0 + TC].reshape(TC * Bp, E)
            g = jnp.dot(xc, wx, preferred_element_type=f32)
            if prev_chunk_fn is not None:
                pf, pb = prev_chunk_fn(t0)                 # each (TC*Bp, H)
                g = g + jnp.dot(pf, wpf, preferred_element_type=f32)
                g = g + jnp.dot(pb, wpb, preferred_element_type=f32)
            g = g + bias
            xg_ref[t0:t0 + TC] = g.reshape(TC, Bp, 8 * H)

    # -- one direction of one LSTM layer; optionally fuse the time-max pool ----
    def recur(layer, direction, out_ref=None, pool=False):
        whh = whh_ref[layer, direction]                    # (H, 4H), loaded once
        lane0 = direction * 4 * H                          # vreg-aligned gate slice
        h0 = jnp.zeros((Bp, H), f32)
        c0 = jnp.zeros((Bp, H), f32)

        def step(s, carry):
            if pool:
                h, c, mx = carry
            else:
                h, c = carry
            t = s if direction == 0 else T - 1 - s
            gates = (xg_ref[t][:, lane0:lane0 + 4 * H]
                     + jnp.dot(h, whh, preferred_element_type=f32))  # (Bp, 128)
            # full-width nonlinearities (one EUP pass each), then cheap slices
            sg = jax.nn.sigmoid(gates)
            tg = jnp.tanh(gates)
            i_g = sg[:, 0:H]
            f_g = sg[:, H:2 * H]
            o_g = sg[:, 3 * H:4 * H]
            g_g = tg[:, 2 * H:3 * H]
            c_new = f_g * c + i_g * g_g
            h_new = o_g * jnp.tanh(c_new)
            mask = t < lens                                # (Bp, 1) per-example valid
            h_keep = jnp.where(mask, h_new, h)
            c_keep = jnp.where(mask, c_new, c)
            if pool:
                mx = jnp.maximum(mx, jnp.where(mask, h_new, -jnp.inf))
                return h_keep, c_keep, mx
            out_ref[t] = jnp.where(mask, h_new, 0.0)       # padded positions -> 0
            return h_keep, c_keep

        if pool:
            mx0 = jnp.full((Bp, H), -jnp.inf, f32)
            _, _, mx = lax.fori_loop(0, T, step, (h0, c0, mx0))
            return mx
        lax.fori_loop(0, T, step, (h0, c0))
        return None

    # ---- layer 0 (lstm): input = x ----
    project(0, None)
    recur(0, 0, o1f_ref)
    recur(0, 1, o1b_ref)

    # ---- layer 1 (lstm_1): input = [x, out1] ----
    def prev1(t0):
        return (o1f_ref[t0:t0 + TC].reshape(TC * Bp, H),
                o1b_ref[t0:t0 + TC].reshape(TC * Bp, H))
    project(1, prev1)
    recur(1, 0, o2f_ref)
    recur(1, 1, o2b_ref)

    # ---- layer 2 (lstm_2): input = [x, out1 + out2], pooled on the fly ----
    def prev2(t0):
        pf = (o1f_ref[t0:t0 + TC] + o2f_ref[t0:t0 + TC]).reshape(TC * Bp, H)
        pb = (o1b_ref[t0:t0 + TC] + o2b_ref[t0:t0 + TC]).reshape(TC * Bp, H)
        return pf, pb
    project(2, prev2)
    mx_f = recur(2, 0, pool=True)                          # (Bp, H)
    mx_b = recur(2, 1, pool=True)                          # (Bp, H)

    # ---- feature combine + classifier (mlp_1 -> ReLU -> final_layer) --------
    pooled = jnp.concatenate([mx_f, mx_b], axis=1)         # (Bp, 2H)
    m1 = pooled[0:B]                                       # sentence 1 rows
    m2 = pooled[B:2 * B]                                   # sentence 2 rows
    # features = [m1, m2, |m1-m2|, m1*m2] applied via a row-split of W1
    hid = (jnp.dot(m1, w1_ref[0:2 * H], preferred_element_type=f32)
           + jnp.dot(m2, w1_ref[2 * H:4 * H], preferred_element_type=f32)
           + jnp.dot(jnp.abs(m1 - m2), w1_ref[4 * H:6 * H], preferred_element_type=f32)
           + jnp.dot(m1 * m2, w1_ref[6 * H:8 * H], preferred_element_type=f32)
           + b1_ref[...])
    hid = jnp.maximum(hid, 0.0)                            # ReLU; dropout = identity (eval)
    o_ref[...] = jnp.dot(hid, w2_ref[...], preferred_element_type=f32) + b2_ref[...]


def _full_spec(shape):
    n = len(shape)
    return pl.BlockSpec(shape, lambda i, _n=n: (0,) * _n)


def fused_encode_classify(lens2d, x, wx, wprev, whh, bias, w1, b1, w2, b2, *, B):
    T, Bp, Edim = x.shape
    assert T % TCHUNK == 0 and Bp % 8 == 0
    kernel = functools.partial(_fused_kernel, T=T, B=B, Bp=Bp, H=H, E=Edim, TC=TCHUNK)
    ins = [lens2d, x, wx, wprev, whh, bias, w1, b1, w2, b2]
    return pl.pallas_call(
        kernel,
        out_shape=jax.ShapeDtypeStruct((B, 3), jnp.float32),
        grid=(1,),
        in_specs=[_full_spec(a.shape) for a in ins],
        out_specs=_full_spec((B, 3)),
        scratch_shapes=[
            pltpu.VMEM((T, Bp, 8 * H), jnp.float32),       # hoisted gate pre-activations
            pltpu.VMEM((T, Bp, H), jnp.float32),           # layer1 fwd outputs
            pltpu.VMEM((T, Bp, H), jnp.float32),           # layer1 bwd outputs
            pltpu.VMEM((T, Bp, H), jnp.float32),           # layer2 fwd outputs
            pltpu.VMEM((T, Bp, H), jnp.float32),           # layer2 bwd outputs
        ],
        compiler_params=pltpu.CompilerParams(
            dimension_semantics=("arbitrary",)),
    )(*ins)


# ---- parameters (deterministic synthetic init) -------------------------------
def init_params(key):
    def u(k, shape, scale=0.08):
        return jax.random.uniform(k, shape, jnp.float32, -scale, scale)

    keys = iter(jax.random.split(key, 32))
    params = {'embedding': u(next(keys), (NUM_EMB, E), 0.5)}
    in_dims = [E, E + 2 * H, E + 2 * H]        # lstm, lstm_1, lstm_2 input sizes
    for layer, din in enumerate(in_dims):
        for d in ('f', 'b'):                   # forward / reverse directions
            params[f'lstm{layer}_{d}'] = (
                u(next(keys), (din, 4 * H)),   # W_ih^T (gate order i,f,g,o)
                u(next(keys), (H, 4 * H)),     # W_hh^T
                u(next(keys), (4 * H,)),       # b_ih + b_hh combined
            )
    params['w1'] = u(next(keys), (8 * H, MLP))   # mlp_1
    params['b1'] = u(next(keys), (MLP,))
    params['w2'] = u(next(keys), (MLP, 3))       # final_layer
    params['b2'] = u(next(keys), (3,))
    return params


def pack_lstm_weights(params):
    """Repack per-direction LSTM weights into the stacked kernel layout."""
    wx, wprev, whh, bias = [], [], [], []
    for layer in range(3):
        wih_f, whh_f, b_f = params[f'lstm{layer}_f']
        wih_b, whh_b, b_b = params[f'lstm{layer}_b']
        wih_cat = jnp.concatenate([wih_f, wih_b], axis=1)          # (Din, 8H): fwd|bwd gates
        wx.append(wih_cat[:E])                                     # x-part rows
        if layer > 0:                                              # prev-output part rows
            wprev.append(jnp.stack([wih_cat[E:E + H],              # fwd half of prev
                                    wih_cat[E + H:E + 2 * H]]))    # bwd half of prev
        whh.append(jnp.stack([whh_f, whh_b]))
        bias.append(jnp.concatenate([b_f, b_b]).reshape(1, 8 * H))
    return (jnp.stack(wx),        # (3, E, 8H)
            jnp.stack(wprev),     # (2, 2, H, 8H)
            jnp.stack(whh),       # (3, 2, H, 4H)
            jnp.stack(bias))      # (3, 1, 8H)


# ---- full forward (jitted, fixed shapes) --------------------------------------
def _pad_axis(a, axis, target):
    pad = [(0, 0)] * a.ndim
    pad[axis] = (0, target - a.shape[axis])
    return jnp.pad(a, pad)


@jax.jit
def res_bilstm_forward(params, s1, s2, l1, l2):
    B = s1.shape[0]
    s1 = s1[:, :MAXLEN]                                    # seq truncation
    s2 = s2[:, :MAXLEN]
    S = max(s1.shape[1], s2.shape[1])
    Tp = ((S + TCHUNK - 1) // TCHUNK) * TCHUNK             # static, padded T

    l1 = jnp.minimum(jnp.asarray(l1, jnp.int32), jnp.int32(min(MAXLEN, s1.shape[1])))
    l2 = jnp.minimum(jnp.asarray(l2, jnp.int32), jnp.int32(min(MAXLEN, s2.shape[1])))

    # batch both sentences together, pad batch to 8 sublanes
    tokens = jnp.concatenate([_pad_axis(s1, 1, Tp), _pad_axis(s2, 1, Tp)], axis=0)  # (2B, Tp)
    lens = jnp.concatenate([l1, l2], axis=0)                                        # (2B,)
    Bp = ((2 * B + 7) // 8) * 8
    tokens = _pad_axis(tokens, 0, Bp)
    lens = _pad_axis(lens, 0, Bp)                          # padded rows have length 0

    # TODO(synk): embedding-table gather stays as XLA jnp.take (no in-kernel gather).
    emb = jnp.take(params['embedding'], tokens, axis=0)    # (Bp, Tp, E)
    x = jnp.transpose(emb, (1, 0, 2)).astype(jnp.float32)  # (Tp, Bp, E) time-major

    wx, wprev, whh, bias = pack_lstm_weights(params)
    return fused_encode_classify(
        lens.reshape(Bp, 1), x, wx, wprev, whh, bias,
        params['w1'], params['b1'].reshape(1, MLP),
        params['w2'], params['b2'].reshape(1, 3), B=B)     # (B, 3) logits


if __name__ == "__main__":
    key = jax.random.PRNGKey(0)
    pkey, tkey1, tkey2 = jax.random.split(key, 3)
    params = init_params(pkey)

    B, S = 2, 8
    s1 = jax.random.randint(tkey1, (B, S), 0, NUM_EMB, dtype=jnp.int32)
    s2 = jax.random.randint(tkey2, (B, S), 0, NUM_EMB, dtype=jnp.int32)
    l1 = jnp.array([8, 5], dtype=jnp.int32)
    l2 = jnp.array([6, 7], dtype=jnp.int32)

    logits = res_bilstm_forward(params, s1, s2, l1, l2)
    logits = jax.block_until_ready(logits)
    assert logits.shape == (B, 3) and bool(jnp.all(jnp.isfinite(logits)))
    print("KERNEL_OK")
</pallas_src>

<mosaic_0001>
module attributes {stable_mosaic.version = 11 : i64} {
  func.func @_fused_kernel(%arg0: i32, %arg1: memref<8x1xi32, #tpu.memory_space<vmem>>, %arg2: memref<8x8x16xf32, #tpu.memory_space<vmem>>, %arg3: memref<3x16x256xf32, #tpu.memory_space<vmem>>, %arg4: memref<2x2x32x256xf32, #tpu.memory_space<vmem>>, %arg5: memref<3x2x32x128xf32, #tpu.memory_space<vmem>>, %arg6: memref<3x1x256xf32, #tpu.memory_space<vmem>>, %arg7: memref<256x64xf32, #tpu.memory_space<vmem>>, %arg8: memref<1x64xf32, #tpu.memory_space<vmem>>, %arg9: memref<64x3xf32, #tpu.memory_space<vmem>>, %arg10: memref<1x3xf32, #tpu.memory_space<vmem>>, %arg11: memref<2x3xf32, #tpu.memory_space<vmem>>, %arg12: memref<8x8x256xf32, #tpu.memory_space<vmem>>, %arg13: memref<8x8x32xf32, #tpu.memory_space<vmem>>, %arg14: memref<8x8x32xf32, #tpu.memory_space<vmem>>, %arg15: memref<8x8x32xf32, #tpu.memory_space<vmem>>, %arg16: memref<8x8x32xf32, #tpu.memory_space<vmem>>) attributes {dimension_semantics = [#tpu.dimension_semantics<arbitrary>], iteration_bounds = array<i64: 1>, scalar_prefetch = 0 : i64, scratch_operands = 5 : i64, tpu.core_type = #tpu.core_type<tc>, window_params = [{pipeline_mode = #tpu.pipeline_mode<synchronous>, transform_indices = @transform_0, window_bounds = array<i64: 8, 1>}, {pipeline_mode = #tpu.pipeline_mode<synchronous>, transform_indices = @transform_1, window_bounds = array<i64: 8, 8, 16>}, {pipeline_mode = #tpu.pipeline_mode<synchronous>, transform_indices = @transform_2, window_bounds = array<i64: 3, 16, 256>}, {pipeline_mode = #tpu.pipeline_mode<synchronous>, transform_indices = @transform_3, window_bounds = array<i64: 2, 2, 32, 256>}, {pipeline_mode = #tpu.pipeline_mode<synchronous>, transform_indices = @transform_4, window_bounds = array<i64: 3, 2, 32, 128>}, {pipeline_mode = #tpu.pipeline_mode<synchronous>, transform_indices = @transform_5, window_bounds = array<i64: 3, 1, 256>}, {pipeline_mode = #tpu.pipeline_mode<synchronous>, transform_indices = @transform_6, window_bounds = array<i64: 256, 64>}, {pipeline_mode = #tpu.pipeline_mode<synchronous>, transform_indices = @transform_7, window_bounds = array<i64: 1, 64>}, {pipeline_mode = #tpu.pipeline_mode<synchronous>, transform_indices = @transform_8, window_bounds = array<i64: 64, 3>}, {pipeline_mode = #tpu.pipeline_mode<synchronous>, transform_indices = @transform_9, window_bounds = array<i64: 1, 3>}, {pipeline_mode = #tpu.pipeline_mode<synchronous>, transform_indices = @transform_10, window_bounds = array<i64: 2, 3>}]} {
    %c0 = arith.constant 0 : index
    %c0_0 = arith.constant 0 : index
    %0 = vector.load %arg1[%c0, %c0_0] : memref<8x1xi32, #tpu.memory_space<vmem>>, vector<8x1xi32>
    %c0_1 = arith.constant 0 : index
    %c0_2 = arith.constant 0 : index
    %c0_3 = arith.constant 0 : index
    %1 = vector.load %arg3[%c0_1, %c0_2, %c0_3] : memref<3x16x256xf32, #tpu.memory_space<vmem>>, vector<1x16x256xf32>
    %2 = vector.shape_cast %1 : vector<1x16x256xf32> to vector<16x256xf32>
    %c0_4 = arith.constant 0 : index
    %c0_5 = arith.constant 0 : index
    %c0_6 = arith.constant 0 : index
    %3 = vector.load %arg6[%c0_4, %c0_5, %c0_6] : memref<3x1x256xf32, #tpu.memory_space<vmem>>, vector<1x1x256xf32>
    %4 = vector.shape_cast %3 : vector<1x1x256xf32> to vector<1x256xf32>
    %c0_7 = arith.constant 0 : index
    %c0_8 = arith.constant 0 : index
    %c0_9 = arith.constant 0 : index
    %5 = vector.load %arg2[%c0_7, %c0_8, %c0_9] : memref<8x8x16xf32, #tpu.memory_space<vmem>>, vector<8x8x16xf32>
    %6 = vector.shape_cast %5 : vector<8x8x16xf32> to vector<64x16xf32>
    %cst = arith.constant dense<0.000000e+00> : vector<64x256xf32>
    %7 = tpu.matmul %6, %2, %cst {dimension_numbers = #tpu.dot_dimension_numbers<[1], [0], [0], [1], [0, 0, 1, 1], [], []>} : vector<64x16xf32>, vector<16x256xf32>, vector<64x256xf32> -> vector<64x256xf32>
    %8 = vector.broadcast %4 : vector<1x256xf32> to vector<64x256xf32>
    %9 = arith.addf %7, %8 : vector<64x256xf32>
    %10 = vector.shape_cast %9 : vector<64x256xf32> to vector<8x8x256xf32>
    %c0_10 = arith.constant 0 : index
    %c0_11 = arith.constant 0 : index
    %c0_12 = arith.constant 0 : index
    %11 = vector.load %arg12[%c0_10, %c0_11, %c0_12] : memref<8x8x256xf32, #tpu.memory_space<vmem>>, vector<8x8x256xf32>
    tpu.vector_store %arg12[%c0_10, %c0_11, %c0_12], %10 {strides = array<i32>} : memref<8x8x256xf32, #tpu.memory_space<vmem>>, vector<8x8x256xf32>,
    %c0_13 = arith.constant 0 : index
    %c0_14 = arith.constant 0 : index
    %c0_15 = arith.constant 0 : index
    %c0_16 = arith.constant 0 : index
    %12 = vector.load %arg5[%c0_13, %c0_14, %c0_15, %c0_16] : memref<3x2x32x128xf32, #tpu.memory_space<vmem>>, vector<1x1x32x128xf32>
    %13 = vector.shape_cast %12 : vector<1x1x32x128xf32> to vector<32x128xf32>
    %cst_17 = arith.constant 0.000000e+00 : f32
    %14 = vector.broadcast %cst_17 : f32 to vector<8x32xf32>
    %cst_18 = arith.constant 0.000000e+00 : f32
    %15 = vector.broadcast %cst_18 : f32 to vector<8x32xf32>
    %c0_i32 = arith.constant 0 : i32
    %c8_i32 = arith.constant 8 : i32
    %16 = arith.addi %c0_i32, %c8_i32 : i32
    %c1_i32 = arith.constant 1 : i32
    %17:2 = scf.for %arg17 = %c0_i32 to %16 step %c1_i32 iter_args(%arg18 = %14, %arg19 = %15) -> (vector<8x32xf32>, vector<8x32xf32>)  : i32 {
      %128 = arith.index_cast %arg17 : i32 to index
      %c0_153 = arith.constant 0 : index
      %c0_154 = arith.constant 0 : index
      %129 = vector.load %arg12[%128, %c0_153, %c0_154] : memref<8x8x256xf32, #tpu.memory_space<vmem>>, vector<1x8x256xf32>
      %130 = vector.shape_cast %129 : vector<1x8x256xf32> to vector<8x256xf32>
      %131 = vector.extract_strided_slice %130 {offsets = [0, 0], sizes = [8, 128], strides = [1, 1]} : vector<8x256xf32> to vector<8x128xf32>
      %cst_155 = arith.constant dense<0.000000e+00> : vector<8x128xf32>
      %132 = tpu.matmul %arg18, %13, %cst_155 {dimension_numbers = #tpu.dot_dimension_numbers<[1], [0], [0], [1], [0, 0, 1, 1], [], []>} : vector<8x32xf32>, vector<32x128xf32>, vector<8x128xf32> -> vector<8x128xf32>
      %133 = arith.addf %131, %132 : vector<8x128xf32>
      %134 = arith.negf %133 : vector<8x128xf32>
      %135 = math.exp %134 : vector<8x128xf32>
      %cst_156 = arith.constant 1.000000e+00 : f32
      %136 = vector.broadcast %cst_156 : f32 to vector<8x128xf32>
      %137 = arith.addf %136, %135 : vector<8x128xf32>
      %138 = arith.divf %136, %137 : vector<8x128xf32>
      %139 = math.tanh %133 : vector<8x128xf32>
      %140 = vector.extract_strided_slice %138 {offsets = [0, 0], sizes = [8, 32], strides = [1, 1]} : vector<8x128xf32> to vector<8x32xf32>
      %141 = vector.extract_strided_slice %138 {offsets = [0, 32], sizes = [8, 32], strides = [1, 1]} : vector<8x128xf32> to vector<8x32xf32>
      %142 = vector.extract_strided_slice %138 {offsets = [0, 96], sizes = [8, 32], strides = [1, 1]} : vector<8x128xf32> to vector<8x32xf32>
      %143 = vector.extract_strided_slice %139 {offsets = [0, 64], sizes = [8, 32], strides = [1, 1]} : vector<8x128xf32> to vector<8x32xf32>
      %144 = arith.mulf %141, %arg19 : vector<8x32xf32>
      %145 = arith.mulf %140, %143 : vector<8x32xf32>
      %146 = arith.addf %144, %145 : vector<8x32xf32>
      %147 = math.tanh %146 : vector<8x32xf32>
      %148 = arith.mulf %142, %147 : vector<8x32xf32>
      %149 = vector.broadcast %arg17 : i32 to vector<8x1xi32>
      %150 = arith.cmpi slt, %149, %0 : vector<8x1xi32>
      %151 = vector.shape_cast %150 : vector<8x1xi1> to vector<8x1xi1>
      %152 = vector.broadcast %151 : vector<8x1xi1> to vector<8x32xi1>
      %153 = arith.select %152, %148, %arg18 : vector<8x32xi1>, vector<8x32xf32>
      %154 = vector.shape_cast %150 : vector<8x1xi1> to vector<8x1xi1>
      %155 = vector.broadcast %154 : vector<8x1xi1> to vector<8x32xi1>
      %156 = arith.select %155, %146, %arg19 : vector<8x32xi1>, vector<8x32xf32>
      %cst_157 = arith.constant 0.000000e+00 : f32
      %157 = vector.shape_cast %150 : vector<8x1xi1> to vector<8x1xi1>
      %158 = vector.broadcast %157 : vector<8x1xi1> to vector<8x32xi1>
      %159 = vector.broadcast %cst_157 : f32 to vector<8x32xf32>
      %160 = arith.select %158, %148, %159 : vector<8x32xi1>, vector<8x32xf32>
      %161 = arith.index_cast %arg17 : i32 to index
      %c0_158 = arith.constant 0 : index
      %c0_159 = arith.constant 0 : index
      %162 = vector.load %arg13[%161, %c0_158, %c0_159] : memref<8x8x32xf32, #tpu.memory_space<vmem>>, vector<1x8x32xf32>
      %163 = vector.shape_cast %162 : vector<1x8x32xf32> to vector<8x32xf32>
      %164 = vector.shape_cast %160 : vector<8x32xf32> to vector<1x8x32xf32>
      tpu.vector_store %arg13[%161, %c0_158, %c0_159], %164 {strides = array<i32>} : memref<8x8x32xf32, #tpu.memory_space<vmem>>, vector<1x8x32xf32>,
      scf.yield %153, %156 : vector<8x32xf32>, vector<8x32xf32>
    }
    %c8_i32_19 = arith.constant 8 : i32
    %c0_20 = arith.constant 0 : index
    %c1 = arith.constant 1 : index
    %c0_21 = arith.constant 0 : index
    %c0_22 = arith.constant 0 : index
    %18 = vector.load %arg5[%c0_20, %c1, %c0_21, %c0_22] : memref<3x2x32x128xf32, #tpu.memory_space<vmem>>, vector<1x1x32x128xf32>
    %19 = vector.shape_cast %18 : vector<1x1x32x128xf32> to vector<32x128xf32>
    %cst_23 = arith.constant 0.000000e+00 : f32
    %20 = vector.broadcast %cst_23 : f32 to vector<8x32xf32>
    %cst_24 = arith.constant 0.000000e+00 : f32
    %21 = vector.broadcast %cst_24 : f32 to vector<8x32xf32>
    %c0_i32_25 = arith.constant 0 : i32
    %c8_i32_26 = arith.constant 8 : i32
    %22 = arith.addi %c0_i32_25, %c8_i32_26 : i32
    %c1_i32_27 = arith.constant 1 : i32
    %23:2 = scf.for %arg17 = %c0_i32_25 to %22 step %c1_i32_27 iter_args(%arg18 = %20, %arg19 = %21) -> (vector<8x32xf32>, vector<8x32xf32>)  : i32 {
      %c7_i32 = arith.constant 7 : i32
      %128 = arith.subi %c7_i32, %arg17 : i32
      %129 = arith.index_cast %128 : i32 to index
      %c0_153 = arith.constant 0 : index
      %c0_154 = arith.constant 0 : index
      %130 = vector.load %arg12[%129, %c0_153, %c0_154] : memref<8x8x256xf32, #tpu.memory_space<vmem>>, vector<1x8x256xf32>
      %131 = vector.shape_cast %130 : vector<1x8x256xf32> to vector<8x256xf32>
      %132 = vector.extract_strided_slice %131 {offsets = [0, 128], sizes = [8, 128], strides = [1, 1]} : vector<8x256xf32> to vector<8x128xf32>
      %cst_155 = arith.constant dense<0.000000e+00> : vector<8x128xf32>
      %133 = tpu.matmul %arg18, %19, %cst_155 {dimension_numbers = #tpu.dot_dimension_numbers<[1], [0], [0], [1], [0, 0, 1, 1], [], []>} : vector<8x32xf32>, vector<32x128xf32>, vector<8x128xf32> -> vector<8x128xf32>
      %134 = arith.addf %132, %133 : vector<8x128xf32>
      %135 = arith.negf %134 : vector<8x128xf32>
      %136 = math.exp %135 : vector<8x128xf32>
      %cst_156 = arith.constant 1.000000e+00 : f32
      %137 = vector.broadcast %cst_156 : f32 to vector<8x128xf32>
      %138 = arith.addf %137, %136 : vector<8x128xf32>
      %139 = arith.divf %137, %138 : vector<8x128xf32>
      %140 = math.tanh %134 : vector<8x128xf32>
      %141 = vector.extract_strided_slice %139 {offsets = [0, 0], sizes = [8, 32], strides = [1, 1]} : vector<8x128xf32> to vector<8x32xf32>
      %142 = vector.extract_strided_slice %139 {offsets = [0, 32], sizes = [8, 32], strides = [1, 1]} : vector<8x128xf32> to vector<8x32xf32>
      %143 = vector.extract_strided_slice %139 {offsets = [0, 96], sizes = [8, 32], strides = [1, 1]} : vector<8x128xf32> to vector<8x32xf32>
      %144 = vector.extract_strided_slice %140 {offsets = [0, 64], sizes = [8, 32], strides = [1, 1]} : vector<8x128xf32> to vector<8x32xf32>
      %145 = arith.mulf %142, %arg19 : vector<8x32xf32>
      %146 = arith.mulf %141, %144 : vector<8x32xf32>
      %147 = arith.addf %145, %146 : vector<8x32xf32>
      %148 = math.tanh %147 : vector<8x32xf32>
      %149 = arith.mulf %143, %148 : vector<8x32xf32>
      %150 = vector.broadcast %128 : i32 to vector<8x1xi32>
      %151 = arith.cmpi slt, %150, %0 : vector<8x1xi32>
      %152 = vector.shape_cast %151 : vector<8x1xi1> to vector<8x1xi1>
      %153 = vector.broadcast %152 : vector<8x1xi1> to vector<8x32xi1>
      %154 = arith.select %153, %149, %arg18 : vector<8x32xi1>, vector<8x32xf32>
      %155 = vector.shape_cast %151 : vector<8x1xi1> to vector<8x1xi1>
      %156 = vector.broadcast %155 : vector<8x1xi1> to vector<8x32xi1>
      %157 = arith.select %156, %147, %arg19 : vector<8x32xi1>, vector<8x32xf32>
      %cst_157 = arith.constant 0.000000e+00 : f32
      %158 = vector.shape_cast %151 : vector<8x1xi1> to vector<8x1xi1>
      %159 = vector.broadcast %158 : vector<8x1xi1> to vector<8x32xi1>
      %160 = vector.broadcast %cst_157 : f32 to vector<8x32xf32>
      %161 = arith.select %159, %149, %160 : vector<8x32xi1>, vector<8x32xf32>
      %162 = arith.index_cast %128 : i32 to index
      %c0_158 = arith.constant 0 : index
      %c0_159 = arith.constant 0 : index
      %163 = vector.load %arg14[%162, %c0_158, %c0_159] : memref<8x8x32xf32, #tpu.memory_space<vmem>>, vector<1x8x32xf32>
      %164 = vector.shape_cast %163 : vector<1x8x32xf32> to vector<8x32xf32>
      %165 = vector.shape_cast %161 : vector<8x32xf32> to vector<1x8x32xf32>
      tpu.vector_store %arg14[%162, %c0_158, %c0_159], %165 {strides = array<i32>} : memref<8x8x32xf32, #tpu.memory_space<vmem>>, vector<1x8x32xf32>,
      scf.yield %154, %157 : vector<8x32xf32>, vector<8x32xf32>
    }
    %c8_i32_28 = arith.constant 8 : i32
    %c1_29 = arith.constant 1 : index
    %c0_30 = arith.constant 0 : index
    %c0_31 = arith.constant 0 : index
    %24 = vector.load %arg3[%c1_29, %c0_30, %c0_31] : memref<3x16x256xf32, #tpu.memory_space<vmem>>, vector<1x16x256xf32>
    %25 = vector.shape_cast %24 : vector<1x16x256xf32> to vector<16x256xf32>
    %c1_32 = arith.constant 1 : index
    %c0_33 = arith.constant 0 : index
    %c0_34 = arith.constant 0 : index
    %26 = vector.load %arg6[%c1_32, %c0_33, %c0_34] : memref<3x1x256xf32, #tpu.memory_space<vmem>>, vector<1x1x256xf32>
    %27 = vector.shape_cast %26 : vector<1x1x256xf32> to vector<1x256xf32>
    %c0_35 = arith.constant 0 : index
    %c0_36 = arith.constant 0 : index
    %c0_37 = arith.constant 0 : index
    %c0_38 = arith.constant 0 : index
    %28 = vector.load %arg4[%c0_35, %c0_36, %c0_37, %c0_38] : memref<2x2x32x256xf32, #tpu.memory_space<vmem>>, vector<1x1x32x256xf32>
    %29 = vector.shape_cast %28 : vector<1x1x32x256xf32> to vector<32x256xf32>
    %c0_39 = arith.constant 0 : index
    %c1_40 = arith.constant 1 : index
    %c0_41 = arith.constant 0 : index
    %c0_42 = arith.constant 0 : index
    %30 = vector.load %arg4[%c0_39, %c1_40, %c0_41, %c0_42] : memref<2x2x32x256xf32, #tpu.memory_space<vmem>>, vector<1x1x32x256xf32>
    %31 = vector.shape_cast %30 : vector<1x1x32x256xf32> to vector<32x256xf32>
    %c0_43 = arith.constant 0 : index
    %c0_44 = arith.constant 0 : index
    %c0_45 = arith.constant 0 : index
    %32 = vector.load %arg2[%c0_43, %c0_44, %c0_45] : memref<8x8x16xf32, #tpu.memory_space<vmem>>, vector<8x8x16xf32>
    %33 = vector.shape_cast %32 : vector<8x8x16xf32> to vector<64x16xf32>
    %cst_46 = arith.constant dense<0.000000e+00> : vector<64x256xf32>
    %34 = tpu.matmul %33, %25, %cst_46 {dimension_numbers = #tpu.dot_dimension_numbers<[1], [0], [0], [1], [0, 0, 1, 1], [], []>} : vector<64x16xf32>, vector<16x256xf32>, vector<64x256xf32> -> vector<64x256xf32>
    %c0_47 = arith.constant 0 : index
    %c0_48 = arith.constant 0 : index
    %c0_49 = arith.constant 0 : index
    %35 = vector.load %arg13[%c0_47, %c0_48, %c0_49] : memref<8x8x32xf32, #tpu.memory_space<vmem>>, vector<8x8x32xf32>
    %36 = vector.shape_cast %35 : vector<8x8x32xf32> to vector<64x32xf32>
    %c0_50 = arith.constant 0 : index
    %c0_51 = arith.constant 0 : index
    %c0_52 = arith.constant 0 : index
    %37 = vector.load %arg14[%c0_50, %c0_51, %c0_52] : memref<8x8x32xf32, #tpu.memory_space<vmem>>, vector<8x8x32xf32>
    %38 = vector.shape_cast %37 : vector<8x8x32xf32> to vector<64x32xf32>
    %cst_53 = arith.constant dense<0.000000e+00> : vector<64x256xf32>
    %39 = tpu.matmul %36, %29, %cst_53 {dimension_numbers = #tpu.dot_dimension_numbers<[1], [0], [0], [1], [0, 0, 1, 1], [], []>} : vector<64x32xf32>, vector<32x256xf32>, vector<64x256xf32> -> vector<64x256xf32>
    %40 = arith.addf %34, %39 : vector<64x256xf32>
    %cst_54 = arith.constant dense<0.000000e+00> : vector<64x256xf32>
    %41 = tpu.matmul %38, %31, %cst_54 {dimension_numbers = #tpu.dot_dimension_numbers<[1], [0], [0], [1], [0, 0, 1, 1], [], []>} : vector<64x32xf32>, vector<32x256xf32>, vector<64x256xf32> -> vector<64x256xf32>
    %42 = arith.addf %40, %41 : vector<64x256xf32>
    %43 = vector.broadcast %27 : vector<1x256xf32> to vector<64x256xf32>
    %44 = arith.addf %42, %43 : vector<64x256xf32>
    %45 = vector.shape_cast %44 : vector<64x256xf32> to vector<8x8x256xf32>
    %c0_55 = arith.constant 0 : index
    %c0_56 = arith.constant 0 : index
    %c0_57 = arith.constant 0 : index
    %46 = vector.load %arg12[%c0_55, %c0_56, %c0_57] : memref<8x8x256xf32, #tpu.memory_space<vmem>>, vector<8x8x256xf32>
    tpu.vector_store %arg12[%c0_55, %c0_56, %c0_57], %45 {strides = array<i32>} : memref<8x8x256xf32, #tpu.memory_space<vmem>>, vector<8x8x256xf32>,
    %c1_58 = arith.constant 1 : index
    %c0_59 = arith.constant 0 : index
    %c0_60 = arith.constant 0 : index
    %c0_61 = arith.constant 0 : index
    %47 = vector.load %arg5[%c1_58, %c0_59, %c0_60, %c0_61] : memref<3x2x32x128xf32, #tpu.memory_space<vmem>>, vector<1x1x32x128xf32>
    %48 = vector.shape_cast %47 : vector<1x1x32x128xf32> to vector<32x128xf32>
    %cst_62 = arith.constant 0.000000e+00 : f32
    %49 = vector.broadcast %cst_62 : f32 to vector<8x32xf32>
    %cst_63 = arith.constant 0.000000e+00 : f32
    %50 = vector.broadcast %cst_63 : f32 to vector<8x32xf32>
    %c0_i32_64 = arith.constant 0 : i32
    %c8_i32_65 = arith.constant 8 : i32
    %51 = arith.addi %c0_i32_64, %c8_i32_65 : i32
    %c1_i32_66 = arith.constant 1 : i32
    %52:2 = scf.for %arg17 = %c0_i32_64 to %51 step %c1_i32_66 iter_args(%arg18 = %49, %arg19 = %50) -> (vector<8x32xf32>, vector<8x32xf32>)  : i32 {
      %128 = arith.index_cast %arg17 : i32 to index
      %c0_153 = arith.constant 0 : index
      %c0_154 = arith.constant 0 : index
      %129 = vector.load %arg12[%128, %c0_153, %c0_154] : memref<8x8x256xf32, #tpu.memory_space<vmem>>, vector<1x8x256xf32>
      %130 = vector.shape_cast %129 : vector<1x8x256xf32> to vector<8x256xf32>
      %131 = vector.extract_strided_slice %130 {offsets = [0, 0], sizes = [8, 128], strides = [1, 1]} : vector<8x256xf32> to vector<8x128xf32>
      %cst_155 = arith.constant dense<0.000000e+00> : vector<8x128xf32>
      %132 = tpu.matmul %arg18, %48, %cst_155 {dimension_numbers = #tpu.dot_dimension_numbers<[1], [0], [0], [1], [0, 0, 1, 1], [], []>} : vector<8x32xf32>, vector<32x128xf32>, vector<8x128xf32> -> vector<8x128xf32>
      %133 = arith.addf %131, %132 : vector<8x128xf32>
      %134 = arith.negf %133 : vector<8x128xf32>
      %135 = math.exp %134 : vector<8x128xf32>
      %cst_156 = arith.constant 1.000000e+00 : f32
      %136 = vector.broadcast %cst_156 : f32 to vector<8x128xf32>
      %137 = arith.addf %136, %135 : vector<8x128xf32>
      %138 = arith.divf %136, %137 : vector<8x128xf32>
      %139 = math.tanh %133 : vector<8x128xf32>
      %140 = vector.extract_strided_slice %138 {offsets = [0, 0], sizes = [8, 32], strides = [1, 1]} : vector<8x128xf32> to vector<8x32xf32>
      %141 = vector.extract_strided_slice %138 {offsets = [0, 32], sizes = [8, 32], strides = [1, 1]} : vector<8x128xf32> to vector<8x32xf32>
      %142 = vector.extract_strided_slice %138 {offsets = [0, 96], sizes = [8, 32], strides = [1, 1]} : vector<8x128xf32> to vector<8x32xf32>
      %143 = vector.extract_strided_slice %139 {offsets = [0, 64], sizes = [8, 32], strides = [1, 1]} : vector<8x128xf32> to vector<8x32xf32>
      %144 = arith.mulf %141, %arg19 : vector<8x32xf32>
      %145 = arith.mulf %140, %143 : vector<8x32xf32>
      %146 = arith.addf %144, %145 : vector<8x32xf32>
      %147 = math.tanh %146 : vector<8x32xf32>
      %148 = arith.mulf %142, %147 : vector<8x32xf32>
      %149 = vector.broadcast %arg17 : i32 to vector<8x1xi32>
      %150 = arith.cmpi slt, %149, %0 : vector<8x1xi32>
      %151 = vector.shape_cast %150 : vector<8x1xi1> to vector<8x1xi1>
      %152 = vector.broadcast %151 : vector<8x1xi1> to vector<8x32xi1>
      %153 = arith.select %152, %148, %arg18 : vector<8x32xi1>, vector<8x32xf32>
      %154 = vector.shape_cast %150 : vector<8x1xi1> to vector<8x1xi1>
      %155 = vector.broadcast %154 : vector<8x1xi1> to vector<8x32xi1>
      %156 = arith.select %155, %146, %arg19 : vector<8x32xi1>, vector<8x32xf32>
      %cst_157 = arith.constant 0.000000e+00 : f32
      %157 = vector.shape_cast %150 : vector<8x1xi1> to vector<8x1xi1>
      %158 = vector.broadcast %157 : vector<8x1xi1> to vector<8x32xi1>
      %159 = vector.broadcast %cst_157 : f32 to vector<8x32xf32>
      %160 = arith.select %158, %148, %159 : vector<8x32xi1>, vector<8x32xf32>
      %161 = arith.index_cast %arg17 : i32 to index
      %c0_158 = arith.constant 0 : index
      %c0_159 = arith.constant 0 : index
      %162 = vector.load %arg15[%161, %c0_158, %c0_159] : memref<8x8x32xf32, #tpu.memory_space<vmem>>, vector<1x8x32xf32>
      %163 = vector.shape_cast %162 : vector<1x8x32xf32> to vector<8x32xf32>
      %164 = vector.shape_cast %160 : vector<8x32xf32> to vector<1x8x32xf32>
      tpu.vector_store %arg15[%161, %c0_158, %c0_159], %164 {strides = array<i32>} : memref<8x8x32xf32, #tpu.memory_space<vmem>>, vector<1x8x32xf32>,
      scf.yield %153, %156 : vector<8x32xf32>, vector<8x32xf32>
    }
    %c8_i32_67 = arith.constant 8 : i32
    %c1_68 = arith.constant 1 : index
    %c1_69 = arith.constant 1 : index
    %c0_70 = arith.constant 0 : index
    %c0_71 = arith.constant 0 : index
    %53 = vector.load %arg5[%c1_68, %c1_69, %c0_70, %c0_71] : memref<3x2x32x128xf32, #tpu.memory_space<vmem>>, vector<1x1x32x128xf32>
    %54 = vector.shape_cast %53 : vector<1x1x32x128xf32> to vector<32x128xf32>
    %cst_72 = arith.constant 0.000000e+00 : f32
    %55 = vector.broadcast %cst_72 : f32 to vector<8x32xf32>
    %cst_73 = arith.constant 0.000000e+00 : f32
    %56 = vector.broadcast %cst_73 : f32 to vector<8x32xf32>
    %c0_i32_74 = arith.constant 0 : i32
    %c8_i32_75 = arith.constant 8 : i32
    %57 = arith.addi %c0_i32_74, %c8_i32_75 : i32
    %c1_i32_76 = arith.constant 1 : i32
    %58:2 = scf.for %arg17 = %c0_i32_74 to %57 step %c1_i32_76 iter_args(%arg18 = %55, %arg19 = %56) -> (vector<8x32xf32>, vector<8x32xf32>)  : i32 {
      %c7_i32 = arith.constant 7 : i32
      %128 = arith.subi %c7_i32, %arg17 : i32
      %129 = arith.index_cast %128 : i32 to index
      %c0_153 = arith.constant 0 : index
      %c0_154 = arith.constant 0 : index
      %130 = vector.load %arg12[%129, %c0_153, %c0_154] : memref<8x8x256xf32, #tpu.memory_space<vmem>>, vector<1x8x256xf32>
      %131 = vector.shape_cast %130 : vector<1x8x256xf32> to vector<8x256xf32>
      %132 = vector.extract_strided_slice %131 {offsets = [0, 128], sizes = [8, 128], strides = [1, 1]} : vector<8x256xf32> to vector<8x128xf32>
      %cst_155 = arith.constant dense<0.000000e+00> : vector<8x128xf32>
      %133 = tpu.matmul %arg18, %54, %cst_155 {dimension_numbers = #tpu.dot_dimension_numbers<[1], [0], [0], [1], [0, 0, 1, 1], [], []>} : vector<8x32xf32>, vector<32x128xf32>, vector<8x128xf32> -> vector<8x128xf32>
      %134 = arith.addf %132, %133 : vector<8x128xf32>
      %135 = arith.negf %134 : vector<8x128xf32>
      %136 = math.exp %135 : vector<8x128xf32>
      %cst_156 = arith.constant 1.000000e+00 : f32
      %137 = vector.broadcast %cst_156 : f32 to vector<8x128xf32>
      %138 = arith.addf %137, %136 : vector<8x128xf32>
      %139 = arith.divf %137, %138 : vector<8x128xf32>
      %140 = math.tanh %134 : vector<8x128xf32>
      %141 = vector.extract_strided_slice %139 {offsets = [0, 0], sizes = [8, 32], strides = [1, 1]} : vector<8x128xf32> to vector<8x32xf32>
      %142 = vector.extract_strided_slice %139 {offsets = [0, 32], sizes = [8, 32], strides = [1, 1]} : vector<8x128xf32> to vector<8x32xf32>
      %143 = vector.extract_strided_slice %139 {offsets = [0, 96], sizes = [8, 32], strides = [1, 1]} : vector<8x128xf32> to vector<8x32xf32>
      %144 = vector.extract_strided_slice %140 {offsets = [0, 64], sizes = [8, 32], strides = [1, 1]} : vector<8x128xf32> to vector<8x32xf32>
      %145 = arith.mulf %142, %arg19 : vector<8x32xf32>
      %146 = arith.mulf %141, %144 : vector<8x32xf32>
      %147 = arith.addf %145, %146 : vector<8x32xf32>
      %148 = math.tanh %147 : vector<8x32xf32>
      %149 = arith.mulf %143, %148 : vector<8x32xf32>
      %150 = vector.broadcast %128 : i32 to vector<8x1xi32>
      %151 = arith.cmpi slt, %150, %0 : vector<8x1xi32>
      %152 = vector.shape_cast %151 : vector<8x1xi1> to vector<8x1xi1>
      %153 = vector.broadcast %152 : vector<8x1xi1> to vector<8x32xi1>
      %154 = arith.select %153, %149, %arg18 : vector<8x32xi1>, vector<8x32xf32>
      %155 = vector.shape_cast %151 : vector<8x1xi1> to vector<8x1xi1>
      %156 = vector.broadcast %155 : vector<8x1xi1> to vector<8x32xi1>
      %157 = arith.select %156, %147, %arg19 : vector<8x32xi1>, vector<8x32xf32>
      %cst_157 = arith.constant 0.000000e+00 : f32
      %158 = vector.shape_cast %151 : vector<8x1xi1> to vector<8x1xi1>
      %159 = vector.broadcast %158 : vector<8x1xi1> to vector<8x32xi1>
      %160 = vector.broadcast %cst_157 : f32 to vector<8x32xf32>
      %161 = arith.select %159, %149, %160 : vector<8x32xi1>, vector<8x32xf32>
      %162 = arith.index_cast %128 : i32 to index
      %c0_158 = arith.constant 0 : index
      %c0_159 = arith.constant 0 : index
      %163 = vector.load %arg16[%162, %c0_158, %c0_159] : memref<8x8x32xf32, #tpu.memory_space<vmem>>, vector<1x8x32xf32>
      %164 = vector.shape_cast %163 : vector<1x8x32xf32> to vector<8x32xf32>
      %165 = vector.shape_cast %161 : vector<8x32xf32> to vector<1x8x32xf32>
      tpu.vector_store %arg16[%162, %c0_158, %c0_159], %165 {strides = array<i32>} : memref<8x8x32xf32, #tpu.memory_space<vmem>>, vector<1x8x32xf32>,
      scf.yield %154, %157 : vector<8x32xf32>, vector<8x32xf32>
    }
    %c8_i32_77 = arith.constant 8 : i32
    %c2 = arith.constant 2 : index
    %c0_78 = arith.constant 0 : index
    %c0_79 = arith.constant 0 : index
    %59 = vector.load %arg3[%c2, %c0_78, %c0_79] : memref<3x16x256xf32, #tpu.memory_space<vmem>>, vector<1x16x256xf32>
    %60 = vector.shape_cast %59 : vector<1x16x256xf32> to vector<16x256xf32>
    %c2_80 = arith.constant 2 : index
    %c0_81 = arith.constant 0 : index
    %c0_82 = arith.constant 0 : index
    %61 = vector.load %arg6[%c2_80, %c0_81, %c0_82] : memref<3x1x256xf32, #tpu.memory_space<vmem>>, vector<1x1x256xf32>
    %62 = vector.shape_cast %61 : vector<1x1x256xf32> to vector<1x256xf32>
    %c1_83 = arith.constant 1 : index
    %c0_84 = arith.constant 0 : index
    %c0_85 = arith.constant 0 : index
    %c0_86 = arith.constant 0 : index
    %63 = vector.load %arg4[%c1_83, %c0_84, %c0_85, %c0_86] : memref<2x2x32x256xf32, #tpu.memory_space<vmem>>, vector<1x1x32x256xf32>
    %64 = vector.shape_cast %63 : vector<1x1x32x256xf32> to vector<32x256xf32>
    %c1_87 = arith.constant 1 : index
    %c1_88 = arith.constant 1 : index
    %c0_89 = arith.constant 0 : index
    %c0_90 = arith.constant 0 : index
    %65 = vector.load %arg4[%c1_87, %c1_88, %c0_89, %c0_90] : memref<2x2x32x256xf32, #tpu.memory_space<vmem>>, vector<1x1x32x256xf32>
    %66 = vector.shape_cast %65 : vector<1x1x32x256xf32> to vector<32x256xf32>
    %c0_91 = arith.constant 0 : index
    %c0_92 = arith.constant 0 : index
    %c0_93 = arith.constant 0 : index
    %67 = vector.load %arg2[%c0_91, %c0_92, %c0_93] : memref<8x8x16xf32, #tpu.memory_space<vmem>>, vector<8x8x16xf32>
    %68 = vector.shape_cast %67 : vector<8x8x16xf32> to vector<64x16xf32>
    %cst_94 = arith.constant dense<0.000000e+00> : vector<64x256xf32>
    %69 = tpu.matmul %68, %60, %cst_94 {dimension_numbers = #tpu.dot_dimension_numbers<[1], [0], [0], [1], [0, 0, 1, 1], [], []>} : vector<64x16xf32>, vector<16x256xf32>, vector<64x256xf32> -> vector<64x256xf32>
    %c0_95 = arith.constant 0 : index
    %c0_96 = arith.constant 0 : index
    %c0_97 = arith.constant 0 : index
    %70 = vector.load %arg13[%c0_95, %c0_96, %c0_97] : memref<8x8x32xf32, #tpu.memory_space<vmem>>, vector<8x8x32xf32>
    %c0_98 = arith.constant 0 : index
    %c0_99 = arith.constant 0 : index
    %c0_100 = arith.constant 0 : index
    %71 = vector.load %arg15[%c0_98, %c0_99, %c0_100] : memref<8x8x32xf32, #tpu.memory_space<vmem>>, vector<8x8x32xf32>
    %72 = arith.addf %70, %71 : vector<8x8x32xf32>
    %73 = vector.shape_cast %72 : vector<8x8x32xf32> to vector<64x32xf32>
    %c0_101 = arith.constant 0 : index
    %c0_102 = arith.constant 0 : index
    %c0_103 = arith.constant 0 : index
    %74 = vector.load %arg14[%c0_101, %c0_102, %c0_103] : memref<8x8x32xf32, #tpu.memory_space<vmem>>, vector<8x8x32xf32>
    %c0_104 = arith.constant 0 : index
    %c0_105 = arith.constant 0 : index
    %c0_106 = arith.constant 0 : index
    %75 = vector.load %arg16[%c0_104, %c0_105, %c0_106] : memref<8x8x32xf32, #tpu.memory_space<vmem>>, vector<8x8x32xf32>
    %76 = arith.addf %74, %75 : vector<8x8x32xf32>
    %77 = vector.shape_cast %76 : vector<8x8x32xf32> to vector<64x32xf32>
    %cst_107 = arith.constant dense<0.000000e+00> : vector<64x256xf32>
    %78 = tpu.matmul %73, %64, %cst_107 {dimension_numbers = #tpu.dot_dimension_numbers<[1], [0], [0], [1], [0, 0, 1, 1], [], []>} : vector<64x32xf32>, vector<32x256xf32>, vector<64x256xf32> -> vector<64x256xf32>
    %79 = arith.addf %69, %78 : vector<64x256xf32>
    %cst_108 = arith.constant dense<0.000000e+00> : vector<64x256xf32>
    %80 = tpu.matmul %77, %66, %cst_108 {dimension_numbers = #tpu.dot_dimension_numbers<[1], [0], [0], [1], [0, 0, 1, 1], [], []>} : vector<64x32xf32>, vector<32x256xf32>, vector<64x256xf32> -> vector<64x256xf32>
    %81 = arith.addf %79, %80 : vector<64x256xf32>
    %82 = vector.broadcast %62 : vector<1x256xf32> to vector<64x256xf32>
    %83 = arith.addf %81, %82 : vector<64x256xf32>
    %84 = vector.shape_cast %83 : vector<64x256xf32> to vector<8x8x256xf32>
    %c0_109 = arith.constant 0 : index
    %c0_110 = arith.constant 0 : index
    %c0_111 = arith.constant 0 : index
    %85 = vector.load %arg12[%c0_109, %c0_110, %c0_111] : memref<8x8x256xf32, #tpu.memory_space<vmem>>, vector<8x8x256xf32>
    tpu.vector_store %arg12[%c0_109, %c0_110, %c0_111], %84 {strides = array<i32>} : memref<8x8x256xf32, #tpu.memory_space<vmem>>, vector<8x8x256xf32>,
    %c2_112 = arith.constant 2 : index
    %c0_113 = arith.constant 0 : index
    %c0_114 = arith.constant 0 : index
    %c0_115 = arith.constant 0 : index
    %86 = vector.load %arg5[%c2_112, %c0_113, %c0_114, %c0_115] : memref<3x2x32x128xf32, #tpu.memory_space<vmem>>, vector<1x1x32x128xf32>
    %87 = vector.shape_cast %86 : vector<1x1x32x128xf32> to vector<32x128xf32>
    %cst_116 = arith.constant 0.000000e+00 : f32
    %88 = vector.broadcast %cst_116 : f32 to vector<8x32xf32>
    %cst_117 = arith.constant 0.000000e+00 : f32
    %89 = vector.broadcast %cst_117 : f32 to vector<8x32xf32>
    %cst_118 = arith.constant 0xFF800000 : f32
    %90 = vector.broadcast %cst_118 : f32 to vector<8x32xf32>
    %c0_i32_119 = arith.constant 0 : i32
    %c8_i32_120 = arith.constant 8 : i32
    %91 = arith.addi %c0_i32_119, %c8_i32_120 : i32
    %c1_i32_121 = arith.constant 1 : i32
    %92:3 = scf.for %arg17 = %c0_i32_119 to %91 step %c1_i32_121 iter_args(%arg18 = %88, %arg19 = %89, %arg20 = %90) -> (vector<8x32xf32>, vector<8x32xf32>, vector<8x32xf32>)  : i32 {
      %128 = arith.index_cast %arg17 : i32 to index
      %c0_153 = arith.constant 0 : index
      %c0_154 = arith.constant 0 : index
      %129 = vector.load %arg12[%128, %c0_153, %c0_154] : memref<8x8x256xf32, #tpu.memory_space<vmem>>, vector<1x8x256xf32>
      %130 = vector.shape_cast %129 : vector<1x8x256xf32> to vector<8x256xf32>
      %131 = vector.extract_strided_slice %130 {offsets = [0, 0], sizes = [8, 128], strides = [1, 1]} : vector<8x256xf32> to vector<8x128xf32>
      %cst_155 = arith.constant dense<0.000000e+00> : vector<8x128xf32>
      %132 = tpu.matmul %arg18, %87, %cst_155 {dimension_numbers = #tpu.dot_dimension_numbers<[1], [0], [0], [1], [0, 0, 1, 1], [], []>} : vector<8x32xf32>, vector<32x128xf32>, vector<8x128xf32> -> vector<8x128xf32>
      %133 = arith.addf %131, %132 : vector<8x128xf32>
      %134 = arith.negf %133 : vector<8x128xf32>
      %135 = math.exp %134 : vector<8x128xf32>
      %cst_156 = arith.constant 1.000000e+00 : f32
      %136 = vector.broadcast %cst_156 : f32 to vector<8x128xf32>
      %137 = arith.addf %136, %135 : vector<8x128xf32>
      %138 = arith.divf %136, %137 : vector<8x128xf32>
      %139 = math.tanh %133 : vector<8x128xf32>
      %140 = vector.extract_strided_slice %138 {offsets = [0, 0], sizes = [8, 32], strides = [1, 1]} : vector<8x128xf32> to vector<8x32xf32>
      %141 = vector.extract_strided_slice %138 {offsets = [0, 32], sizes = [8, 32], strides = [1, 1]} : vector<8x128xf32> to vector<8x32xf32>
      %142 = vector.extract_strided_slice %138 {offsets = [0, 96], sizes = [8, 32], strides = [1, 1]} : vector<8x128xf32> to vector<8x32xf32>
      %143 = vector.extract_strided_slice %139 {offsets = [0, 64], sizes = [8, 32], strides = [1, 1]} : vector<8x128xf32> to vector<8x32xf32>
      %144 = arith.mulf %141, %arg19 : vector<8x32xf32>
      %145 = arith.mulf %140, %143 : vector<8x32xf32>
      %146 = arith.addf %144, %145 : vector<8x32xf32>
      %147 = math.tanh %146 : vector<8x32xf32>
      %148 = arith.mulf %142, %147 : vector<8x32xf32>
      %149 = vector.broadcast %arg17 : i32 to vector<8x1xi32>
      %150 = arith.cmpi slt, %149, %0 : vector<8x1xi32>
      %151 = vector.shape_cast %150 : vector<8x1xi1> to vector<8x1xi1>
      %152 = vector.broadcast %151 : vector<8x1xi1> to vector<8x32xi1>
      %153 = arith.select %152, %148, %arg18 : vector<8x32xi1>, vector<8x32xf32>
      %154 = vector.shape_cast %150 : vector<8x1xi1> to vector<8x1xi1>
      %155 = vector.broadcast %154 : vector<8x1xi1> to vector<8x32xi1>
      %156 = arith.select %155, %146, %arg19 : vector<8x32xi1>, vector<8x32xf32>
      %cst_157 = arith.constant 0xFF800000 : f32
      %157 = vector.shape_cast %150 : vector<8x1xi1> to vector<8x1xi1>
      %158 = vector.broadcast %157 : vector<8x1xi1> to vector<8x32xi1>
      %159 = vector.broadcast %cst_157 : f32 to vector<8x32xf32>
      %160 = arith.select %158, %148, %159 : vector<8x32xi1>, vector<8x32xf32>
      %161 = arith.maximumf %arg20, %160 : vector<8x32xf32>
      scf.yield %153, %156, %161 : vector<8x32xf32>, vector<8x32xf32>, vector<8x32xf32>
    }
    %c8_i32_122 = arith.constant 8 : i32
    %c2_123 = arith.constant 2 : index
    %c1_124 = arith.constant 1 : index
    %c0_125 = arith.constant 0 : index
    %c0_126 = arith.constant 0 : index
    %93 = vector.load %arg5[%c2_123, %c1_124, %c0_125, %c0_126] : memref<3x2x32x128xf32, #tpu.memory_space<vmem>>, vector<1x1x32x128xf32>
    %94 = vector.shape_cast %93 : vector<1x1x32x128xf32> to vector<32x128xf32>
    %cst_127 = arith.constant 0.000000e+00 : f32
    %95 = vector.broadcast %cst_127 : f32 to vector<8x32xf32>
    %cst_128 = arith.constant 0.000000e+00 : f32
    %96 = vector.broadcast %cst_128 : f32 to vector<8x32xf32>
    %cst_129 = arith.constant 0xFF800000 : f32
    %97 = vector.broadcast %cst_129 : f32 to vector<8x32xf32>
    %c0_i32_130 = arith.constant 0 : i32
    %c8_i32_131 = arith.constant 8 : i32
    %98 = arith.addi %c0_i32_130, %c8_i32_131 : i32
    %c1_i32_132 = arith.constant 1 : i32
    %99:3 = scf.for %arg17 = %c0_i32_130 to %98 step %c1_i32_132 iter_args(%arg18 = %95, %arg19 = %96, %arg20 = %97) -> (vector<8x32xf32>, vector<8x32xf32>, vector<8x32xf32>)  : i32 {
      %c7_i32 = arith.constant 7 : i32
      %128 = arith.subi %c7_i32, %arg17 : i32
      %129 = arith.index_cast %128 : i32 to index
      %c0_153 = arith.constant 0 : index
      %c0_154 = arith.constant 0 : index
      %130 = vector.load %arg12[%129, %c0_153, %c0_154] : memref<8x8x256xf32, #tpu.memory_space<vmem>>, vector<1x8x256xf32>
      %131 = vector.shape_cast %130 : vector<1x8x256xf32> to vector<8x256xf32>
      %132 = vector.extract_strided_slice %131 {offsets = [0, 128], sizes = [8, 128], strides = [1, 1]} : vector<8x256xf32> to vector<8x128xf32>
      %cst_155 = arith.constant dense<0.000000e+00> : vector<8x128xf32>
      %133 = tpu.matmul %arg18, %94, %cst_155 {dimension_numbers = #tpu.dot_dimension_numbers<[1], [0], [0], [1], [0, 0, 1, 1], [], []>} : vector<8x32xf32>, vector<32x128xf32>, vector<8x128xf32> -> vector<8x128xf32>
      %134 = arith.addf %132, %133 : vector<8x128xf32>
      %135 = arith.negf %134 : vector<8x128xf32>
      %136 = math.exp %135 : vector<8x128xf32>
      %cst_156 = arith.constant 1.000000e+00 : f32
      %137 = vector.broadcast %cst_156 : f32 to vector<8x128xf32>
      %138 = arith.addf %137, %136 : vector<8x128xf32>
      %139 = arith.divf %137, %138 : vector<8x128xf32>
      %140 = math.tanh %134 : vector<8x128xf32>
      %141 = vector.extract_strided_slice %139 {offsets = [0, 0], sizes = [8, 32], strides = [1, 1]} : vector<8x128xf32> to vector<8x32xf32>
      %142 = vector.extract_strided_slice %139 {offsets = [0, 32], sizes = [8, 32], strides = [1, 1]} : vector<8x128xf32> to vector<8x32xf32>
      %143 = vector.extract_strided_slice %139 {offsets = [0, 96], sizes = [8, 32], strides = [1, 1]} : vector<8x128xf32> to vector<8x32xf32>
      %144 = vector.extract_strided_slice %140 {offsets = [0, 64], sizes = [8, 32], strides = [1, 1]} : vector<8x128xf32> to vector<8x32xf32>
      %145 = arith.mulf %142, %arg19 : vector<8x32xf32>
      %146 = arith.mulf %141, %144 : vector<8x32xf32>
      %147 = arith.addf %145, %146 : vector<8x32xf32>
      %148 = math.tanh %147 : vector<8x32xf32>
      %149 = arith.mulf %143, %148 : vector<8x32xf32>
      %150 = vector.broadcast %128 : i32 to vector<8x1xi32>
      %151 = arith.cmpi slt, %150, %0 : vector<8x1xi32>
      %152 = vector.shape_cast %151 : vector<8x1xi1> to vector<8x1xi1>
      %153 = vector.broadcast %152 : vector<8x1xi1> to vector<8x32xi1>
      %154 = arith.select %153, %149, %arg18 : vector<8x32xi1>, vector<8x32xf32>
      %155 = vector.shape_cast %151 : vector<8x1xi1> to vector<8x1xi1>
      %156 = vector.broadcast %155 : vector<8x1xi1> to vector<8x32xi1>
      %157 = arith.select %156, %147, %arg19 : vector<8x32xi1>, vector<8x32xf32>
      %cst_157 = arith.constant 0xFF800000 : f32
      %158 = vector.shape_cast %151 : vector<8x1xi1> to vector<8x1xi1>
      %159 = vector.broadcast %158 : vector<8x1xi1> to vector<8x32xi1>
      %160 = vector.broadcast %cst_157 : f32 to vector<8x32xf32>
      %161 = arith.select %159, %149, %160 : vector<8x32xi1>, vector<8x32xf32>
      %162 = arith.maximumf %arg20, %161 : vector<8x32xf32>
      scf.yield %154, %157, %162 : vector<8x32xf32>, vector<8x32xf32>, vector<8x32xf32>
    }
    %c8_i32_133 = arith.constant 8 : i32
    %100 = tpu.concatenate %92#2, %99#2 in 1 : vector<8x32xf32>, vector<8x32xf32> -> vector<8x64xf32>
    %101 = vector.extract_strided_slice %100 {offsets = [0, 0], sizes = [2, 64], strides = [1, 1]} : vector<8x64xf32> to vector<2x64xf32>
    %102 = vector.extract_strided_slice %100 {offsets = [2, 0], sizes = [2, 64], strides = [1, 1]} : vector<8x64xf32> to vector<2x64xf32>
    %c0_134 = arith.constant 0 : index
    %c0_135 = arith.constant 0 : index
    %103 = vector.load %arg7[%c0_134, %c0_135] : memref<256x64xf32, #tpu.memory_space<vmem>>, vector<64x64xf32>
    %cst_136 = arith.constant dense<0.000000e+00> : vector<2x64xf32>
    %104 = tpu.matmul %101, %103, %cst_136 {dimension_numbers = #tpu.dot_dimension_numbers<[1], [0], [0], [1], [0, 0, 1, 1], [], []>} : vector<2x64xf32>, vector<64x64xf32>, vector<2x64xf32> -> vector<2x64xf32>
    %c64 = arith.constant 64 : index
    %c0_137 = arith.constant 0 : index
    %105 = vector.load %arg7[%c64, %c0_137] : memref<256x64xf32, #tpu.memory_space<vmem>>, vector<64x64xf32>
    %cst_138 = arith.constant dense<0.000000e+00> : vector<2x64xf32>
    %106 = tpu.matmul %102, %105, %cst_138 {dimension_numbers = #tpu.dot_dimension_numbers<[1], [0], [0], [1], [0, 0, 1, 1], [], []>} : vector<2x64xf32>, vector<64x64xf32>, vector<2x64xf32> -> vector<2x64xf32>
    %107 = arith.addf %104, %106 : vector<2x64xf32>
    %108 = arith.subf %101, %102 : vector<2x64xf32>
    %109 = math.absf %108 : vector<2x64xf32>
    %c128 = arith.constant 128 : index
    %c0_139 = arith.constant 0 : index
    %110 = vector.load %arg7[%c128, %c0_139] : memref<256x64xf32, #tpu.memory_space<vmem>>, vector<64x64xf32>
    %cst_140 = arith.constant dense<0.000000e+00> : vector<2x64xf32>
    %111 = tpu.matmul %109, %110, %cst_140 {dimension_numbers = #tpu.dot_dimension_numbers<[1], [0], [0], [1], [0, 0, 1, 1], [], []>} : vector<2x64xf32>, vector<64x64xf32>, vector<2x64xf32> -> vector<2x64xf32>
    %112 = arith.addf %107, %111 : vector<2x64xf32>
    %113 = arith.mulf %101, %102 : vector<2x64xf32>
    %c192 = arith.constant 192 : index
    %c0_141 = arith.constant 0 : index
    %114 = vector.load %arg7[%c192, %c0_141] : memref<256x64xf32, #tpu.memory_space<vmem>>, vector<64x64xf32>
    %cst_142 = arith.constant dense<0.000000e+00> : vector<2x64xf32>
    %115 = tpu.matmul %113, %114, %cst_142 {dimension_numbers = #tpu.dot_dimension_numbers<[1], [0], [0], [1], [0, 0, 1, 1], [], []>} : vector<2x64xf32>, vector<64x64xf32>, vector<2x64xf32> -> vector<2x64xf32>
    %116 = arith.addf %112, %115 : vector<2x64xf32>
    %c0_143 = arith.constant 0 : index
    %c0_144 = arith.constant 0 : index
    %117 = vector.load %arg8[%c0_143, %c0_144] : memref<1x64xf32, #tpu.memory_space<vmem>>, vector<1x64xf32>
    %118 = vector.broadcast %117 : vector<1x64xf32> to vector<2x64xf32>
    %119 = arith.addf %116, %118 : vector<2x64xf32>
    %cst_145 = arith.constant 0.000000e+00 : f32
    %120 = vector.broadcast %cst_145 : f32 to vector<2x64xf32>
    %121 = arith.maximumf %119, %120 : vector<2x64xf32>
    %c0_146 = arith.constant 0 : index
    %c0_147 = arith.constant 0 : index
    %122 = vector.load %arg9[%c0_146, %c0_147] : memref<64x3xf32, #tpu.memory_space<vmem>>, vector<64x3xf32>
    %cst_148 = arith.constant dense<0.000000e+00> : vector<2x3xf32>
    %123 = tpu.matmul %121, %122, %cst_148 {dimension_numbers = #tpu.dot_dimension_numbers<[1], [0], [0], [1], [0, 0, 1, 1], [], []>} : vector<2x64xf32>, vector<64x3xf32>, vector<2x3xf32> -> vector<2x3xf32>
    %c0_149 = arith.constant 0 : index
    %c0_150 = arith.constant 0 : index
    %124 = vector.load %arg10[%c0_149, %c0_150] : memref<1x3xf32, #tpu.memory_space<vmem>>, vector<1x3xf32>
    %125 = vector.broadcast %124 : vector<1x3xf32> to vector<2x3xf32>
    %126 = arith.addf %123, %125 : vector<2x3xf32>
    %c0_151 = arith.constant 0 : index
    %c0_152 = arith.constant 0 : index
    %127 = vector.load %arg11[%c0_151, %c0_152] : memref<2x3xf32, #tpu.memory_space<vmem>>, vector<2x3xf32>
    tpu.vector_store %arg11[%c0_151, %c0_152], %126 {strides = array<i32>} : memref<2x3xf32, #tpu.memory_space<vmem>>, vector<2x3xf32>,
    return
  }
  func.func @transform_0(%arg0: i32) -> (i32, i32) {
    %c0_i32 = arith.constant 0 : i32
    %c0_i32_0 = arith.constant 0 : i32
    %c0_i32_1 = arith.constant 0 : i32
    return %c0_i32, %c0_i32_0 : i32, i32
  }
  func.func @transform_1(%arg0: i32) -> (i32, i32, i32) {
    %c0_i32 = arith.constant 0 : i32
    %c0_i32_0 = arith.constant 0 : i32
    %c0_i32_1 = arith.constant 0 : i32
    %c0_i32_2 = arith.constant 0 : i32
    return %c0_i32, %c0_i32_0, %c0_i32_1 : i32, i32, i32
  }
  func.func @transform_2(%arg0: i32) -> (i32, i32, i32) {
    %c0_i32 = arith.constant 0 : i32
    %c0_i32_0 = arith.constant 0 : i32
    %c0_i32_1 = arith.constant 0 : i32
    %c0_i32_2 = arith.constant 0 : i32
    return %c0_i32, %c0_i32_0, %c0_i32_1 : i32, i32, i32
  }
  func.func @transform_3(%arg0: i32) -> (i32, i32, i32, i32) {
    %c0_i32 = arith.constant 0 : i32
    %c0_i32_0 = arith.constant 0 : i32
    %c0_i32_1 = arith.constant 0 : i32
    %c0_i32_2 = arith.constant 0 : i32
    %c0_i32_3 = arith.constant 0 : i32
    return %c0_i32, %c0_i32_0, %c0_i32_1, %c0_i32_2 : i32, i32, i32, i32
  }
  func.func @transform_4(%arg0: i32) -> (i32, i32, i32, i32) {
    %c0_i32 = arith.constant 0 : i32
    %c0_i32_0 = arith.constant 0 : i32
    %c0_i32_1 = arith.constant 0 : i32
    %c0_i32_2 = arith.constant 0 : i32
    %c0_i32_3 = arith.constant 0 : i32
    return %c0_i32, %c0_i32_0, %c0_i32_1, %c0_i32_2 : i32, i32, i32, i32
  }
  func.func @transform_5(%arg0: i32) -> (i32, i32, i32) {
    %c0_i32 = arith.constant 0 : i32
    %c0_i32_0 = arith.constant 0 : i32
    %c0_i32_1 = arith.constant 0 : i32
    %c0_i32_2 = arith.constant 0 : i32
    return %c0_i32, %c0_i32_0, %c0_i32_1 : i32, i32, i32
  }
  func.func @transform_6(%arg0: i32) -> (i32, i32) {
    %c0_i32 = arith.constant 0 : i32
    %c0_i32_0 = arith.constant 0 : i32
    %c0_i32_1 = arith.constant 0 : i32
    return %c0_i32, %c0_i32_0 : i32, i32
  }
  func.func @transform_7(%arg0: i32) -> (i32, i32) {
    %c0_i32 = arith.constant 0 : i32
    %c0_i32_0 = arith.constant 0 : i32
    %c0_i32_1 = arith.constant 0 : i32
    return %c0_i32, %c0_i32_0 : i32, i32
  }
  func.func @transform_8(%arg0: i32) -> (i32, i32) {
    %c0_i32 = arith.constant 0 : i32
    %c0_i32_0 = arith.constant 0 : i32
    %c0_i32_1 = arith.constant 0 : i32
    return %c0_i32, %c0_i32_0 : i32, i32
  }
  func.func @transform_9(%arg0: i32) -> (i32, i32) {
    %c0_i32 = arith.constant 0 : i32
    %c0_i32_0 = arith.constant 0 : i32
    %c0_i32_1 = arith.constant 0 : i32
    return %c0_i32, %c0_i32_0 : i32, i32
  }
  func.func @transform_10(%arg0: i32) -> (i32, i32) {
    %c0_i32 = arith.constant 0 : i32
    %c0_i32_0 = arith.constant 0 : i32
    %c0_i32_1 = arith.constant 0 : i32
    return %c0_i32, %c0_i32_0 : i32, i32
  }
}

</mosaic_0001>

<llo_original>
// kernel: res_bilstm_forward.1
$region0: #{res_bilstm_forward.1}
  #allocation0 [shape = 'u32[]', space=smem, size = 0x4, offset = 0x4, fixed_abs, tag = 'smem constant byte address 0x4 - core index']
  #allocation1 [shape = 'u32[144,128]{1,0:T(1,128)}', space=vmem, size = 0x12000, scoped, tag = 'internal scratch']
  #allocation2 [shape = 'f32[8,8,256]{2,1,0:T(8,128)}', space=vmem, size = 0x10000, scoped, tag = 'scratch operand']
  #allocation3 [shape = 'f32[8,8,32]{2,1,0:T(8,128)}', space=vmem, size = 0x8000, scoped, tag = 'scratch operand']
  #allocation4 [shape = 'f32[8,8,32]{2,1,0:T(8,128)}', space=vmem, size = 0x8000, scoped, tag = 'scratch operand']
  #allocation5 [shape = 'f32[8,8,32]{2,1,0:T(8,128)}', space=vmem, size = 0x8000, scoped, tag = 'scratch operand']
  #allocation6 [shape = 'f32[8,8,32]{2,1,0:T(8,128)}', space=vmem, size = 0x8000, scoped, tag = 'scratch operand']
  %s0 = inlined_call_operand.vmem [shape: s32[8,1], index: 0, kind: input, shape index: {}]
  %s1 = inlined_call_operand.vmem [shape: f32[8,8,16], index: 1, kind: input, shape index: {}]
  %s2 = inlined_call_operand.vmem [shape: f32[3,16,256], index: 2, kind: input, shape index: {}]
  %s3 = inlined_call_operand.vmem [shape: f32[2,2,32,256], index: 3, kind: input, shape index: {}]
  %s4 = inlined_call_operand.vmem [shape: f32[3,2,32,128], index: 4, kind: input, shape index: {}]
  %s5 = inlined_call_operand.vmem [shape: f32[3,1,256], index: 5, kind: input, shape index: {}]
  %s6 = inlined_call_operand.vmem [shape: f32[256,64], index: 6, kind: input, shape index: {}]
  %s7 = inlined_call_operand.vmem [shape: f32[1,64], index: 7, kind: input, shape index: {}]
  %s8 = inlined_call_operand.vmem [shape: f32[64,3], index: 8, kind: input, shape index: {}]
  %s9 = inlined_call_operand.vmem [shape: f32[1,3], index: 9, kind: input, shape index: {}]
  %s10 = inlined_call_operand.hbm [shape: f32[2,3], index: 10, kind: output, shape index: {}]
  %s11 = sld [smem:[#allocation0]]
  $region92: #{res_bilstm_forward.1} parent=0
    _
  %s13 = ssub.s32 1, %s11
  %s14 = scalar_select 0, %s13, %s11
  $region1: #{res_bilstm_forward.1} parent=0
    #allocation7 [shape = 'u8[1024]{0}', space=vmem, size = 0x400, scoped, tag = 'output window, operand 0, single buffered']
    #allocation8 [shape = 's32[1]{0}', space=sflag, size = 0x4, scoped, tag = 'scoped memory for res_bilstm_forward.1']
    %15 = vsyncpa [#allocation8], 0
    // Predicated region
    $region2: #{res_bilstm_forward.1} parent=1 // pred_check
      _
    $region3: #{res_bilstm_forward.1} parent=1 // pred_check_branch
      %17 = sbr.rel (0) target = $region5
    $region4: #{res_bilstm_forward.1} parent=1 // pred_region
      _
    $region5: #{res_bilstm_forward.1} parent=1 // pred_fallthru
      _
    // Predicated region
    $region6: #{res_bilstm_forward.1} parent=1 // pred_check
      _
    $region7: #{res_bilstm_forward.1} parent=1 // pred_check_branch
      %19 = sbr.rel (0) target = $region9
    $region8: #{res_bilstm_forward.1} parent=1 // pred_region
      _
    $region9: #{res_bilstm_forward.1} parent=1 // pred_fallthru
      _
    // Predicated region
    $region10: #{res_bilstm_forward.1} parent=1 // pred_check
      _
    $region11: #{res_bilstm_forward.1} parent=1 // pred_check_branch
      %21 = sbr.rel (0) target = $region13
    $region12: #{res_bilstm_forward.1} parent=1 // pred_region
      _
    $region13: #{res_bilstm_forward.1} parent=1 // pred_fallthru
      _
    // Predicated region
    $region14: #{res_bilstm_forward.1} parent=1 // pred_check
      _
    $region15: #{res_bilstm_forward.1} parent=1 // pred_check_branch
      %23 = sbr.rel (0) target = $region17
    $region16: #{res_bilstm_forward.1} parent=1 // pred_region
      _
    $region17: #{res_bilstm_forward.1} parent=1 // pred_fallthru
      _
    // Predicated region
    $region18: #{res_bilstm_forward.1} parent=1 // pred_check
      _
    $region19: #{res_bilstm_forward.1} parent=1 // pred_check_branch
      %25 = sbr.rel (0) target = $region21
    $region20: #{res_bilstm_forward.1} parent=1 // pred_region
      _
    $region21: #{res_bilstm_forward.1} parent=1 // pred_fallthru
      _
    // Predicated region
    $region22: #{res_bilstm_forward.1} parent=1 // pred_check
      _
    $region23: #{res_bilstm_forward.1} parent=1 // pred_check_branch
      %27 = sbr.rel (0) target = $region25
    $region24: #{res_bilstm_forward.1} parent=1 // pred_region
      _
    $region25: #{res_bilstm_forward.1} parent=1 // pred_fallthru
      _
    // Predicated region
    $region26: #{res_bilstm_forward.1} parent=1 // pred_check
      _
    $region27: #{res_bilstm_forward.1} parent=1 // pred_check_branch
      %29 = sbr.rel (0) target = $region29
    $region28: #{res_bilstm_forward.1} parent=1 // pred_region
      _
    $region29: #{res_bilstm_forward.1} parent=1 // pred_fallthru
      _
    // Predicated region
    $region30: #{res_bilstm_forward.1} parent=1 // pred_check
      _
    $region31: #{res_bilstm_forward.1} parent=1 // pred_check_branch
      %31 = sbr.rel (0) target = $region33
    $region32: #{res_bilstm_forward.1} parent=1 // pred_region
      _
    $region33: #{res_bilstm_forward.1} parent=1 // pred_fallthru
      _
    // Predicated region
    $region34: #{res_bilstm_forward.1} parent=1 // pred_check
      _
    $region35: #{res_bilstm_forward.1} parent=1 // pred_check_branch
      %33 = sbr.rel (0) target = $region37
    $region36: #{res_bilstm_forward.1} parent=1 // pred_region
      _
    $region37: #{res_bilstm_forward.1} parent=1 // pred_fallthru
      _
    // Predicated region
    $region38: #{res_bilstm_forward.1} parent=1 // pred_check
      _
    $region39: #{res_bilstm_forward.1} parent=1 // pred_check_branch
      %35 = sbr.rel (0) target = $region41
    $region40: #{res_bilstm_forward.1} parent=1 // pred_region
      _
    $region41: #{res_bilstm_forward.1} parent=1 // pred_fallthru
      _
    %v36 = vld [vmem:[%s0] sm:$0xff]
    %v37 = vld [vmem:[%s2] sm:$0xff]
    %v38 = vld [vmem:[%s2 + $0x8] sm:$0xff]
    %v39 = vld [vmem:[%s2 + $0x10] sm:$0xff]
    %v40 = vld [vmem:[%s2 + $0x18] sm:$0xff]
    %v41 = vld [vmem:[%s5] sm:$0x3]
    %v42 = vld [vmem:[%s1] sm:$0xff]
    %v43 = vld [vmem:[%s1 + $0x8] sm:$0xff]
    %v44 = vld [vmem:[%s1 + $0x10] sm:$0xff]
    %v45 = vld [vmem:[%s1 + $0x18] sm:$0xff]
    %v46 = vld [vmem:[%s1 + $0x20] sm:$0xff]
    %v47 = vld [vmem:[%s1 + $0x28] sm:$0xff]
    %v48 = vld [vmem:[%s1 + $0x30] sm:$0xff]
    %v49 = vld [vmem:[%s1 + $0x38] sm:$0xff]
    %v51 = vlaneseq
    %v52 = vshrl.u32 %v51, 7
    %v53 = vsub.s32 0, %v52
    %v54 = vrot.slane %v41, %v53
    %v55 = vlaneseq
    %v56 = vshrl.u32 %v55, 7
    %v57 = vsub.s32 1, %v56
    %v58 = vrot.slane %v41, %v57
    %vm61 = vcmask 130048
    %v63 = vsel %vm61, %v42, 0
    %v66 = vsel %vm61, %v43, 0
    %v69 = vsel %vm61, %v44, 0
    %v72 = vsel %vm61, %v45, 0
    %v75 = vsel %vm61, %v46, 0
    %v78 = vsel %vm61, %v47, 0
    %v81 = vsel %vm61, %v48, 0
    %v84 = vsel %vm61, %v49, 0
    %86 = vmatprep.subr.mxu0 %v38
    %87 = vmatpush1.msra.mxu0 %v37
    %88 = vmatprep.subr.mxu0 %v40
    %89 = vmatpush1.msra.mxu0 %v39
    %90 = vmatprep.subr.mxu0 0.0
    %91 = vmatpush1.msra.mxu0 0.0
    %92 = vmatprep.subr.mxu0 0.0
    %93 = vmatpush1.msra.mxu0 0.0
    %94 = vmatprep.subr.mxu0 0.0
    %95 = vmatpush1.msra.mxu0 0.0
    %96 = vmatprep.subr.mxu0 0.0
    %97 = vmatpush1.msra.mxu0 0.0
    %98 = vmatprep.subr.mxu0 0.0
    %99 = vmatpush1.msra.mxu0 0.0
    %100 = vmatprep.subr.mxu0 0.0
    %101 = vmatpush1.msra.mxu0 0.0
    %102 = vmatprep.subr.mxu0 0.0
    %103 = vmatpush1.msra.mxu0 0.0
    %104 = vmatprep.subr.mxu0 0.0
    %105 = vmatpush1.msra.mxu0 0.0
    %106 = vmatprep.subr.mxu0 0.0
    %107 = vmatpush1.msra.mxu0 0.0
    %108 = vmatprep.subr.mxu0 0.0
    %109 = vmatpush1.msra.mxu0 0.0
    %110 = vmatprep.subr.mxu0 0.0
    %111 = vmatpush1.msra.mxu0 0.0
    %112 = vmatprep.subr.mxu0 0.0
    %113 = vmatpush1.msra.mxu0 0.0
    %114 = vmatprep.subr.mxu0 0.0
    %115 = vmatpush1.msra.mxu0 0.0
    %116 = vmatprep.subr.mxu0 0.0
    %117 = vmatpush1.msra.mxu0 0.0
    %118 = vmatprep.subr.mxu0 0.0
    %119 = vmatpush1.msra.mxu0 0.0
    %120 = vmatprep.subr.mxu0 0.0
    %121 = vmatpush1.msra.mxu0 0.0
    %122 = vmatprep.subr.mxu0 0.0
    %123 = vmatpush1.msra.mxu0 0.0
    %124 = vmatprep.subr.mxu0 0.0
    %125 = vmatpush1.msra.mxu0 0.0
    %126 = vmatprep.subr.mxu0 0.0
    %127 = vmatpush1.msra.mxu0 0.0
    %128 = vmatprep.subr.mxu0 0.0
    %129 = vmatpush1.msra.mxu0 0.0
    %130 = vmatprep.subr.mxu0 0.0
    %131 = vmatpush1.msra.mxu0 0.0
    %132 = vmatprep.subr.mxu0 0.0
    %133 = vmatpush1.msra.mxu0 0.0
    %134 = vmatprep.subr.mxu0 0.0
    %135 = vmatpush1.msra.mxu0 0.0
    %136 = vmatprep.subr.mxu0 0.0
    %137 = vmatpush1.msra.mxu0 0.0
    %138 = vmatprep.subr.mxu0 0.0
    %139 = vmatpush1.msra.mxu0 0.0
    %140 = vmatprep.subr.mxu0 0.0
    %141 = vmatpush1.msra.mxu0 0.0
    %142 = vmatprep.subr.mxu0 0.0
    %143 = vmatpush1.msra.mxu0 0.0
    %144 = vmatprep.subr.mxu0 0.0
    %145 = vmatpush1.msra.mxu0 0.0
    %146 = vmatprep.subr.mxu0 0.0
    %147 = vmatpush1.msra.mxu0 0.0
    %148 = vmatprep.subr.mxu0 0.0
    %149 = vmatpush1.msra.mxu0 0.0
    %150 = vmatprep.mubr.f32.mxu0 0.0
    %151 = vmatmul.mubr.f32.gmra.mrb[0].mxu0 %v63
    %v152 = vpop.f32.mrb[0].mxu0
    %v153 = vadd.f32 %v54, %v152
    %v154 = vpop.f32.mrb[0].mxu0
    %v155 = vadd.f32 %v58, %v154
    %156 = vmatprep.mubr.f32.mxu0 0.0
    %157 = vmatmul.mubr.f32.gmra.mrb[0].mxu0 %v66
    %v158 = vpop.f32.mrb[0].mxu0
    %v159 = vadd.f32 %v54, %v158
    %v160 = vpop.f32.mrb[0].mxu0
    %v161 = vadd.f32 %v58, %v160
    %162 = vmatprep.mubr.f32.mxu0 0.0
    %163 = vmatmul.mubr.f32.gmra.mrb[0].mxu0 %v69
    %v164 = vpop.f32.mrb[0].mxu0
    %v165 = vadd.f32 %v54, %v164
    %v166 = vpop.f32.mrb[0].mxu0
    %v167 = vadd.f32 %v58, %v166
    %168 = vmatprep.mubr.f32.mxu0 0.0
    %169 = vmatmul.mubr.f32.gmra.mrb[0].mxu0 %v72
    %v170 = vpop.f32.mrb[0].mxu0
    %v171 = vadd.f32 %v54, %v170
    %v172 = vpop.f32.mrb[0].mxu0
    %v173 = vadd.f32 %v58, %v172
    %174 = vmatprep.mubr.f32.mxu0 0.0
    %175 = vmatmul.mubr.f32.gmra.mrb[0].mxu0 %v75
    %v176 = vpop.f32.mrb[0].mxu0
    %v177 = vadd.f32 %v54, %v176
    %v178 = vpop.f32.mrb[0].mxu0
    %v179 = vadd.f32 %v58, %v178
    %180 = vmatprep.mubr.f32.mxu0 0.0
    %181 = vmatmul.mubr.f32.gmra.mrb[0].mxu0 %v78
    %v182 = vpop.f32.mrb[0].mxu0
    %v183 = vadd.f32 %v54, %v182
    %v184 = vpop.f32.mrb[0].mxu0
    %v185 = vadd.f32 %v58, %v184
    %186 = vmatprep.mubr.f32.mxu0 0.0
    %187 = vmatmul.mubr.f32.gmra.mrb[0].mxu0 %v81
    %v188 = vpop.f32.mrb[0].mxu0
    %v189 = vadd.f32 %v54, %v188
    %v190 = vpop.f32.mrb[0].mxu0
    %v191 = vadd.f32 %v58, %v190
    %192 = vmatprep.mubr.f32.mxu0 0.0
    %193 = vmatmul.mubr.f32.gmra.mrb[0].mxu0 %v84
    %v194 = vpop.f32.mrb[0].mxu0
    %v195 = vadd.f32 %v54, %v194
    %v196 = vpop.f32.mrb[0].mxu0
    %v197 = vadd.f32 %v58, %v196
    %198 = vdwg.mxu0
    %199 = vst [vmem:[#allocation2] sm:$0xff] %v153
    %200 = vst [vmem:[#allocation2 + $0x8] sm:$0xff] %v155
    %201 = vst [vmem:[#allocation2 + $0x10] sm:$0xff] %v159
    %202 = vst [vmem:[#allocation2 + $0x18] sm:$0xff] %v161
    %203 = vst [vmem:[#allocation2 + $0x20] sm:$0xff] %v165
    %204 = vst [vmem:[#allocation2 + $0x28] sm:$0xff] %v167
    %205 = vst [vmem:[#allocation2 + $0x30] sm:$0xff] %v171
    %206 = vst [vmem:[#allocation2 + $0x38] sm:$0xff] %v173
    %207 = vst [vmem:[#allocation2 + $0x40] sm:$0xff] %v177
    %208 = vst [vmem:[#allocation2 + $0x48] sm:$0xff] %v179
    %209 = vst [vmem:[#allocation2 + $0x50] sm:$0xff] %v183
    %210 = vst [vmem:[#allocation2 + $0x58] sm:$0xff] %v185
    %211 = vst [vmem:[#allocation2 + $0x60] sm:$0xff] %v189
    %212 = vst [vmem:[#allocation2 + $0x68] sm:$0xff] %v191
    %213 = vst [vmem:[#allocation2 + $0x70] sm:$0xff] %v195
    %214 = vst [vmem:[#allocation2 + $0x78] sm:$0xff] %v197
    %v215 = vld [vmem:[%s4] sm:$0xff]
    %v216 = vld [vmem:[%s4 + $0x8] sm:$0xff]
    %v217 = vld [vmem:[%s4 + $0x10] sm:$0xff]
    %v218 = vld [vmem:[%s4 + $0x18] sm:$0xff]
    loop: start=0, step=1, limit=8
    $region42: #{res_bilstm_forward.1} parent=1 // loop_pre_header
      _
    $region43: #{res_bilstm_forward.1} parent=1 // loop_header
      %s220 = sphi 0, %s224
      %p221 = scmp.ge.s32.totalorder %s220, 8
      %v225 = vphi 0.0, %v339
      %v226 = vphi 0.0, %v340
    $region44: #{res_bilstm_forward.1} parent=1 // loop_header_branch
      %223 = sbr.rel (%p221) target = $region48
    $region45: #{res_bilstm_forward.1} parent=1 // loop_body
      %s227 = smul.u32 %s220, 2
      %s228 = smul.addr %s227, 8
      %s229 = scalar_lea.vmem [#allocation2], %s228
      %v230 = vld [vmem:[%s229] sm:$0xff]
      %232 = vrot.lane.b32.xlu0 %v225, 32
      %v233 = vpop.permute.xlu0 %232
      %vm234 = vcmask 261120
      %v235 = vsel %vm234, %v233, 0
      %237 = vmatprep.subr.mxu0 0.0
      %238 = vmatpush1.msra.mxu0 %v215
      %239 = vmatprep.subr.mxu0 0.0
      %240 = vmatpush1.msra.mxu0 %v216
      %241 = vmatprep.subr.mxu0 0.0
      %242 = vmatpush1.msra.mxu0 %v217
      %243 = vmatprep.subr.mxu0 0.0
      %244 = vmatpush1.msra.mxu0 %v218
      %245 = vmatprep.subr.mxu0 0.0
      %246 = vmatpush1.msra.mxu0 0.0
      %247 = vmatprep.subr.mxu0 0.0
      %248 = vmatpush1.msra.mxu0 0.0
      %249 = vmatprep.subr.mxu0 0.0
      %250 = vmatpush1.msra.mxu0 0.0
      %251 = vmatprep.subr.mxu0 0.0
      %252 = vmatpush1.msra.mxu0 0.0
      %253 = vmatprep.subr.mxu0 0.0
      %254 = vmatpush1.msra.mxu0 0.0
      %255 = vmatprep.subr.mxu0 0.0
      %256 = vmatpush1.msra.mxu0 0.0
      %257 = vmatprep.subr.mxu0 0.0
      %258 = vmatpush1.msra.mxu0 0.0
      %259 = vmatprep.subr.mxu0 0.0
      %260 = vmatpush1.msra.mxu0 0.0
      %261 = vmatprep.subr.mxu0 0.0
      %262 = vmatpush1.msra.mxu0 0.0
      %263 = vmatprep.subr.mxu0 0.0
      %264 = vmatpush1.msra.mxu0 0.0
      %265 = vmatprep.subr.mxu0 0.0
      %266 = vmatpush1.msra.mxu0 0.0
      %267 = vmatprep.subr.mxu0 0.0
      %268 = vmatpush1.msra.mxu0 0.0
      %269 = vmatprep.subr.mxu0 0.0
      %270 = vmatpush1.msra.mxu0 0.0
      %271 = vmatprep.subr.mxu0 0.0
      %272 = vmatpush1.msra.mxu0 0.0
      %273 = vmatprep.subr.mxu0 0.0
      %274 = vmatpush1.msra.mxu0 0.0
      %275 = vmatprep.subr.mxu0 0.0
      %276 = vmatpush1.msra.mxu0 0.0
      %277 = vmatprep.subr.mxu0 0.0
      %278 = vmatpush1.msra.mxu0 0.0
      %279 = vmatprep.subr.mxu0 0.0
      %280 = vmatpush1.msra.mxu0 0.0
      %281 = vmatprep.subr.mxu0 0.0
      %282 = vmatpush1.msra.mxu0 0.0
      %283 = vmatprep.subr.mxu0 0.0
      %284 = vmatpush1.msra.mxu0 0.0
      %285 = vmatprep.subr.mxu0 0.0
      %286 = vmatpush1.msra.mxu0 0.0
      %287 = vmatprep.subr.mxu0 0.0
      %288 = vmatpush1.msra.mxu0 0.0
      %289 = vmatprep.subr.mxu0 0.0
      %290 = vmatpush1.msra.mxu0 0.0
      %291 = vmatprep.subr.mxu0 0.0
      %292 = vmatpush1.msra.mxu0 0.0
      %293 = vmatprep.subr.mxu0 0.0
      %294 = vmatpush1.msra.mxu0 0.0
      %295 = vmatprep.subr.mxu0 0.0
      %296 = vmatpush1.msra.mxu0 0.0
      %297 = vmatprep.subr.mxu0 0.0
      %298 = vmatpush1.msra.mxu0 0.0
      %299 = vmatprep.subr.mxu0 0.0
      %300 = vmatpush1.msra.mxu0 0.0
      %301 = vmatprep.mubr.f32.mxu0 0.0
      %302 = vmatmul.mubr.f32.gmra.mrb[0].mxu0 %v235
      %v303 = vpop.f32.mrb[0].mxu0
      %v304 = vadd.f32 0.0, %v303
      %v305 = vpop.f32.mrb[0].mxu0
      %306 = vdwg.mxu0
      %v307 = vadd.f32 %v230, %v304
      %v308 = vxor.u32 %v307, 2147483648
      %v309 = vmul.f32 %v308, 1.442695
      %v310 = vpow.pop %v309
      %v311 = vadd.f32 %v310, 1.0
      %v312 = vrcp.pop %v311
      %v313 = vmul.f32 1.0, %v312
      %v314 = vtanh.pop %v307
      %v315 = vmul.f32 %v313, %v226
      %317 = vrot.lane.b32.xlu0 %v314, 64
      %v318 = vpop.permute.xlu0 %317
      %v320 = vmul.f32 %v313, %v318
      %322 = vrot.lane.b32.xlu0 %v320, 32
      %v323 = vpop.permute.xlu0 %322
      %v325 = vadd.f32 %v315, %v323
      %v326 = vtanh.pop %v325
      %328 = vrot.lane.b32.xlu0 %v326, 64
      %v329 = vpop.permute.xlu0 %328
      %v331 = vmul.f32 %v313, %v329
      %v332 = vstv %s220
      %vm333 = vcmp.lt.s32.totalorder %v332, %v36
      %v334 = vsel %vm333, 1, 0
      %335 = vset.pattern.permute.xlu0 0
      %336 = vperm.xlu0 %335, %v334
      %v337 = vpop.permute.xlu0 %336
      %vm338 = vcmp.eq.s32.totalorder %v337, 1
      %v339 = vsel %vm338, %v331, %v225
      %v340 = vsel %vm338, %v325, %v226
      %v341 = vsel %vm338, %v331, 0.0
      %343 = vrot.lane.b32.xlu0 %v341, 32
      %v344 = vpop.permute.xlu0 %343
      %s346 = smul.u32 %s220, 8
      %s347 = scalar_lea.vmem [#allocation3], %s346
      %348 = vst.msk [vmem:[%s347] sm:$0xff] %vm234, %v344
    $region46: #{res_bilstm_forward.1} parent=1 // loop_footer
      %s224 = sadd.s32 1, %s220
    $region47: #{res_bilstm_forward.1} parent=1 // loop_footer_branch
      %219 = sbr.rel target = $region43
    $region48: #{res_bilstm_forward.1} parent=1 // loop_exit
      _
    %s349 = scalar_lea.vmem %s4, 32
    %v350 = vld [vmem:[%s349] sm:$0xff]
    %v351 = vld [vmem:[%s349 + $0x8] sm:$0xff]
    %v352 = vld [vmem:[%s349 + $0x10] sm:$0xff]
    %v353 = vld [vmem:[%s349 + $0x18] sm:$0xff]
    loop: start=0, step=1, limit=8
    $region49: #{res_bilstm_forward.1} parent=1 // loop_pre_header
      _
    $region50: #{res_bilstm_forward.1} parent=1 // loop_header
      %s355 = sphi 0, %s359
      %p356 = scmp.ge.s32.totalorder %s355, 8
      %v360 = vphi 0.0, %v475
      %v361 = vphi 0.0, %v476
    $region51: #{res_bilstm_forward.1} parent=1 // loop_header_branch
      %358 = sbr.rel (%p356) target = $region55
    $region52: #{res_bilstm_forward.1} parent=1 // loop_body
      %s362 = ssub.s32 7, %s355
      %s363 = smul.u32 %s362, 2
      %s364 = smul.addr %s363, 8
      %s365 = scalar_lea.vmem [#allocation2], %s364
      %v366 = vld [vmem:[%s365 + $0x8] sm:$0xff]
      %368 = vrot.lane.b32.xlu0 %v360, 32
      %v369 = vpop.permute.xlu0 %368
      %vm370 = vcmask 261120
      %v371 = vsel %vm370, %v369, 0
      %373 = vmatprep.subr.mxu0 0.0
      %374 = vmatpush1.msra.mxu0 %v350
      %375 = vmatprep.subr.mxu0 0.0
      %376 = vmatpush1.msra.mxu0 %v351
      %377 = vmatprep.subr.mxu0 0.0
      %378 = vmatpush1.msra.mxu0 %v352
      %379 = vmatprep.subr.mxu0 0.0
      %380 = vmatpush1.msra.mxu0 %v353
      %381 = vmatprep.subr.mxu0 0.0
      %382 = vmatpush1.msra.mxu0 0.0
      %383 = vmatprep.subr.mxu0 0.0
      %384 = vmatpush1.msra.mxu0 0.0
      %385 = vmatprep.subr.mxu0 0.0
      %386 = vmatpush1.msra.mxu0 0.0
      %387 = vmatprep.subr.mxu0 0.0
      %388 = vmatpush1.msra.mxu0 0.0
      %389 = vmatprep.subr.mxu0 0.0
      %390 = vmatpush1.msra.mxu0 0.0
      %391 = vmatprep.subr.mxu0 0.0
      %392 = vmatpush1.msra.mxu0 0.0
      %393 = vmatprep.subr.mxu0 0.0
      %394 = vmatpush1.msra.mxu0 0.0
      %395 = vmatprep.subr.mxu0 0.0
      %396 = vmatpush1.msra.mxu0 0.0
      %397 = vmatprep.subr.mxu0 0.0
      %398 = vmatpush1.msra.mxu0 0.0
      %399 = vmatprep.subr.mxu0 0.0
      %400 = vmatpush1.msra.mxu0 0.0
      %401 = vmatprep.subr.mxu0 0.0
      %402 = vmatpush1.msra.mxu0 0.0
      %403 = vmatprep.subr.mxu0 0.0
      %404 = vmatpush1.msra.mxu0 0.0
      %405 = vmatprep.subr.mxu0 0.0
      %406 = vmatpush1.msra.mxu0 0.0
      %407 = vmatprep.subr.mxu0 0.0
      %408 = vmatpush1.msra.mxu0 0.0
      %409 = vmatprep.subr.mxu0 0.0
      %410 = vmatpush1.msra.mxu0 0.0
      %411 = vmatprep.subr.mxu0 0.0
      %412 = vmatpush1.msra.mxu0 0.0
      %413 = vmatprep.subr.mxu0 0.0
      %414 = vmatpush1.msra.mxu0 0.0
      %415 = vmatprep.subr.mxu0 0.0
      %416 = vmatpush1.msra.mxu0 0.0
      %417 = vmatprep.subr.mxu0 0.0
      %418 = vmatpush1.msra.mxu0 0.0
      %419 = vmatprep.subr.mxu0 0.0
      %420 = vmatpush1.msra.mxu0 0.0
      %421 = vmatprep.subr.mxu0 0.0
      %422 = vmatpush1.msra.mxu0 0.0
      %423 = vmatprep.subr.mxu0 0.0
      %424 = vmatpush1.msra.mxu0 0.0
      %425 = vmatprep.subr.mxu0 0.0
      %426 = vmatpush1.msra.mxu0 0.0
      %427 = vmatprep.subr.mxu0 0.0
      %428 = vmatpush1.msra.mxu0 0.0
      %429 = vmatprep.subr.mxu0 0.0
      %430 = vmatpush1.msra.mxu0 0.0
      %431 = vmatprep.subr.mxu0 0.0
      %432 = vmatpush1.msra.mxu0 0.0
      %433 = vmatprep.subr.mxu0 0.0
      %434 = vmatpush1.msra.mxu0 0.0
      %435 = vmatprep.subr.mxu0 0.0
      %436 = vmatpush1.msra.mxu0 0.0
      %437 = vmatprep.mubr.f32.mxu0 0.0
      %438 = vmatmul.mubr.f32.gmra.mrb[0].mxu0 %v371
      %v439 = vpop.f32.mrb[0].mxu0
      %v440 = vadd.f32 0.0, %v439
      %v441 = vpop.f32.mrb[0].mxu0
      %442 = vdwg.mxu0
      %v443 = vadd.f32 %v366, %v440
      %v444 = vxor.u32 %v443, 2147483648
      %v445 = vmul.f32 %v444, 1.442695
      %v446 = vpow.pop %v445
      %v447 = vadd.f32 %v446, 1.0
      %v448 = vrcp.pop %v447
      %v449 = vmul.f32 1.0, %v448
      %v450 = vtanh.pop %v443
      %v451 = vmul.f32 %v449, %v361
      %453 = vrot.lane.b32.xlu0 %v450, 64
      %v454 = vpop.permute.xlu0 %453
      %v456 = vmul.f32 %v449, %v454
      %458 = vrot.lane.b32.xlu0 %v456, 32
      %v459 = vpop.permute.xlu0 %458
      %v461 = vadd.f32 %v451, %v459
      %v462 = vtanh.pop %v461
      %464 = vrot.lane.b32.xlu0 %v462, 64
      %v465 = vpop.permute.xlu0 %464
      %v467 = vmul.f32 %v449, %v465
      %v468 = vstv %s362
      %vm469 = vcmp.lt.s32.totalorder %v468, %v36
      %v470 = vsel %vm469, 1, 0
      %471 = vset.pattern.permute.xlu0 0
      %472 = vperm.xlu0 %471, %v470
      %v473 = vpop.permute.xlu0 %472
      %vm474 = vcmp.eq.s32.totalorder %v473, 1
      %v475 = vsel %vm474, %v467, %v360
      %v476 = vsel %vm474, %v461, %v361
      %v477 = vsel %vm474, %v467, 0.0
      %479 = vrot.lane.b32.xlu0 %v477, 32
      %v480 = vpop.permute.xlu0 %479
      %s482 = smul.u32 %s362, 8
      %s483 = scalar_lea.vmem [#allocation4], %s482
      %484 = vst.msk [vmem:[%s483] sm:$0xff] %vm370, %v480
    $region53: #{res_bilstm_forward.1} parent=1 // loop_footer
      %s359 = sadd.s32 1, %s355
    $region54: #{res_bilstm_forward.1} parent=1 // loop_footer_branch
      %354 = sbr.rel target = $region50
    $region55: #{res_bilstm_forward.1} parent=1 // loop_exit
      _
    %s485 = scalar_lea.vmem %s2, 32
    %v486 = vld [vmem:[%s485] sm:$0xff]
    %v487 = vld [vmem:[%s485 + $0x8] sm:$0xff]
    %v488 = vld [vmem:[%s485 + $0x10] sm:$0xff]
    %v489 = vld [vmem:[%s485 + $0x18] sm:$0xff]
    %s490 = scalar_lea.vmem %s5, 2
    %v491 = vld [vmem:[%s490] sm:$0x3]
    %v492 = vld [vmem:[%s3] sm:$0xff]
    %v493 = vld [vmem:[%s3 + $0x8] sm:$0xff]
    %v494 = vld [vmem:[%s3 + $0x10] sm:$0xff]
    %v495 = vld [vmem:[%s3 + $0x18] sm:$0xff]
    %v496 = vld [vmem:[%s3 + $0x20] sm:$0xff]
    %v497 = vld [vmem:[%s3 + $0x28] sm:$0xff]
    %v498 = vld [vmem:[%s3 + $0x30] sm:$0xff]
    %v499 = vld [vmem:[%s3 + $0x38] sm:$0xff]
    %s500 = scalar_lea.vmem %s3, 64
    %v501 = vld [vmem:[%s500] sm:$0xff]
    %v502 = vld [vmem:[%s500 + $0x8] sm:$0xff]
    %v503 = vld [vmem:[%s500 + $0x10] sm:$0xff]
    %v504 = vld [vmem:[%s500 + $0x18] sm:$0xff]
    %v505 = vld [vmem:[%s500 + $0x20] sm:$0xff]
    %v506 = vld [vmem:[%s500 + $0x28] sm:$0xff]
    %v507 = vld [vmem:[%s500 + $0x30] sm:$0xff]
    %v508 = vld [vmem:[%s500 + $0x38] sm:$0xff]
    %v509 = vld [vmem:[%s1] sm:$0xff]
    %v510 = vld [vmem:[%s1 + $0x8] sm:$0xff]
    %v511 = vld [vmem:[%s1 + $0x10] sm:$0xff]
    %v512 = vld [vmem:[%s1 + $0x18] sm:$0xff]
    %v513 = vld [vmem:[%s1 + $0x20] sm:$0xff]
    %v514 = vld [vmem:[%s1 + $0x28] sm:$0xff]
    %v515 = vld [vmem:[%s1 + $0x30] sm:$0xff]
    %v516 = vld [vmem:[%s1 + $0x38] sm:$0xff]
    %v517 = vld [vmem:[#allocation3] sm:$0xff]
    %v518 = vld [vmem:[#allocation3 + $0x8] sm:$0xff]
    %v519 = vld [vmem:[#allocation3 + $0x10] sm:$0xff]
    %v520 = vld [vmem:[#allocation3 + $0x18] sm:$0xff]
    %v521 = vld [vmem:[#allocation3 + $0x20] sm:$0xff]
    %v522 = vld [vmem:[#allocation3 + $0x28] sm:$0xff]
    %v523 = vld [vmem:[#allocation3 + $0x30] sm:$0xff]
    %v524 = vld [vmem:[#allocation3 + $0x38] sm:$0xff]
    %v525 = vld [vmem:[#allocation4] sm:$0xff]
    %v526 = vld [vmem:[#allocation4 + $0x8] sm:$0xff]
    %v527 = vld [vmem:[#allocation4 + $0x10] sm:$0xff]
    %v528 = vld [vmem:[#allocation4 + $0x18] sm:$0xff]
    %v529 = vld [vmem:[#allocation4 + $0x20] sm:$0xff]
    %v530 = vld [vmem:[#allocation4 + $0x28] sm:$0xff]
    %v531 = vld [vmem:[#allocation4 + $0x30] sm:$0xff]
    %v532 = vld [vmem:[#allocation4 + $0x38] sm:$0xff]
    %vm533 = vcmask 261120
    %v535 = vsel %vm533, %v517, 0
    %v538 = vsel %vm533, %v518, 0
    %v541 = vsel %vm533, %v519, 0
    %v544 = vsel %vm533, %v520, 0
    %v547 = vsel %vm533, %v521, 0
    %v550 = vsel %vm533, %v522, 0
    %v553 = vsel %vm533, %v523, 0
    %v556 = vsel %vm533, %v524, 0
    %558 = vmatprep.subr.mxu0 %v493
    %559 = vmatpush1.msra.mxu0 %v492
    %560 = vmatprep.subr.mxu0 %v495
    %561 = vmatpush1.msra.mxu0 %v494
    %562 = vmatprep.subr.mxu0 %v497
    %563 = vmatpush1.msra.mxu0 %v496
    %564 = vmatprep.subr.mxu0 %v499
    %565 = vmatpush1.msra.mxu0 %v498
    %566 = vmatprep.subr.mxu0 0.0
    %567 = vmatpush1.msra.mxu0 0.0
    %568 = vmatprep.subr.mxu0 0.0
    %569 = vmatpush1.msra.mxu0 0.0
    %570 = vmatprep.subr.mxu0 0.0
    %571 = vmatpush1.msra.mxu0 0.0
    %572 = vmatprep.subr.mxu0 0.0
    %573 = vmatpush1.msra.mxu0 0.0
    %574 = vmatprep.subr.mxu0 0.0
    %575 = vmatpush1.msra.mxu0 0.0
    %576 = vmatprep.subr.mxu0 0.0
    %577 = vmatpush1.msra.mxu0 0.0
    %578 = vmatprep.subr.mxu0 0.0
    %579 = vmatpush1.msra.mxu0 0.0
    %580 = vmatprep.subr.mxu0 0.0
    %581 = vmatpush1.msra.mxu0 0.0
    %582 = vmatprep.subr.mxu0 0.0
    %583 = vmatpush1.msra.mxu0 0.0
    %584 = vmatprep.subr.mxu0 0.0
    %585 = vmatpush1.msra.mxu0 0.0
    %586 = vmatprep.subr.mxu0 0.0
    %587 = vmatpush1.msra.mxu0 0.0
    %588 = vmatprep.subr.mxu0 0.0
    %589 = vmatpush1.msra.mxu0 0.0
    %590 = vmatprep.subr.mxu0 0.0
    %591 = vmatpush1.msra.mxu0 0.0
    %592 = vmatprep.subr.mxu0 0.0
    %593 = vmatpush1.msra.mxu0 0.0
    %594 = vmatprep.subr.mxu0 0.0
    %595 = vmatpush1.msra.mxu0 0.0
    %596 = vmatprep.subr.mxu0 0.0
    %597 = vmatpush1.msra.mxu0 0.0
    %598 = vmatprep.subr.mxu0 0.0
    %599 = vmatpush1.msra.mxu0 0.0
    %600 = vmatprep.subr.mxu0 0.0
    %601 = vmatpush1.msra.mxu0 0.0
    %602 = vmatprep.subr.mxu0 0.0
    %603 = vmatpush1.msra.mxu0 0.0
    %604 = vmatprep.subr.mxu0 0.0
    %605 = vmatpush1.msra.mxu0 0.0
    %606 = vmatprep.subr.mxu0 0.0
    %607 = vmatpush1.msra.mxu0 0.0
    %608 = vmatprep.subr.mxu0 0.0
    %609 = vmatpush1.msra.mxu0 0.0
    %610 = vmatprep.subr.mxu0 0.0
    %611 = vmatpush1.msra.mxu0 0.0
    %612 = vmatprep.subr.mxu0 0.0
    %613 = vmatpush1.msra.mxu0 0.0
    %614 = vmatprep.subr.mxu0 0.0
    %615 = vmatpush1.msra.mxu0 0.0
    %616 = vmatprep.subr.mxu0 0.0
    %617 = vmatpush1.msra.mxu0 0.0
    %618 = vmatprep.subr.mxu0 0.0
    %619 = vmatpush1.msra.mxu0 0.0
    %620 = vmatprep.subr.mxu0 0.0
    %621 = vmatpush1.msra.mxu0 0.0
    %622 = vmatprep.mubr.f32.mxu0 0.0
    %623 = vmatmul.mubr.f32.gmra.mrb[0].mxu0 %v535
    %v624 = vpop.f32.mrb[0].mxu0
    %v625 = vadd.f32 0.0, %v624
    %v626 = vpop.f32.mrb[0].mxu0
    %v627 = vadd.f32 0.0, %v626
    %628 = vmatprep.mubr.f32.mxu0 0.0
    %629 = vmatmul.mubr.f32.gmra.mrb[0].mxu0 %v538
    %v630 = vpop.f32.mrb[0].mxu0
    %v631 = vadd.f32 0.0, %v630
    %v632 = vpop.f32.mrb[0].mxu0
    %v633 = vadd.f32 0.0, %v632
    %634 = vmatprep.mubr.f32.mxu0 0.0
    %635 = vmatmul.mubr.f32.gmra.mrb[0].mxu0 %v541
    %v636 = vpop.f32.mrb[0].mxu0
    %v637 = vadd.f32 0.0, %v636
    %v638 = vpop.f32.mrb[0].mxu0
    %v639 = vadd.f32 0.0, %v638
    %640 = vmatprep.mubr.f32.mxu0 0.0
    %641 = vmatmul.mubr.f32.gmra.mrb[0].mxu0 %v544
    %v642 = vpop.f32.mrb[0].mxu0
    %v643 = vadd.f32 0.0, %v642
    %v644 = vpop.f32.mrb[0].mxu0
    %v645 = vadd.f32 0.0, %v644
    %646 = vmatprep.mubr.f32.mxu0 0.0
    %647 = vmatmul.mubr.f32.gmra.mrb[0].mxu0 %v547
    %v648 = vpop.f32.mrb[0].mxu0
    %v649 = vadd.f32 0.0, %v648
    %v650 = vpop.f32.mrb[0].mxu0
    %v651 = vadd.f32 0.0, %v650
    %652 = vmatprep.mubr.f32.mxu0 0.0
    %653 = vmatmul.mubr.f32.gmra.mrb[0].mxu0 %v550
    %v654 = vpop.f32.mrb[0].mxu0
    %v655 = vadd.f32 0.0, %v654
    %v656 = vpop.f32.mrb[0].mxu0
    %v657 = vadd.f32 0.0, %v656
    %658 = vmatprep.mubr.f32.mxu0 0.0
    %659 = vmatmul.mubr.f32.gmra.mrb[0].mxu0 %v553
    %v660 = vpop.f32.mrb[0].mxu0
    %v661 = vadd.f32 0.0, %v660
    %v662 = vpop.f32.mrb[0].mxu0
    %v663 = vadd.f32 0.0, %v662
    %664 = vmatprep.mubr.f32.mxu0 0.0
    %665 = vmatmul.mubr.f32.gmra.mrb[0].mxu0 %v556
    %v666 = vpop.f32.mrb[0].mxu0
    %v667 = vadd.f32 0.0, %v666
    %v668 = vpop.f32.mrb[0].mxu0
    %v669 = vadd.f32 0.0, %v668
    %670 = vdwg.mxu0
    %v672 = vsel %vm61, %v509, 0
    %v675 = vsel %vm61, %v510, 0
    %v678 = vsel %vm61, %v511, 0
    %v681 = vsel %vm61, %v512, 0
    %v684 = vsel %vm61, %v513, 0
    %v687 = vsel %vm61, %v514, 0
    %v690 = vsel %vm61, %v515, 0
    %v693 = vsel %vm61, %v516, 0
    %695 = vmatprep.subr.mxu0 %v487
    %696 = vmatpush1.msra.mxu0 %v486
    %697 = vmatprep.subr.mxu0 %v489
    %698 = vmatpush1.msra.mxu0 %v488
    %699 = vmatprep.subr.mxu0 0.0
    %700 = vmatpush1.msra.mxu0 0.0
    %701 = vmatprep.subr.mxu0 0.0
    %702 = vmatpush1.msra.mxu0 0.0
    %703 = vmatprep.subr.mxu0 0.0
    %704 = vmatpush1.msra.mxu0 0.0
    %705 = vmatprep.subr.mxu0 0.0
    %706 = vmatpush1.msra.mxu0 0.0
    %707 = vmatprep.subr.mxu0 0.0
    %708 = vmatpush1.msra.mxu0 0.0
    %709 = vmatprep.subr.mxu0 0.0
    %710 = vmatpush1.msra.mxu0 0.0
    %711 = vmatprep.subr.mxu0 0.0
    %712 = vmatpush1.msra.mxu0 0.0
    %713 = vmatprep.subr.mxu0 0.0
    %714 = vmatpush1.msra.mxu0 0.0
    %715 = vmatprep.subr.mxu0 0.0
    %716 = vmatpush1.msra.mxu0 0.0
    %717 = vmatprep.subr.mxu0 0.0
    %718 = vmatpush1.msra.mxu0 0.0
    %719 = vmatprep.subr.mxu0 0.0
    %720 = vmatpush1.msra.mxu0 0.0
    %721 = vmatprep.subr.mxu0 0.0
    %722 = vmatpush1.msra.mxu0 0.0
    %723 = vmatprep.subr.mxu0 0.0
    %724 = vmatpush1.msra.mxu0 0.0
    %725 = vmatprep.subr.mxu0 0.0
    %726 = vmatpush1.msra.mxu0 0.0
    %727 = vmatprep.subr.mxu0 0.0
    %728 = vmatpush1.msra.mxu0 0.0
    %729 = vmatprep.subr.mxu0 0.0
    %730 = vmatpush1.msra.mxu0 0.0
    %731 = vmatprep.subr.mxu0 0.0
    %732 = vmatpush1.msra.mxu0 0.0
    %733 = vmatprep.subr.mxu0 0.0
    %734 = vmatpush1.msra.mxu0 0.0
    %735 = vmatprep.subr.mxu0 0.0
    %736 = vmatpush1.msra.mxu0 0.0
    %737 = vmatprep.subr.mxu0 0.0
    %738 = vmatpush1.msra.mxu0 0.0
    %739 = vmatprep.subr.mxu0 0.0
    %740 = vmatpush1.msra.mxu0 0.0
    %741 = vmatprep.subr.mxu0 0.0
    %742 = vmatpush1.msra.mxu0 0.0
    %743 = vmatprep.subr.mxu0 0.0
    %744 = vmatpush1.msra.mxu0 0.0
    %745 = vmatprep.subr.mxu0 0.0
    %746 = vmatpush1.msra.mxu0 0.0
    %747 = vmatprep.subr.mxu0 0.0
    %748 = vmatpush1.msra.mxu0 0.0
    %749 = vmatprep.subr.mxu0 0.0
    %750 = vmatpush1.msra.mxu0 0.0
    %751 = vmatprep.subr.mxu0 0.0
    %752 = vmatpush1.msra.mxu0 0.0
    %753 = vmatprep.subr.mxu0 0.0
    %754 = vmatpush1.msra.mxu0 0.0
    %755 = vmatprep.subr.mxu0 0.0
    %756 = vmatpush1.msra.mxu0 0.0
    %757 = vmatprep.subr.mxu0 0.0
    %758 = vmatpush1.msra.mxu0 0.0
    %759 = vmatprep.mubr.f32.mxu0 0.0
    %760 = vmatmul.mubr.f32.gmra.mrb[0].mxu0 %v672
    %v761 = vpop.f32.mrb[0].mxu0
    %v762 = vadd.f32 %v625, %v761
    %v763 = vpop.f32.mrb[0].mxu0
    %v764 = vadd.f32 %v627, %v763
    %765 = vmatprep.mubr.f32.mxu0 0.0
    %766 = vmatmul.mubr.f32.gmra.mrb[0].mxu0 %v675
    %v767 = vpop.f32.mrb[0].mxu0
    %v768 = vadd.f32 %v631, %v767
    %v769 = vpop.f32.mrb[0].mxu0
    %v770 = vadd.f32 %v633, %v769
    %771 = vmatprep.mubr.f32.mxu0 0.0
    %772 = vmatmul.mubr.f32.gmra.mrb[0].mxu0 %v678
    %v773 = vpop.f32.mrb[0].mxu0
    %v774 = vadd.f32 %v637, %v773
    %v775 = vpop.f32.mrb[0].mxu0
    %v776 = vadd.f32 %v639, %v775
    %777 = vmatprep.mubr.f32.mxu0 0.0
    %778 = vmatmul.mubr.f32.gmra.mrb[0].mxu0 %v681
    %v779 = vpop.f32.mrb[0].mxu0
    %v780 = vadd.f32 %v643, %v779
    %v781 = vpop.f32.mrb[0].mxu0
    %v782 = vadd.f32 %v645, %v781
    %783 = vmatprep.mubr.f32.mxu0 0.0
    %784 = vmatmul.mubr.f32.gmra.mrb[0].mxu0 %v684
    %v785 = vpop.f32.mrb[0].mxu0
    %v786 = vadd.f32 %v649, %v785
    %v787 = vpop.f32.mrb[0].mxu0
    %v788 = vadd.f32 %v651, %v787
    %789 = vmatprep.mubr.f32.mxu0 0.0
    %790 = vmatmul.mubr.f32.gmra.mrb[0].mxu0 %v687
    %v791 = vpop.f32.mrb[0].mxu0
    %v792 = vadd.f32 %v655, %v791
    %v793 = vpop.f32.mrb[0].mxu0
    %v794 = vadd.f32 %v657, %v793
    %795 = vmatprep.mubr.f32.mxu0 0.0
    %796 = vmatmul.mubr.f32.gmra.mrb[0].mxu0 %v690
    %v797 = vpop.f32.mrb[0].mxu0
    %v798 = vadd.f32 %v661, %v797
    %v799 = vpop.f32.mrb[0].mxu0
    %v800 = vadd.f32 %v663, %v799
    %801 = vmatprep.mubr.f32.mxu0 0.0
    %802 = vmatmul.mubr.f32.gmra.mrb[0].mxu0 %v693
    %v803 = vpop.f32.mrb[0].mxu0
    %v804 = vadd.f32 %v667, %v803
    %v805 = vpop.f32.mrb[0].mxu0
    %v806 = vadd.f32 %v669, %v805
    %807 = vdwg.mxu0
    %v809 = vsel %vm533, %v525, 0
    %v812 = vsel %vm533, %v526, 0
    %v815 = vsel %vm533, %v527, 0
    %v818 = vsel %vm533, %v528, 0
    %v821 = vsel %vm533, %v529, 0
    %v824 = vsel %vm533, %v530, 0
    %v827 = vsel %vm533, %v531, 0
    %v830 = vsel %vm533, %v532, 0
    %832 = vmatprep.subr.mxu0 %v502
    %833 = vmatpush1.msra.mxu0 %v501
    %834 = vmatprep.subr.mxu0 %v504
    %835 = vmatpush1.msra.mxu0 %v503
    %836 = vmatprep.subr.mxu0 %v506
    %837 = vmatpush1.msra.mxu0 %v505
    %838 = vmatprep.subr.mxu0 %v508
    %839 = vmatpush1.msra.mxu0 %v507
    %840 = vmatprep.subr.mxu0 0.0
    %841 = vmatpush1.msra.mxu0 0.0
    %842 = vmatprep.subr.mxu0 0.0
    %843 = vmatpush1.msra.mxu0 0.0
    %844 = vmatprep.subr.mxu0 0.0
    %845 = vmatpush1.msra.mxu0 0.0
    %846 = vmatprep.subr.mxu0 0.0
    %847 = vmatpush1.msra.mxu0 0.0
    %848 = vmatprep.subr.mxu0 0.0
    %849 = vmatpush1.msra.mxu0 0.0
    %850 = vmatprep.subr.mxu0 0.0
    %851 = vmatpush1.msra.mxu0 0.0
    %852 = vmatprep.subr.mxu0 0.0
    %853 = vmatpush1.msra.mxu0 0.0
    %854 = vmatprep.subr.mxu0 0.0
    %855 = vmatpush1.msra.mxu0 0.0
    %856 = vmatprep.subr.mxu0 0.0
    %857 = vmatpush1.msra.mxu0 0.0
    %858 = vmatprep.subr.mxu0 0.0
    %859 = vmatpush1.msra.mxu0 0.0
    %860 = vmatprep.subr.mxu0 0.0
    %861 = vmatpush1.msra.mxu0 0.0
    %862 = vmatprep.subr.mxu0 0.0
    %863 = vmatpush1.msra.mxu0 0.0
    %864 = vmatprep.subr.mxu0 0.0
    %865 = vmatpush1.msra.mxu0 0.0
    %866 = vmatprep.subr.mxu0 0.0
    %867 = vmatpush1.msra.mxu0 0.0
    %868 = vmatprep.subr.mxu0 0.0
    %869 = vmatpush1.msra.mxu0 0.0
    %870 = vmatprep.subr.mxu0 0.0
    %871 = vmatpush1.msra.mxu0 0.0
    %872 = vmatprep.subr.mxu0 0.0
    %873 = vmatpush1.msra.mxu0 0.0
    %874 = vmatprep.subr.mxu0 0.0
    %875 = vmatpush1.msra.mxu0 0.0
    %876 = vmatprep.subr.mxu0 0.0
    %877 = vmatpush1.msra.mxu0 0.0
    %878 = vmatprep.subr.mxu0 0.0
    %879 = vmatpush1.msra.mxu0 0.0
    %880 = vmatprep.subr.mxu0 0.0
    %881 = vmatpush1.msra.mxu0 0.0
    %882 = vmatprep.subr.mxu0 0.0
    %883 = vmatpush1.msra.mxu0 0.0
    %884 = vmatprep.subr.mxu0 0.0
    %885 = vmatpush1.msra.mxu0 0.0
    %886 = vmatprep.subr.mxu0 0.0
    %887 = vmatpush1.msra.mxu0 0.0
    %888 = vmatprep.subr.mxu0 0.0
    %889 = vmatpush1.msra.mxu0 0.0
    %890 = vmatprep.subr.mxu0 0.0
    %891 = vmatpush1.msra.mxu0 0.0
    %892 = vmatprep.subr.mxu0 0.0
    %893 = vmatpush1.msra.mxu0 0.0
    %894 = vmatprep.subr.mxu0 0.0
    %895 = vmatpush1.msra.mxu0 0.0
    %896 = vmatprep.mubr.f32.mxu0 0.0
    %897 = vmatmul.mubr.f32.gmra.mrb[0].mxu0 %v809
    %v898 = vpop.f32.mrb[0].mxu0
    %v899 = vadd.f32 0.0, %v898
    %v900 = vpop.f32.mrb[0].mxu0
    %v901 = vadd.f32 0.0, %v900
    %902 = vmatprep.mubr.f32.mxu0 0.0
    %903 = vmatmul.mubr.f32.gmra.mrb[0].mxu0 %v812
    %v904 = vpop.f32.mrb[0].mxu0
    %v905 = vadd.f32 0.0, %v904
    %v906 = vpop.f32.mrb[0].mxu0
    %v907 = vadd.f32 0.0, %v906
    %908 = vmatprep.mubr.f32.mxu0 0.0
    %909 = vmatmul.mubr.f32.gmra.mrb[0].mxu0 %v815
    %v910 = vpop.f32.mrb[0].mxu0
    %v911 = vadd.f32 0.0, %v910
    %v912 = vpop.f32.mrb[0].mxu0
    %v913 = vadd.f32 0.0, %v912
    %914 = vmatprep.mubr.f32.mxu0 0.0
    %915 = vmatmul.mubr.f32.gmra.mrb[0].mxu0 %v818
    %v916 = vpop.f32.mrb[0].mxu0
    %v917 = vadd.f32 0.0, %v916
    %v918 = vpop.f32.mrb[0].mxu0
    %v919 = vadd.f32 0.0, %v918
    %920 = vmatprep.mubr.f32.mxu0 0.0
    %921 = vmatmul.mubr.f32.gmra.mrb[0].mxu0 %v821
    %v922 = vpop.f32.mrb[0].mxu0
    %v923 = vadd.f32 0.0, %v922
    %v924 = vpop.f32.mrb[0].mxu0
    %v925 = vadd.f32 0.0, %v924
    %926 = vmatprep.mubr.f32.mxu0 0.0
    %927 = vmatmul.mubr.f32.gmra.mrb[0].mxu0 %v824
    %v928 = vpop.f32.mrb[0].mxu0
    %v929 = vadd.f32 0.0, %v928
    %v930 = vpop.f32.mrb[0].mxu0
    %v931 = vadd.f32 0.0, %v930
    %932 = vmatprep.mubr.f32.mxu0 0.0
    %933 = vmatmul.mubr.f32.gmra.mrb[0].mxu0 %v827
    %v934 = vpop.f32.mrb[0].mxu0
    %v935 = vadd.f32 0.0, %v934
    %v936 = vpop.f32.mrb[0].mxu0
    %v937 = vadd.f32 0.0, %v936
    %938 = vmatprep.mubr.f32.mxu0 0.0
    %939 = vmatmul.mubr.f32.gmra.mrb[0].mxu0 %v830
    %v940 = vpop.f32.mrb[0].mxu0
    %v941 = vadd.f32 0.0, %v940
    %v942 = vpop.f32.mrb[0].mxu0
    %v943 = vadd.f32 0.0, %v942
    %944 = vdwg.mxu0
    %v945 = vadd.f32 %v762, %v899
    %v946 = vadd.f32 %v764, %v901
    %v947 = vadd.f32 %v768, %v905
    %v948 = vadd.f32 %v770, %v907
    %v949 = vadd.f32 %v774, %v911
    %v950 = vadd.f32 %v776, %v913
    %v951 = vadd.f32 %v780, %v917
    %v952 = vadd.f32 %v782, %v919
    %v953 = vadd.f32 %v786, %v923
    %v954 = vadd.f32 %v788, %v925
    %v955 = vadd.f32 %v792, %v929
    %v956 = vadd.f32 %v794, %v931
    %v957 = vadd.f32 %v798, %v935
    %v958 = vadd.f32 %v800, %v937
    %v959 = vadd.f32 %v804, %v941
    %v960 = vadd.f32 %v806, %v943
    %v962 = vlaneseq
    %v963 = vshrl.u32 %v962, 7
    %v964 = vsub.s32 0, %v963
    %v965 = vrot.slane %v491, %v964
    %v966 = vlaneseq
    %v967 = vshrl.u32 %v966, 7
    %v968 = vsub.s32 1, %v967
    %v969 = vrot.slane %v491, %v968
    %v972 = vadd.f32 %v945, %v965
    %v973 = vadd.f32 %v946, %v969
    %v974 = vadd.f32 %v947, %v965
    %v975 = vadd.f32 %v948, %v969
    %v976 = vadd.f32 %v949, %v965
    %v977 = vadd.f32 %v950, %v969
    %v978 = vadd.f32 %v951, %v965
    %v979 = vadd.f32 %v952, %v969
    %v980 = vadd.f32 %v953, %v965
    %v981 = vadd.f32 %v954, %v969
    %v982 = vadd.f32 %v955, %v965
    %v983 = vadd.f32 %v956, %v969
    %v984 = vadd.f32 %v957, %v965
    %v985 = vadd.f32 %v958, %v969
    %v986 = vadd.f32 %v959, %v965
    %v987 = vadd.f32 %v960, %v969
    %988 = vst [vmem:[#allocation2] sm:$0xff] %v972
    %989 = vst [vmem:[#allocation2 + $0x8] sm:$0xff] %v973
    %990 = vst [vmem:[#allocation2 + $0x10] sm:$0xff] %v974
    %991 = vst [vmem:[#allocation2 + $0x18] sm:$0xff] %v975
    %992 = vst [vmem:[#allocation2 + $0x20] sm:$0xff] %v976
    %993 = vst [vmem:[#allocation2 + $0x28] sm:$0xff] %v977
    %994 = vst [vmem:[#allocation2 + $0x30] sm:$0xff] %v978
    %995 = vst [vmem:[#allocation2 + $0x38] sm:$0xff] %v979
    %996 = vst [vmem:[#allocation2 + $0x40] sm:$0xff] %v980
    %997 = vst [vmem:[#allocation2 + $0x48] sm:$0xff] %v981
    %998 = vst [vmem:[#allocation2 + $0x50] sm:$0xff] %v982
    %999 = vst [vmem:[#allocation2 + $0x58] sm:$0xff] %v983
    %1000 = vst [vmem:[#allocation2 + $0x60] sm:$0xff] %v984
    %1001 = vst [vmem:[#allocation2 + $0x68] sm:$0xff] %v985
    %1002 = vst [vmem:[#allocation2 + $0x70] sm:$0xff] %v986
    %1003 = vst [vmem:[#allocation2 + $0x78] sm:$0xff] %v987
    %s1004 = scalar_lea.vmem %s4, 64
    %v1005 = vld [vmem:[%s1004] sm:$0xff]
    %v1006 = vld [vmem:[%s1004 + $0x8] sm:$0xff]
    %v1007 = vld [vmem:[%s1004 + $0x10] sm:$0xff]
    %v1008 = vld [vmem:[%s1004 + $0x18] sm:$0xff]
    loop: start=0, step=1, limit=8
    $region56: #{res_bilstm_forward.1} parent=1 // loop_pre_header
      _
    $region57: #{res_bilstm_forward.1} parent=1 // loop_header
      %s1010 = sphi 0, %s1014
      %p1011 = scmp.ge.s32.totalorder %s1010, 8
      %v1015 = vphi 0.0, %v1128
      %v1016 = vphi 0.0, %v1129
    $region58: #{res_bilstm_forward.1} parent=1 // loop_header_branch
      %1013 = sbr.rel (%p1011) target = $region62
    $region59: #{res_bilstm_forward.1} parent=1 // loop_body
      %s1017 = smul.u32 %s1010, 2
      %s1018 = smul.addr %s1017, 8
      %s1019 = scalar_lea.vmem [#allocation2], %s1018
      %v1020 = vld [vmem:[%s1019] sm:$0xff]
      %1022 = vrot.lane.b32.xlu0 %v1015, 32
      %v1023 = vpop.permute.xlu0 %1022
      %v1024 = vsel %vm533, %v1023, 0
      %1026 = vmatprep.subr.mxu0 0.0
      %1027 = vmatpush1.msra.mxu0 %v1005
      %1028 = vmatprep.subr.mxu0 0.0
      %1029 = vmatpush1.msra.mxu0 %v1006
      %1030 = vmatprep.subr.mxu0 0.0
      %1031 = vmatpush1.msra.mxu0 %v1007
      %1032 = vmatprep.subr.mxu0 0.0
      %1033 = vmatpush1.msra.mxu0 %v1008
      %1034 = vmatprep.subr.mxu0 0.0
      %1035 = vmatpush1.msra.mxu0 0.0
      %1036 = vmatprep.subr.mxu0 0.0
      %1037 = vmatpush1.msra.mxu0 0.0
      %1038 = vmatprep.subr.mxu0 0.0
      %1039 = vmatpush1.msra.mxu0 0.0
      %1040 = vmatprep.subr.mxu0 0.0
      %1041 = vmatpush1.msra.mxu0 0.0
      %1042 = vmatprep.subr.mxu0 0.0
      %1043 = vmatpush1.msra.mxu0 0.0
      %1044 = vmatprep.subr.mxu0 0.0
      %1045 = vmatpush1.msra.mxu0 0.0
      %1046 = vmatprep.subr.mxu0 0.0
      %1047 = vmatpush1.msra.mxu0 0.0
      %1048 = vmatprep.subr.mxu0 0.0
      %1049 = vmatpush1.msra.mxu0 0.0
      %1050 = vmatprep.subr.mxu0 0.0
      %1051 = vmatpush1.msra.mxu0 0.0
      %1052 = vmatprep.subr.mxu0 0.0
      %1053 = vmatpush1.msra.mxu0 0.0
      %1054 = vmatprep.subr.mxu0 0.0
      %1055 = vmatpush1.msra.mxu0 0.0
      %1056 = vmatprep.subr.mxu0 0.0
      %1057 = vmatpush1.msra.mxu0 0.0
      %1058 = vmatprep.subr.mxu0 0.0
      %1059 = vmatpush1.msra.mxu0 0.0
      %1060 = vmatprep.subr.mxu0 0.0
      %1061 = vmatpush1.msra.mxu0 0.0
      %1062 = vmatprep.subr.mxu0 0.0
      %1063 = vmatpush1.msra.mxu0 0.0
      %1064 = vmatprep.subr.mxu0 0.0
      %1065 = vmatpush1.msra.mxu0 0.0
      %1066 = vmatprep.subr.mxu0 0.0
      %1067 = vmatpush1.msra.mxu0 0.0
      %1068 = vmatprep.subr.mxu0 0.0
      %1069 = vmatpush1.msra.mxu0 0.0
      %1070 = vmatprep.subr.mxu0 0.0
      %1071 = vmatpush1.msra.mxu0 0.0
      %1072 = vmatprep.subr.mxu0 0.0
      %1073 = vmatpush1.msra.mxu0 0.0
      %1074 = vmatprep.subr.mxu0 0.0
      %1075 = vmatpush1.msra.mxu0 0.0
      %1076 = vmatprep.subr.mxu0 0.0
      %1077 = vmatpush1.msra.mxu0 0.0
      %1078 = vmatprep.subr.mxu0 0.0
      %1079 = vmatpush1.msra.mxu0 0.0
      %1080 = vmatprep.subr.mxu0 0.0
      %1081 = vmatpush1.msra.mxu0 0.0
      %1082 = vmatprep.subr.mxu0 0.0
      %1083 = vmatpush1.msra.mxu0 0.0
      %1084 = vmatprep.subr.mxu0 0.0
      %1085 = vmatpush1.msra.mxu0 0.0
      %1086 = vmatprep.subr.mxu0 0.0
      %1087 = vmatpush1.msra.mxu0 0.0
      %1088 = vmatprep.subr.mxu0 0.0
      %1089 = vmatpush1.msra.mxu0 0.0
      %1090 = vmatprep.mubr.f32.mxu0 0.0
      %1091 = vmatmul.mubr.f32.gmra.mrb[0].mxu0 %v1024
      %v1092 = vpop.f32.mrb[0].mxu0
      %v1093 = vadd.f32 0.0, %v1092
      %v1094 = vpop.f32.mrb[0].mxu0
      %1095 = vdwg.mxu0
      %v1096 = vadd.f32 %v1020, %v1093
      %v1097 = vxor.u32 %v1096, 2147483648
      %v1098 = vmul.f32 %v1097, 1.442695
      %v1099 = vpow.pop %v1098
      %v1100 = vadd.f32 %v1099, 1.0
      %v1101 = vrcp.pop %v1100
      %v1102 = vmul.f32 1.0, %v1101
      %v1103 = vtanh.pop %v1096
      %v1104 = vmul.f32 %v1102, %v1016
      %1106 = vrot.lane.b32.xlu0 %v1103, 64
      %v1107 = vpop.permute.xlu0 %1106
      %v1109 = vmul.f32 %v1102, %v1107
      %1111 = vrot.lane.b32.xlu0 %v1109, 32
      %v1112 = vpop.permute.xlu0 %1111
      %v1114 = vadd.f32 %v1104, %v1112
      %v1115 = vtanh.pop %v1114
      %1117 = vrot.lane.b32.xlu0 %v1115, 64
      %v1118 = vpop.permute.xlu0 %1117
      %v1120 = vmul.f32 %v1102, %v1118
      %v1121 = vstv %s1010
      %vm1122 = vcmp.lt.s32.totalorder %v1121, %v36
      %v1123 = vsel %vm1122, 1, 0
      %1124 = vset.pattern.permute.xlu0 0
      %1125 = vperm.xlu0 %1124, %v1123
      %v1126 = vpop.permute.xlu0 %1125
      %vm1127 = vcmp.eq.s32.totalorder %v1126, 1
      %v1128 = vsel %vm1127, %v1120, %v1015
      %v1129 = vsel %vm1127, %v1114, %v1016
      %v1130 = vsel %vm1127, %v1120, 0.0
      %1132 = vrot.lane.b32.xlu0 %v1130, 32
      %v1133 = vpop.permute.xlu0 %1132
      %s1135 = smul.u32 %s1010, 8
      %s1136 = scalar_lea.vmem [#allocation5], %s1135
      %1137 = vst.msk [vmem:[%s1136] sm:$0xff] %vm533, %v1133
    $region60: #{res_bilstm_forward.1} parent=1 // loop_footer
      %s1014 = sadd.s32 1, %s1010
    $region61: #{res_bilstm_forward.1} parent=1 // loop_footer_branch
      %1009 = sbr.rel target = $region57
    $region62: #{res_bilstm_forward.1} parent=1 // loop_exit
      _
    %s1138 = scalar_lea.vmem %s4, 96
    %v1139 = vld [vmem:[%s1138] sm:$0xff]
    %v1140 = vld [vmem:[%s1138 + $0x8] sm:$0xff]
    %v1141 = vld [vmem:[%s1138 + $0x10] sm:$0xff]
    %v1142 = vld [vmem:[%s1138 + $0x18] sm:$0xff]
    loop: start=0, step=1, limit=8
    $region63: #{res_bilstm_forward.1} parent=1 // loop_pre_header
      _
    $region64: #{res_bilstm_forward.1} parent=1 // loop_header
      %s1144 = sphi 0, %s1148
      %p1145 = scmp.ge.s32.totalorder %s1144, 8
      %v1149 = vphi 0.0, %v1263
      %v1150 = vphi 0.0, %v1264
    $region65: #{res_bilstm_forward.1} parent=1 // loop_header_branch
      %1147 = sbr.rel (%p1145) target = $region69
    $region66: #{res_bilstm_forward.1} parent=1 // loop_body
      %s1151 = ssub.s32 7, %s1144
      %s1152 = smul.u32 %s1151, 2
      %s1153 = smul.addr %s1152, 8
      %s1154 = scalar_lea.vmem [#allocation2], %s1153
      %v1155 = vld [vmem:[%s1154 + $0x8] sm:$0xff]
      %1157 = vrot.lane.b32.xlu0 %v1149, 32
      %v1158 = vpop.permute.xlu0 %1157
      %v1159 = vsel %vm533, %v1158, 0
      %1161 = vmatprep.subr.mxu0 0.0
      %1162 = vmatpush1.msra.mxu0 %v1139
      %1163 = vmatprep.subr.mxu0 0.0
      %1164 = vmatpush1.msra.mxu0 %v1140
      %1165 = vmatprep.subr.mxu0 0.0
      %1166 = vmatpush1.msra.mxu0 %v1141
      %1167 = vmatprep.subr.mxu0 0.0
      %1168 = vmatpush1.msra.mxu0 %v1142
      %1169 = vmatprep.subr.mxu0 0.0
      %1170 = vmatpush1.msra.mxu0 0.0
      %1171 = vmatprep.subr.mxu0 0.0
      %1172 = vmatpush1.msra.mxu0 0.0
      %1173 = vmatprep.subr.mxu0 0.0
      %1174 = vmatpush1.msra.mxu0 0.0
      %1175 = vmatprep.subr.mxu0 0.0
      %1176 = vmatpush1.msra.mxu0 0.0
      %1177 = vmatprep.subr.mxu0 0.0
      %1178 = vmatpush1.msra.mxu0 0.0
      %1179 = vmatprep.subr.mxu0 0.0
      %1180 = vmatpush1.msra.mxu0 0.0
      %1181 = vmatprep.subr.mxu0 0.0
      %1182 = vmatpush1.msra.mxu0 0.0
      %1183 = vmatprep.subr.mxu0 0.0
      %1184 = vmatpush1.msra.mxu0 0.0
      %1185 = vmatprep.subr.mxu0 0.0
      %1186 = vmatpush1.msra.mxu0 0.0
      %1187 = vmatprep.subr.mxu0 0.0
      %1188 = vmatpush1.msra.mxu0 0.0
      %1189 = vmatprep.subr.mxu0 0.0
      %1190 = vmatpush1.msra.mxu0 0.0
      %1191 = vmatprep.subr.mxu0 0.0
      %1192 = vmatpush1.msra.mxu0 0.0
      %1193 = vmatprep.subr.mxu0 0.0
      %1194 = vmatpush1.msra.mxu0 0.0
      %1195 = vmatprep.subr.mxu0 0.0
      %1196 = vmatpush1.msra.mxu0 0.0
      %1197 = vmatprep.subr.mxu0 0.0
      %1198 = vmatpush1.msra.mxu0 0.0
      %1199 = vmatprep.subr.mxu0 0.0
      %1200 = vmatpush1.msra.mxu0 0.0
      %1201 = vmatprep.subr.mxu0 0.0
      %1202 = vmatpush1.msra.mxu0 0.0
      %1203 = vmatprep.subr.mxu0 0.0
      %1204 = vmatpush1.msra.mxu0 0.0
      %1205 = vmatprep.subr.mxu0 0.0
      %1206 = vmatpush1.msra.mxu0 0.0
      %1207 = vmatprep.subr.mxu0 0.0
      %1208 = vmatpush1.msra.mxu0 0.0
      %1209 = vmatprep.subr.mxu0 0.0
      %1210 = vmatpush1.msra.mxu0 0.0
      %1211 = vmatprep.subr.mxu0 0.0
      %1212 = vmatpush1.msra.mxu0 0.0
      %1213 = vmatprep.subr.mxu0 0.0
      %1214 = vmatpush1.msra.mxu0 0.0
      %1215 = vmatprep.subr.mxu0 0.0
      %1216 = vmatpush1.msra.mxu0 0.0
      %1217 = vmatprep.subr.mxu0 0.0
      %1218 = vmatpush1.msra.mxu0 0.0
      %1219 = vmatprep.subr.mxu0 0.0
      %1220 = vmatpush1.msra.mxu0 0.0
      %1221 = vmatprep.subr.mxu0 0.0
      %1222 = vmatpush1.msra.mxu0 0.0
      %1223 = vmatprep.subr.mxu0 0.0
      %1224 = vmatpush1.msra.mxu0 0.0
      %1225 = vmatprep.mubr.f32.mxu0 0.0
      %1226 = vmatmul.mubr.f32.gmra.mrb[0].mxu0 %v1159
      %v1227 = vpop.f32.mrb[0].mxu0
      %v1228 = vadd.f32 0.0, %v1227
      %v1229 = vpop.f32.mrb[0].mxu0
      %1230 = vdwg.mxu0
      %v1231 = vadd.f32 %v1155, %v1228
      %v1232 = vxor.u32 %v1231, 2147483648
      %v1233 = vmul.f32 %v1232, 1.442695
      %v1234 = vpow.pop %v1233
      %v1235 = vadd.f32 %v1234, 1.0
      %v1236 = vrcp.pop %v1235
      %v1237 = vmul.f32 1.0, %v1236
      %v1238 = vtanh.pop %v1231
      %v1239 = vmul.f32 %v1237, %v1150
      %1241 = vrot.lane.b32.xlu0 %v1238, 64
      %v1242 = vpop.permute.xlu0 %1241
      %v1244 = vmul.f32 %v1237, %v1242
      %1246 = vrot.lane.b32.xlu0 %v1244, 32
      %v1247 = vpop.permute.xlu0 %1246
      %v1249 = vadd.f32 %v1239, %v1247
      %v1250 = vtanh.pop %v1249
      %1252 = vrot.lane.b32.xlu0 %v1250, 64
      %v1253 = vpop.permute.xlu0 %1252
      %v1255 = vmul.f32 %v1237, %v1253
      %v1256 = vstv %s1151
      %vm1257 = vcmp.lt.s32.totalorder %v1256, %v36
      %v1258 = vsel %vm1257, 1, 0
      %1259 = vset.pattern.permute.xlu0 0
      %1260 = vperm.xlu0 %1259, %v1258
      %v1261 = vpop.permute.xlu0 %1260
      %vm1262 = vcmp.eq.s32.totalorder %v1261, 1
      %v1263 = vsel %vm1262, %v1255, %v1149
      %v1264 = vsel %vm1262, %v1249, %v1150
      %v1265 = vsel %vm1262, %v1255, 0.0
      %1267 = vrot.lane.b32.xlu0 %v1265, 32
      %v1268 = vpop.permute.xlu0 %1267
      %s1270 = smul.u32 %s1151, 8
      %s1271 = scalar_lea.vmem [#allocation6], %s1270
      %1272 = vst.msk [vmem:[%s1271] sm:$0xff] %vm533, %v1268
    $region67: #{res_bilstm_forward.1} parent=1 // loop_footer
      %s1148 = sadd.s32 1, %s1144
    $region68: #{res_bilstm_forward.1} parent=1 // loop_footer_branch
      %1143 = sbr.rel target = $region64
    $region69: #{res_bilstm_forward.1} parent=1 // loop_exit
      _
    %s1273 = scalar_lea.vmem %s2, 64
    %v1274 = vld [vmem:[%s1273] sm:$0xff]
    %v1275 = vld [vmem:[%s1273 + $0x8] sm:$0xff]
    %v1276 = vld [vmem:[%s1273 + $0x10] sm:$0xff]
    %v1277 = vld [vmem:[%s1273 + $0x18] sm:$0xff]
    %s1278 = scalar_lea.vmem %s5, 4
    %v1279 = vld [vmem:[%s1278] sm:$0x3]
    %s1280 = scalar_lea.vmem %s3, 128
    %v1281 = vld [vmem:[%s1280] sm:$0xff]
    %v1282 = vld [vmem:[%s1280 + $0x8] sm:$0xff]
    %v1283 = vld [vmem:[%s1280 + $0x10] sm:$0xff]
    %v1284 = vld [vmem:[%s1280 + $0x18] sm:$0xff]
    %v1285 = vld [vmem:[%s1280 + $0x20] sm:$0xff]
    %v1286 = vld [vmem:[%s1280 + $0x28] sm:$0xff]
    %v1287 = vld [vmem:[%s1280 + $0x30] sm:$0xff]
    %v1288 = vld [vmem:[%s1280 + $0x38] sm:$0xff]
    %s1289 = scalar_lea.vmem %s3, 192
    %v1290 = vld [vmem:[%s1289] sm:$0xff]
    %v1291 = vld [vmem:[%s1289 + $0x8] sm:$0xff]
    %v1292 = vld [vmem:[%s1289 + $0x10] sm:$0xff]
    %v1293 = vld [vmem:[%s1289 + $0x18] sm:$0xff]
    %v1294 = vld [vmem:[%s1289 + $0x20] sm:$0xff]
    %v1295 = vld [vmem:[%s1289 + $0x28] sm:$0xff]
    %v1296 = vld [vmem:[%s1289 + $0x30] sm:$0xff]
    %v1297 = vld [vmem:[%s1289 + $0x38] sm:$0xff]
    %v1298 = vld [vmem:[%s1] sm:$0xff]
    %v1299 = vld [vmem:[%s1 + $0x8] sm:$0xff]
    %v1300 = vld [vmem:[%s1 + $0x10] sm:$0xff]
    %v1301 = vld [vmem:[%s1 + $0x18] sm:$0xff]
    %v1302 = vld [vmem:[%s1 + $0x20] sm:$0xff]
    %v1303 = vld [vmem:[%s1 + $0x28] sm:$0xff]
    %v1304 = vld [vmem:[%s1 + $0x30] sm:$0xff]
    %v1305 = vld [vmem:[%s1 + $0x38] sm:$0xff]
    %v1306 = vld [vmem:[#allocation3] sm:$0xff]
    %v1307 = vld [vmem:[#allocation3 + $0x8] sm:$0xff]
    %v1308 = vld [vmem:[#allocation3 + $0x10] sm:$0xff]
    %v1309 = vld [vmem:[#allocation3 + $0x18] sm:$0xff]
    %v1310 = vld [vmem:[#allocation3 + $0x20] sm:$0xff]
    %v1311 = vld [vmem:[#allocation3 + $0x28] sm:$0xff]
    %v1312 = vld [vmem:[#allocation3 + $0x30] sm:$0xff]
    %v1313 = vld [vmem:[#allocation3 + $0x38] sm:$0xff]
    %v1314 = vld [vmem:[#allocation5] sm:$0xff]
    %v1315 = vld [vmem:[#allocation5 + $0x8] sm:$0xff]
    %v1316 = vld [vmem:[#allocation5 + $0x10] sm:$0xff]
    %v1317 = vld [vmem:[#allocation5 + $0x18] sm:$0xff]
    %v1318 = vld [vmem:[#allocation5 + $0x20] sm:$0xff]
    %v1319 = vld [vmem:[#allocation5 + $0x28] sm:$0xff]
    %v1320 = vld [vmem:[#allocation5 + $0x30] sm:$0xff]
    %v1321 = vld [vmem:[#allocation5 + $0x38] sm:$0xff]
    %v1322 = vadd.f32 %v1306, %v1314
    %v1323 = vadd.f32 %v1307, %v1315
    %v1324 = vadd.f32 %v1308, %v1316
    %v1325 = vadd.f32 %v1309, %v1317
    %v1326 = vadd.f32 %v1310, %v1318
    %v1327 = vadd.f32 %v1311, %v1319
    %v1328 = vadd.f32 %v1312, %v1320
    %v1329 = vadd.f32 %v1313, %v1321
    %v1330 = vld [vmem:[#allocation4] sm:$0xff]
    %v1331 = vld [vmem:[#allocation4 + $0x8] sm:$0xff]
    %v1332 = vld [vmem:[#allocation4 + $0x10] sm:$0xff]
    %v1333 = vld [vmem:[#allocation4 + $0x18] sm:$0xff]
    %v1334 = vld [vmem:[#allocation4 + $0x20] sm:$0xff]
    %v1335 = vld [vmem:[#allocation4 + $0x28] sm:$0xff]
    %v1336 = vld [vmem:[#allocation4 + $0x30] sm:$0xff]
    %v1337 = vld [vmem:[#allocation4 + $0x38] sm:$0xff]
    %v1338 = vld [vmem:[#allocation6] sm:$0xff]
    %v1339 = vld [vmem:[#allocation6 + $0x8] sm:$0xff]
    %v1340 = vld [vmem:[#allocation6 + $0x10] sm:$0xff]
    %v1341 = vld [vmem:[#allocation6 + $0x18] sm:$0xff]
    %v1342 = vld [vmem:[#allocation6 + $0x20] sm:$0xff]
    %v1343 = vld [vmem:[#allocation6 + $0x28] sm:$0xff]
    %v1344 = vld [vmem:[#allocation6 + $0x30] sm:$0xff]
    %v1345 = vld [vmem:[#allocation6 + $0x38] sm:$0xff]
    %v1346 = vadd.f32 %v1330, %v1338
    %v1347 = vadd.f32 %v1331, %v1339
    %v1348 = vadd.f32 %v1332, %v1340
    %v1349 = vadd.f32 %v1333, %v1341
    %v1350 = vadd.f32 %v1334, %v1342
    %v1351 = vadd.f32 %v1335, %v1343
    %v1352 = vadd.f32 %v1336, %v1344
    %v1353 = vadd.f32 %v1337, %v1345
    %v1355 = vsel %vm533, %v1322, 0
    %v1358 = vsel %vm533, %v1323, 0
    %v1361 = vsel %vm533, %v1324, 0
    %v1364 = vsel %vm533, %v1325, 0
    %v1367 = vsel %vm533, %v1326, 0
    %v1370 = vsel %vm533, %v1327, 0
    %v1373 = vsel %vm533, %v1328, 0
    %v1376 = vsel %vm533, %v1329, 0
    %1378 = vmatprep.subr.mxu0 %v1282
    %1379 = vmatpush1.msra.mxu0 %v1281
    %1380 = vmatprep.subr.mxu0 %v1284
    %1381 = vmatpush1.msra.mxu0 %v1283
    %1382 = vmatprep.subr.mxu0 %v1286
    %1383 = vmatpush1.msra.mxu0 %v1285
    %1384 = vmatprep.subr.mxu0 %v1288
    %1385 = vmatpush1.msra.mxu0 %v1287
    %1386 = vmatprep.subr.mxu0 0.0
    %1387 = vmatpush1.msra.mxu0 0.0
    %1388 = vmatprep.subr.mxu0 0.0
    %1389 = vmatpush1.msra.mxu0 0.0
    %1390 = vmatprep.subr.mxu0 0.0
    %1391 = vmatpush1.msra.mxu0 0.0
    %1392 = vmatprep.subr.mxu0 0.0
    %1393 = vmatpush1.msra.mxu0 0.0
    %1394 = vmatprep.subr.mxu0 0.0
    %1395 = vmatpush1.msra.mxu0 0.0
    %1396 = vmatprep.subr.mxu0 0.0
    %1397 = vmatpush1.msra.mxu0 0.0
    %1398 = vmatprep.subr.mxu0 0.0
    %1399 = vmatpush1.msra.mxu0 0.0
    %1400 = vmatprep.subr.mxu0 0.0
    %1401 = vmatpush1.msra.mxu0 0.0
    %1402 = vmatprep.subr.mxu0 0.0
    %1403 = vmatpush1.msra.mxu0 0.0
    %1404 = vmatprep.subr.mxu0 0.0
    %1405 = vmatpush1.msra.mxu0 0.0
    %1406 = vmatprep.subr.mxu0 0.0
    %1407 = vmatpush1.msra.mxu0 0.0
    %1408 = vmatprep.subr.mxu0 0.0
    %1409 = vmatpush1.msra.mxu0 0.0
    %1410 = vmatprep.subr.mxu0 0.0
    %1411 = vmatpush1.msra.mxu0 0.0
    %1412 = vmatprep.subr.mxu0 0.0
    %1413 = vmatpush1.msra.mxu0 0.0
    %1414 = vmatprep.subr.mxu0 0.0
    %1415 = vmatpush1.msra.mxu0 0.0
    %1416 = vmatprep.subr.mxu0 0.0
    %1417 = vmatpush1.msra.mxu0 0.0
    %1418 = vmatprep.subr.mxu0 0.0
    %1419 = vmatpush1.msra.mxu0 0.0
    %1420 = vmatprep.subr.mxu0 0.0
    %1421 = vmatpush1.msra.mxu0 0.0
    %1422 = vmatprep.subr.mxu0 0.0
    %1423 = vmatpush1.msra.mxu0 0.0
    %1424 = vmatprep.subr.mxu0 0.0
    %1425 = vmatpush1.msra.mxu0 0.0
    %1426 = vmatprep.subr.mxu0 0.0
    %1427 = vmatpush1.msra.mxu0 0.0
    %1428 = vmatprep.subr.mxu0 0.0
    %1429 = vmatpush1.msra.mxu0 0.0
    %1430 = vmatprep.subr.mxu0 0.0
    %1431 = vmatpush1.msra.mxu0 0.0
    %1432 = vmatprep.subr.mxu0 0.0
    %1433 = vmatpush1.msra.mxu0 0.0
    %1434 = vmatprep.subr.mxu0 0.0
    %1435 = vmatpush1.msra.mxu0 0.0
    %1436 = vmatprep.subr.mxu0 0.0
    %1437 = vmatpush1.msra.mxu0 0.0
    %1438 = vmatprep.subr.mxu0 0.0
    %1439 = vmatpush1.msra.mxu0 0.0
    %1440 = vmatprep.subr.mxu0 0.0
    %1441 = vmatpush1.msra.mxu0 0.0
    %1442 = vmatprep.mubr.f32.mxu0 0.0
    %1443 = vmatmul.mubr.f32.gmra.mrb[0].mxu0 %v1355
    %v1444 = vpop.f32.mrb[0].mxu0
    %v1445 = vadd.f32 0.0, %v1444
    %v1446 = vpop.f32.mrb[0].mxu0
    %v1447 = vadd.f32 0.0, %v1446
    %1448 = vmatprep.mubr.f32.mxu0 0.0
    %1449 = vmatmul.mubr.f32.gmra.mrb[0].mxu0 %v1358
    %v1450 = vpop.f32.mrb[0].mxu0
    %v1451 = vadd.f32 0.0, %v1450
    %v1452 = vpop.f32.mrb[0].mxu0
    %v1453 = vadd.f32 0.0, %v1452
    %1454 = vmatprep.mubr.f32.mxu0 0.0
    %1455 = vmatmul.mubr.f32.gmra.mrb[0].mxu0 %v1361
    %v1456 = vpop.f32.mrb[0].mxu0
    %v1457 = vadd.f32 0.0, %v1456
    %v1458 = vpop.f32.mrb[0].mxu0
    %v1459 = vadd.f32 0.0, %v1458
    %1460 = vmatprep.mubr.f32.mxu0 0.0
    %1461 = vmatmul.mubr.f32.gmra.mrb[0].mxu0 %v1364
    %v1462 = vpop.f32.mrb[0].mxu0
    %v1463 = vadd.f32 0.0, %v1462
    %v1464 = vpop.f32.mrb[0].mxu0
    %v1465 = vadd.f32 0.0, %v1464
    %1466 = vmatprep.mubr.f32.mxu0 0.0
    %1467 = vmatmul.mubr.f32.gmra.mrb[0].mxu0 %v1367
    %v1468 = vpop.f32.mrb[0].mxu0
    %v1469 = vadd.f32 0.0, %v1468
    %v1470 = vpop.f32.mrb[0].mxu0
    %v1471 = vadd.f32 0.0, %v1470
    %1472 = vmatprep.mubr.f32.mxu0 0.0
    %1473 = vmatmul.mubr.f32.gmra.mrb[0].mxu0 %v1370
    %v1474 = vpop.f32.mrb[0].mxu0
    %v1475 = vadd.f32 0.0, %v1474
    %v1476 = vpop.f32.mrb[0].mxu0
    %v1477 = vadd.f32 0.0, %v1476
    %1478 = vmatprep.mubr.f32.mxu0 0.0
    %1479 = vmatmul.mubr.f32.gmra.mrb[0].mxu0 %v1373
    %v1480 = vpop.f32.mrb[0].mxu0
    %v1481 = vadd.f32 0.0, %v1480
    %v1482 = vpop.f32.mrb[0].mxu0
    %v1483 = vadd.f32 0.0, %v1482
    %1484 = vmatprep.mubr.f32.mxu0 0.0
    %1485 = vmatmul.mubr.f32.gmra.mrb[0].mxu0 %v1376
    %v1486 = vpop.f32.mrb[0].mxu0
    %v1487 = vadd.f32 0.0, %v1486
    %v1488 = vpop.f32.mrb[0].mxu0
    %v1489 = vadd.f32 0.0, %v1488
    %1490 = vdwg.mxu0
    %v1492 = vsel %vm61, %v1298, 0
    %v1495 = vsel %vm61, %v1299, 0
    %v1498 = vsel %vm61, %v1300, 0
    %v1501 = vsel %vm61, %v1301, 0
    %v1504 = vsel %vm61, %v1302, 0
    %v1507 = vsel %vm61, %v1303, 0
    %v1510 = vsel %vm61, %v1304, 0
    %v1513 = vsel %vm61, %v1305, 0
    %1515 = vmatprep.subr.mxu0 %v1275
    %1516 = vmatpush1.msra.mxu0 %v1274
    %1517 = vmatprep.subr.mxu0 %v1277
    %1518 = vmatpush1.msra.mxu0 %v1276
    %1519 = vmatprep.subr.mxu0 0.0
    %1520 = vmatpush1.msra.mxu0 0.0
    %1521 = vmatprep.subr.mxu0 0.0
    %1522 = vmatpush1.msra.mxu0 0.0
    %1523 = vmatprep.subr.mxu0 0.0
    %1524 = vmatpush1.msra.mxu0 0.0
    %1525 = vmatprep.subr.mxu0 0.0
    %1526 = vmatpush1.msra.mxu0 0.0
    %1527 = vmatprep.subr.mxu0 0.0
    %1528 = vmatpush1.msra.mxu0 0.0
    %1529 = vmatprep.subr.mxu0 0.0
    %1530 = vmatpush1.msra.mxu0 0.0
    %1531 = vmatprep.subr.mxu0 0.0
    %1532 = vmatpush1.msra.mxu0 0.0
    %1533 = vmatprep.subr.mxu0 0.0
    %1534 = vmatpush1.msra.mxu0 0.0
    %1535 = vmatprep.subr.mxu0 0.0
    %1536 = vmatpush1.msra.mxu0 0.0
    %1537 = vmatprep.subr.mxu0 0.0
    %1538 = vmatpush1.msra.mxu0 0.0
    %1539 = vmatprep.subr.mxu0 0.0
    %1540 = vmatpush1.msra.mxu0 0.0
    %1541 = vmatprep.subr.mxu0 0.0
    %1542 = vmatpush1.msra.mxu0 0.0
    %1543 = vmatprep.subr.mxu0 0.0
    %1544 = vmatpush1.msra.mxu0 0.0
    %1545 = vmatprep.subr.mxu0 0.0
    %1546 = vmatpush1.msra.mxu0 0.0
    %1547 = vmatprep.subr.mxu0 0.0
    %1548 = vmatpush1.msra.mxu0 0.0
    %1549 = vmatprep.subr.mxu0 0.0
    %1550 = vmatpush1.msra.mxu0 0.0
    %1551 = vmatprep.subr.mxu0 0.0
    %1552 = vmatpush1.msra.mxu0 0.0
    %1553 = vmatprep.subr.mxu0 0.0
    %1554 = vmatpush1.msra.mxu0 0.0
    %1555 = vmatprep.subr.mxu0 0.0
    %1556 = vmatpush1.msra.mxu0 0.0
    %1557 = vmatprep.subr.mxu0 0.0
    %1558 = vmatpush1.msra.mxu0 0.0
    %1559 = vmatprep.subr.mxu0 0.0
    %1560 = vmatpush1.msra.mxu0 0.0
    %1561 = vmatprep.subr.mxu0 0.0
    %1562 = vmatpush1.msra.mxu0 0.0
    %1563 = vmatprep.subr.mxu0 0.0
    %1564 = vmatpush1.msra.mxu0 0.0
    %1565 = vmatprep.subr.mxu0 0.0
    %1566 = vmatpush1.msra.mxu0 0.0
    %1567 = vmatprep.subr.mxu0 0.0
    %1568 = vmatpush1.msra.mxu0 0.0
    %1569 = vmatprep.subr.mxu0 0.0
    %1570 = vmatpush1.msra.mxu0 0.0
    %1571 = vmatprep.subr.mxu0 0.0
    %1572 = vmatpush1.msra.mxu0 0.0
    %1573 = vmatprep.subr.mxu0 0.0
    %1574 = vmatpush1.msra.mxu0 0.0
    %1575 = vmatprep.subr.mxu0 0.0
    %1576 = vmatpush1.msra.mxu0 0.0
    %1577 = vmatprep.subr.mxu0 0.0
    %1578 = vmatpush1.msra.mxu0 0.0
    %1579 = vmatprep.mubr.f32.mxu0 0.0
    %1580 = vmatmul.mubr.f32.gmra.mrb[0].mxu0 %v1492
    %v1581 = vpop.f32.mrb[0].mxu0
    %v1582 = vadd.f32 %v1445, %v1581
    %v1583 = vpop.f32.mrb[0].mxu0
    %v1584 = vadd.f32 %v1447, %v1583
    %1585 = vmatprep.mubr.f32.mxu0 0.0
    %1586 = vmatmul.mubr.f32.gmra.mrb[0].mxu0 %v1495
    %v1587 = vpop.f32.mrb[0].mxu0
    %v1588 = vadd.f32 %v1451, %v1587
    %v1589 = vpop.f32.mrb[0].mxu0
    %v1590 = vadd.f32 %v1453, %v1589
    %1591 = vmatprep.mubr.f32.mxu0 0.0
    %1592 = vmatmul.mubr.f32.gmra.mrb[0].mxu0 %v1498
    %v1593 = vpop.f32.mrb[0].mxu0
    %v1594 = vadd.f32 %v1457, %v1593
    %v1595 = vpop.f32.mrb[0].mxu0
    %v1596 = vadd.f32 %v1459, %v1595
    %1597 = vmatprep.mubr.f32.mxu0 0.0
    %1598 = vmatmul.mubr.f32.gmra.mrb[0].mxu0 %v1501
    %v1599 = vpop.f32.mrb[0].mxu0
    %v1600 = vadd.f32 %v1463, %v1599
    %v1601 = vpop.f32.mrb[0].mxu0
    %v1602 = vadd.f32 %v1465, %v1601
    %1603 = vmatprep.mubr.f32.mxu0 0.0
    %1604 = vmatmul.mubr.f32.gmra.mrb[0].mxu0 %v1504
    %v1605 = vpop.f32.mrb[0].mxu0
    %v1606 = vadd.f32 %v1469, %v1605
    %v1607 = vpop.f32.mrb[0].mxu0
    %v1608 = vadd.f32 %v1471, %v1607
    %1609 = vmatprep.mubr.f32.mxu0 0.0
    %1610 = vmatmul.mubr.f32.gmra.mrb[0].mxu0 %v1507
    %v1611 = vpop.f32.mrb[0].mxu0
    %v1612 = vadd.f32 %v1475, %v1611
    %v1613 = vpop.f32.mrb[0].mxu0
    %v1614 = vadd.f32 %v1477, %v1613
    %1615 = vmatprep.mubr.f32.mxu0 0.0
    %1616 = vmatmul.mubr.f32.gmra.mrb[0].mxu0 %v1510
    %v1617 = vpop.f32.mrb[0].mxu0
    %v1618 = vadd.f32 %v1481, %v1617
    %v1619 = vpop.f32.mrb[0].mxu0
    %v1620 = vadd.f32 %v1483, %v1619
    %1621 = vmatprep.mubr.f32.mxu0 0.0
    %1622 = vmatmul.mubr.f32.gmra.mrb[0].mxu0 %v1513
    %v1623 = vpop.f32.mrb[0].mxu0
    %v1624 = vadd.f32 %v1487, %v1623
    %v1625 = vpop.f32.mrb[0].mxu0
    %v1626 = vadd.f32 %v1489, %v1625
    %1627 = vdwg.mxu0
    %v1629 = vsel %vm533, %v1346, 0
    %v1632 = vsel %vm533, %v1347, 0
    %v1635 = vsel %vm533, %v1348, 0
    %v1638 = vsel %vm533, %v1349, 0
    %v1641 = vsel %vm533, %v1350, 0
    %v1644 = vsel %vm533, %v1351, 0
    %v1647 = vsel %vm533, %v1352, 0
    %v1650 = vsel %vm533, %v1353, 0
    %1652 = vmatprep.subr.mxu0 %v1291
    %1653 = vmatpush1.msra.mxu0 %v1290
    %1654 = vmatprep.subr.mxu0 %v1293
    %1655 = vmatpush1.msra.mxu0 %v1292
    %1656 = vmatprep.subr.mxu0 %v1295
    %1657 = vmatpush1.msra.mxu0 %v1294
    %1658 = vmatprep.subr.mxu0 %v1297
    %1659 = vmatpush1.msra.mxu0 %v1296
    %1660 = vmatprep.subr.mxu0 0.0
    %1661 = vmatpush1.msra.mxu0 0.0
    %1662 = vmatprep.subr.mxu0 0.0
    %1663 = vmatpush1.msra.mxu0 0.0
    %1664 = vmatprep.subr.mxu0 0.0
    %1665 = vmatpush1.msra.mxu0 0.0
    %1666 = vmatprep.subr.mxu0 0.0
    %1667 = vmatpush1.msra.mxu0 0.0
    %1668 = vmatprep.subr.mxu0 0.0
    %1669 = vmatpush1.msra.mxu0 0.0
    %1670 = vmatprep.subr.mxu0 0.0
    %1671 = vmatpush1.msra.mxu0 0.0
    %1672 = vmatprep.subr.mxu0 0.0
    %1673 = vmatpush1.msra.mxu0 0.0
    %1674 = vmatprep.subr.mxu0 0.0
    %1675 = vmatpush1.msra.mxu0 0.0
    %1676 = vmatprep.subr.mxu0 0.0
    %1677 = vmatpush1.msra.mxu0 0.0
    %1678 = vmatprep.subr.mxu0 0.0
    %1679 = vmatpush1.msra.mxu0 0.0
    %1680 = vmatprep.subr.mxu0 0.0
    %1681 = vmatpush1.msra.mxu0 0.0
    %1682 = vmatprep.subr.mxu0 0.0
    %1683 = vmatpush1.msra.mxu0 0.0
    %1684 = vmatprep.subr.mxu0 0.0
    %1685 = vmatpush1.msra.mxu0 0.0
    %1686 = vmatprep.subr.mxu0 0.0
    %1687 = vmatpush1.msra.mxu0 0.0
    %1688 = vmatprep.subr.mxu0 0.0
    %1689 = vmatpush1.msra.mxu0 0.0
    %1690 = vmatprep.subr.mxu0 0.0
    %1691 = vmatpush1.msra.mxu0 0.0
    %1692 = vmatprep.subr.mxu0 0.0
    %1693 = vmatpush1.msra.mxu0 0.0
    %1694 = vmatprep.subr.mxu0 0.0
    %1695 = vmatpush1.msra.mxu0 0.0
    %1696 = vmatprep.subr.mxu0 0.0
    %1697 = vmatpush1.msra.mxu0 0.0
    %1698 = vmatprep.subr.mxu0 0.0
    %1699 = vmatpush1.msra.mxu0 0.0
    %1700 = vmatprep.subr.mxu0 0.0
    %1701 = vmatpush1.msra.mxu0 0.0
    %1702 = vmatprep.subr.mxu0 0.0
    %1703 = vmatpush1.msra.mxu0 0.0
    %1704 = vmatprep.subr.mxu0 0.0
    %1705 = vmatpush1.msra.mxu0 0.0
    %1706 = vmatprep.subr.mxu0 0.0
    %1707 = vmatpush1.msra.mxu0 0.0
    %1708 = vmatprep.subr.mxu0 0.0
    %1709 = vmatpush1.msra.mxu0 0.0
    %1710 = vmatprep.subr.mxu0 0.0
    %1711 = vmatpush1.msra.mxu0 0.0
    %1712 = vmatprep.subr.mxu0 0.0
    %1713 = vmatpush1.msra.mxu0 0.0
    %1714 = vmatprep.subr.mxu0 0.0
    %1715 = vmatpush1.msra.mxu0 0.0
    %1716 = vmatprep.mubr.f32.mxu0 0.0
    %1717 = vmatmul.mubr.f32.gmra.mrb[0].mxu0 %v1629
    %v1718 = vpop.f32.mrb[0].mxu0
    %v1719 = vadd.f32 0.0, %v1718
    %v1720 = vpop.f32.mrb[0].mxu0
    %v1721 = vadd.f32 0.0, %v1720
    %1722 = vmatprep.mubr.f32.mxu0 0.0
    %1723 = vmatmul.mubr.f32.gmra.mrb[0].mxu0 %v1632
    %v1724 = vpop.f32.mrb[0].mxu0
    %v1725 = vadd.f32 0.0, %v1724
    %v1726 = vpop.f32.mrb[0].mxu0
    %v1727 = vadd.f32 0.0, %v1726
    %1728 = vmatprep.mubr.f32.mxu0 0.0
    %1729 = vmatmul.mubr.f32.gmra.mrb[0].mxu0 %v1635
    %v1730 = vpop.f32.mrb[0].mxu0
    %v1731 = vadd.f32 0.0, %v1730
    %v1732 = vpop.f32.mrb[0].mxu0
    %v1733 = vadd.f32 0.0, %v1732
    %1734 = vmatprep.mubr.f32.mxu0 0.0
    %1735 = vmatmul.mubr.f32.gmra.mrb[0].mxu0 %v1638
    %v1736 = vpop.f32.mrb[0].mxu0
    %v1737 = vadd.f32 0.0, %v1736
    %v1738 = vpop.f32.mrb[0].mxu0
    %v1739 = vadd.f32 0.0, %v1738
    %1740 = vmatprep.mubr.f32.mxu0 0.0
    %1741 = vmatmul.mubr.f32.gmra.mrb[0].mxu0 %v1641
    %v1742 = vpop.f32.mrb[0].mxu0
    %v1743 = vadd.f32 0.0, %v1742
    %v1744 = vpop.f32.mrb[0].mxu0
    %v1745 = vadd.f32 0.0, %v1744
    %1746 = vmatprep.mubr.f32.mxu0 0.0
    %1747 = vmatmul.mubr.f32.gmra.mrb[0].mxu0 %v1644
    %v1748 = vpop.f32.mrb[0].mxu0
    %v1749 = vadd.f32 0.0, %v1748
    %v1750 = vpop.f32.mrb[0].mxu0
    %v1751 = vadd.f32 0.0, %v1750
    %1752 = vmatprep.mubr.f32.mxu0 0.0
    %1753 = vmatmul.mubr.f32.gmra.mrb[0].mxu0 %v1647
    %v1754 = vpop.f32.mrb[0].mxu0
    %v1755 = vadd.f32 0.0, %v1754
    %v1756 = vpop.f32.mrb[0].mxu0
    %v1757 = vadd.f32 0.0, %v1756
    %1758 = vmatprep.mubr.f32.mxu0 0.0
    %1759 = vmatmul.mubr.f32.gmra.mrb[0].mxu0 %v1650
    %v1760 = vpop.f32.mrb[0].mxu0
    %v1761 = vadd.f32 0.0, %v1760
    %v1762 = vpop.f32.mrb[0].mxu0
    %v1763 = vadd.f32 0.0, %v1762
    %1764 = vdwg.mxu0
    %v1765 = vadd.f32 %v1582, %v1719
    %v1766 = vadd.f32 %v1584, %v1721
    %v1767 = vadd.f32 %v1588, %v1725
    %v1768 = vadd.f32 %v1590, %v1727
    %v1769 = vadd.f32 %v1594, %v1731
    %v1770 = vadd.f32 %v1596, %v1733
    %v1771 = vadd.f32 %v1600, %v1737
    %v1772 = vadd.f32 %v1602, %v1739
    %v1773 = vadd.f32 %v1606, %v1743
    %v1774 = vadd.f32 %v1608, %v1745
    %v1775 = vadd.f32 %v1612, %v1749
    %v1776 = vadd.f32 %v1614, %v1751
    %v1777 = vadd.f32 %v1618, %v1755
    %v1778 = vadd.f32 %v1620, %v1757
    %v1779 = vadd.f32 %v1624, %v1761
    %v1780 = vadd.f32 %v1626, %v1763
    %v1782 = vlaneseq
    %v1783 = vshrl.u32 %v1782, 7
    %v1784 = vsub.s32 0, %v1783
    %v1785 = vrot.slane %v1279, %v1784
    %v1786 = vlaneseq
    %v1787 = vshrl.u32 %v1786, 7
    %v1788 = vsub.s32 1, %v1787
    %v1789 = vrot.slane %v1279, %v1788
    %v1792 = vadd.f32 %v1765, %v1785
    %v1793 = vadd.f32 %v1766, %v1789
    %v1794 = vadd.f32 %v1767, %v1785
    %v1795 = vadd.f32 %v1768, %v1789
    %v1796 = vadd.f32 %v1769, %v1785
    %v1797 = vadd.f32 %v1770, %v1789
    %v1798 = vadd.f32 %v1771, %v1785
    %v1799 = vadd.f32 %v1772, %v1789
    %v1800 = vadd.f32 %v1773, %v1785
    %v1801 = vadd.f32 %v1774, %v1789
    %v1802 = vadd.f32 %v1775, %v1785
    %v1803 = vadd.f32 %v1776, %v1789
    %v1804 = vadd.f32 %v1777, %v1785
    %v1805 = vadd.f32 %v1778, %v1789
    %v1806 = vadd.f32 %v1779, %v1785
    %v1807 = vadd.f32 %v1780, %v1789
    %1808 = vst [vmem:[#allocation2] sm:$0xff] %v1792
    %1809 = vst [vmem:[#allocation2 + $0x8] sm:$0xff] %v1793
    %1810 = vst [vmem:[#allocation2 + $0x10] sm:$0xff] %v1794
    %1811 = vst [vmem:[#allocation2 + $0x18] sm:$0xff] %v1795
    %1812 = vst [vmem:[#allocation2 + $0x20] sm:$0xff] %v1796
    %1813 = vst [vmem:[#allocation2 + $0x28] sm:$0xff] %v1797
    %1814 = vst [vmem:[#allocation2 + $0x30] sm:$0xff] %v1798
    %1815 = vst [vmem:[#allocation2 + $0x38] sm:$0xff] %v1799
    %1816 = vst [vmem:[#allocation2 + $0x40] sm:$0xff] %v1800
    %1817 = vst [vmem:[#allocation2 + $0x48] sm:$0xff] %v1801
    %1818 = vst [vmem:[#allocation2 + $0x50] sm:$0xff] %v1802
    %1819 = vst [vmem:[#allocation2 + $0x58] sm:$0xff] %v1803
    %1820 = vst [vmem:[#allocation2 + $0x60] sm:$0xff] %v1804
    %1821 = vst [vmem:[#allocation2 + $0x68] sm:$0xff] %v1805
    %1822 = vst [vmem:[#allocation2 + $0x70] sm:$0xff] %v1806
    %1823 = vst [vmem:[#allocation2 + $0x78] sm:$0xff] %v1807
    %s1824 = scalar_lea.vmem %s4, 128
    %v1825 = vld [vmem:[%s1824] sm:$0xff]
    %v1826 = vld [vmem:[%s1824 + $0x8] sm:$0xff]
    %v1827 = vld [vmem:[%s1824 + $0x10] sm:$0xff]
    %v1828 = vld [vmem:[%s1824 + $0x18] sm:$0xff]
    loop: start=0, step=1, limit=8
    $region70: #{res_bilstm_forward.1} parent=1 // loop_pre_header
      _
    $region71: #{res_bilstm_forward.1} parent=1 // loop_header
      %s1830 = sphi 0, %s1834
      %p1831 = scmp.ge.s32.totalorder %s1830, 8
      %v1835 = vphi 0.0, %v1949
      %v1836 = vphi 0.0, %v1950
      %v1837 = vphi -inf, %v1952
    $region72: #{res_bilstm_forward.1} parent=1 // loop_header_branch
      %1833 = sbr.rel (%p1831) target = $region76
    $region73: #{res_bilstm_forward.1} parent=1 // loop_body
      %s1838 = smul.u32 %s1830, 2
      %s1839 = smul.addr %s1838, 8
      %s1840 = scalar_lea.vmem [#allocation2], %s1839
      %v1841 = vld [vmem:[%s1840] sm:$0xff]
      %1843 = vrot.lane.b32.xlu0 %v1835, 32
      %v1844 = vpop.permute.xlu0 %1843
      %v1845 = vsel %vm533, %v1844, 0
      %1847 = vmatprep.subr.mxu0 0.0
      %1848 = vmatpush1.msra.mxu0 %v1825
      %1849 = vmatprep.subr.mxu0 0.0
      %1850 = vmatpush1.msra.mxu0 %v1826
      %1851 = vmatprep.subr.mxu0 0.0
      %1852 = vmatpush1.msra.mxu0 %v1827
      %1853 = vmatprep.subr.mxu0 0.0
      %1854 = vmatpush1.msra.mxu0 %v1828
      %1855 = vmatprep.subr.mxu0 0.0
      %1856 = vmatpush1.msra.mxu0 0.0
      %1857 = vmatprep.subr.mxu0 0.0
      %1858 = vmatpush1.msra.mxu0 0.0
      %1859 = vmatprep.subr.mxu0 0.0
      %1860 = vmatpush1.msra.mxu0 0.0
      %1861 = vmatprep.subr.mxu0 0.0
      %1862 = vmatpush1.msra.mxu0 0.0
      %1863 = vmatprep.subr.mxu0 0.0
      %1864 = vmatpush1.msra.mxu0 0.0
      %1865 = vmatprep.subr.mxu0 0.0
      %1866 = vmatpush1.msra.mxu0 0.0
      %1867 = vmatprep.subr.mxu0 0.0
      %1868 = vmatpush1.msra.mxu0 0.0
      %1869 = vmatprep.subr.mxu0 0.0
      %1870 = vmatpush1.msra.mxu0 0.0
      %1871 = vmatprep.subr.mxu0 0.0
      %1872 = vmatpush1.msra.mxu0 0.0
      %1873 = vmatprep.subr.mxu0 0.0
      %1874 = vmatpush1.msra.mxu0 0.0
      %1875 = vmatprep.subr.mxu0 0.0
      %1876 = vmatpush1.msra.mxu0 0.0
      %1877 = vmatprep.subr.mxu0 0.0
      %1878 = vmatpush1.msra.mxu0 0.0
      %1879 = vmatprep.subr.mxu0 0.0
      %1880 = vmatpush1.msra.mxu0 0.0
      %1881 = vmatprep.subr.mxu0 0.0
      %1882 = vmatpush1.msra.mxu0 0.0
      %1883 = vmatprep.subr.mxu0 0.0
      %1884 = vmatpush1.msra.mxu0 0.0
      %1885 = vmatprep.subr.mxu0 0.0
      %1886 = vmatpush1.msra.mxu0 0.0
      %1887 = vmatprep.subr.mxu0 0.0
      %1888 = vmatpush1.msra.mxu0 0.0
      %1889 = vmatprep.subr.mxu0 0.0
      %1890 = vmatpush1.msra.mxu0 0.0
      %1891 = vmatprep.subr.mxu0 0.0
      %1892 = vmatpush1.msra.mxu0 0.0
      %1893 = vmatprep.subr.mxu0 0.0
      %1894 = vmatpush1.msra.mxu0 0.0
      %1895 = vmatprep.subr.mxu0 0.0
      %1896 = vmatpush1.msra.mxu0 0.0
      %1897 = vmatprep.subr.mxu0 0.0
      %1898 = vmatpush1.msra.mxu0 0.0
      %1899 = vmatprep.subr.mxu0 0.0
      %1900 = vmatpush1.msra.mxu0 0.0
      %1901 = vmatprep.subr.mxu0 0.0
      %1902 = vmatpush1.msra.mxu0 0.0
      %1903 = vmatprep.subr.mxu0 0.0
      %1904 = vmatpush1.msra.mxu0 0.0
      %1905 = vmatprep.subr.mxu0 0.0
      %1906 = vmatpush1.msra.mxu0 0.0
      %1907 = vmatprep.subr.mxu0 0.0
      %1908 = vmatpush1.msra.mxu0 0.0
      %1909 = vmatprep.subr.mxu0 0.0
      %1910 = vmatpush1.msra.mxu0 0.0
      %1911 = vmatprep.mubr.f32.mxu0 0.0
      %1912 = vmatmul.mubr.f32.gmra.mrb[0].mxu0 %v1845
      %v1913 = vpop.f32.mrb[0].mxu0
      %v1914 = vadd.f32 0.0, %v1913
      %v1915 = vpop.f32.mrb[0].mxu0
      %1916 = vdwg.mxu0
      %v1917 = vadd.f32 %v1841, %v1914
      %v1918 = vxor.u32 %v1917, 2147483648
      %v1919 = vmul.f32 %v1918, 1.442695
      %v1920 = vpow.pop %v1919
      %v1921 = vadd.f32 %v1920, 1.0
      %v1922 = vrcp.pop %v1921
      %v1923 = vmul.f32 1.0, %v1922
      %v1924 = vtanh.pop %v1917
      %v1925 = vmul.f32 %v1923, %v1836
      %1927 = vrot.lane.b32.xlu0 %v1924, 64
      %v1928 = vpop.permute.xlu0 %1927
      %v1930 = vmul.f32 %v1923, %v1928
      %1932 = vrot.lane.b32.xlu0 %v1930, 32
      %v1933 = vpop.permute.xlu0 %1932
      %v1935 = vadd.f32 %v1925, %v1933
      %v1936 = vtanh.pop %v1935
      %1938 = vrot.lane.b32.xlu0 %v1936, 64
      %v1939 = vpop.permute.xlu0 %1938
      %v1941 = vmul.f32 %v1923, %v1939
      %v1942 = vstv %s1830
      %vm1943 = vcmp.lt.s32.totalorder %v1942, %v36
      %v1944 = vsel %vm1943, 1, 0
      %1945 = vset.pattern.permute.xlu0 0
      %1946 = vperm.xlu0 %1945, %v1944
      %v1947 = vpop.permute.xlu0 %1946
      %vm1948 = vcmp.eq.s32.totalorder %v1947, 1
      %v1949 = vsel %vm1948, %v1941, %v1835
      %v1950 = vsel %vm1948, %v1935, %v1836
      %v1951 = vsel %vm1948, %v1941, -inf
      %v1952 = vmax.f32 %v1837, %v1951
    $region74: #{res_bilstm_forward.1} parent=1 // loop_footer
      %s1834 = sadd.s32 1, %s1830
    $region75: #{res_bilstm_forward.1} parent=1 // loop_footer_branch
      %1829 = sbr.rel target = $region71
    $region76: #{res_bilstm_forward.1} parent=1 // loop_exit
      _
    %s1953 = scalar_lea.vmem %s4, 160
    %v1954 = vld [vmem:[%s1953] sm:$0xff]
    %v1955 = vld [vmem:[%s1953 + $0x8] sm:$0xff]
    %v1956 = vld [vmem:[%s1953 + $0x10] sm:$0xff]
    %v1957 = vld [vmem:[%s1953 + $0x18] sm:$0xff]
    loop: start=0, step=1, limit=8
    $region77: #{res_bilstm_forward.1} parent=1 // loop_pre_header
      _
    $region78: #{res_bilstm_forward.1} parent=1 // loop_header
      %s1959 = sphi 0, %s1963
      %p1960 = scmp.ge.s32.totalorder %s1959, 8
      %v1964 = vphi 0.0, %v2079
      %v1965 = vphi 0.0, %v2080
      %v1966 = vphi -inf, %v2082
    $region79: #{res_bilstm_forward.1} parent=1 // loop_header_branch
      %1962 = sbr.rel (%p1960) target = $region83
    $region80: #{res_bilstm_forward.1} parent=1 // loop_body
      %s1967 = ssub.s32 7, %s1959
      %s1968 = smul.u32 %s1967, 2
      %s1969 = smul.addr %s1968, 8
      %s1970 = scalar_lea.vmem [#allocation2], %s1969
      %v1971 = vld [vmem:[%s1970 + $0x8] sm:$0xff]
      %1973 = vrot.lane.b32.xlu0 %v1964, 32
      %v1974 = vpop.permute.xlu0 %1973
      %v1975 = vsel %vm533, %v1974, 0
      %1977 = vmatprep.subr.mxu0 0.0
      %1978 = vmatpush1.msra.mxu0 %v1954
      %1979 = vmatprep.subr.mxu0 0.0
      %1980 = vmatpush1.msra.mxu0 %v1955
      %1981 = vmatprep.subr.mxu0 0.0
      %1982 = vmatpush1.msra.mxu0 %v1956
      %1983 = vmatprep.subr.mxu0 0.0
      %1984 = vmatpush1.msra.mxu0 %v1957
      %1985 = vmatprep.subr.mxu0 0.0
      %1986 = vmatpush1.msra.mxu0 0.0
      %1987 = vmatprep.subr.mxu0 0.0
      %1988 = vmatpush1.msra.mxu0 0.0
      %1989 = vmatprep.subr.mxu0 0.0
      %1990 = vmatpush1.msra.mxu0 0.0
      %1991 = vmatprep.subr.mxu0 0.0
      %1992 = vmatpush1.msra.mxu0 0.0
      %1993 = vmatprep.subr.mxu0 0.0
      %1994 = vmatpush1.msra.mxu0 0.0
      %1995 = vmatprep.subr.mxu0 0.0
      %1996 = vmatpush1.msra.mxu0 0.0
      %1997 = vmatprep.subr.mxu0 0.0
      %1998 = vmatpush1.msra.mxu0 0.0
      %1999 = vmatprep.subr.mxu0 0.0
      %2000 = vmatpush1.msra.mxu0 0.0
      %2001 = vmatprep.subr.mxu0 0.0
      %2002 = vmatpush1.msra.mxu0 0.0
      %2003 = vmatprep.subr.mxu0 0.0
      %2004 = vmatpush1.msra.mxu0 0.0
      %2005 = vmatprep.subr.mxu0 0.0
      %2006 = vmatpush1.msra.mxu0 0.0
      %2007 = vmatprep.subr.mxu0 0.0
      %2008 = vmatpush1.msra.mxu0 0.0
      %2009 = vmatprep.subr.mxu0 0.0
      %2010 = vmatpush1.msra.mxu0 0.0
      %2011 = vmatprep.subr.mxu0 0.0
      %2012 = vmatpush1.msra.mxu0 0.0
      %2013 = vmatprep.subr.mxu0 0.0
      %2014 = vmatpush1.msra.mxu0 0.0
      %2015 = vmatprep.subr.mxu0 0.0
      %2016 = vmatpush1.msra.mxu0 0.0
      %2017 = vmatprep.subr.mxu0 0.0
      %2018 = vmatpush1.msra.mxu0 0.0
      %2019 = vmatprep.subr.mxu0 0.0
      %2020 = vmatpush1.msra.mxu0 0.0
      %2021 = vmatprep.subr.mxu0 0.0
      %2022 = vmatpush1.msra.mxu0 0.0
      %2023 = vmatprep.subr.mxu0 0.0
      %2024 = vmatpush1.msra.mxu0 0.0
      %2025 = vmatprep.subr.mxu0 0.0
      %2026 = vmatpush1.msra.mxu0 0.0
      %2027 = vmatprep.subr.mxu0 0.0
      %2028 = vmatpush1.msra.mxu0 0.0
      %2029 = vmatprep.subr.mxu0 0.0
      %2030 = vmatpush1.msra.mxu0 0.0
      %2031 = vmatprep.subr.mxu0 0.0
      %2032 = vmatpush1.msra.mxu0 0.0
      %2033 = vmatprep.subr.mxu0 0.0
      %2034 = vmatpush1.msra.mxu0 0.0
      %2035 = vmatprep.subr.mxu0 0.0
      %2036 = vmatpush1.msra.mxu0 0.0
      %2037 = vmatprep.subr.mxu0 0.0
      %2038 = vmatpush1.msra.mxu0 0.0
      %2039 = vmatprep.subr.mxu0 0.0
      %2040 = vmatpush1.msra.mxu0 0.0
      %2041 = vmatprep.mubr.f32.mxu0 0.0
      %2042 = vmatmul.mubr.f32.gmra.mrb[0].mxu0 %v1975
      %v2043 = vpop.f32.mrb[0].mxu0
      %v2044 = vadd.f32 0.0, %v2043
      %v2045 = vpop.f32.mrb[0].mxu0
      %2046 = vdwg.mxu0
      %v2047 = vadd.f32 %v1971, %v2044
      %v2048 = vxor.u32 %v2047, 2147483648
      %v2049 = vmul.f32 %v2048, 1.442695
      %v2050 = vpow.pop %v2049
      %v2051 = vadd.f32 %v2050, 1.0
      %v2052 = vrcp.pop %v2051
      %v2053 = vmul.f32 1.0, %v2052
      %v2054 = vtanh.pop %v2047
      %v2055 = vmul.f32 %v2053, %v1965
      %2057 = vrot.lane.b32.xlu0 %v2054, 64
      %v2058 = vpop.permute.xlu0 %2057
      %v2060 = vmul.f32 %v2053, %v2058
      %2062 = vrot.lane.b32.xlu0 %v2060, 32
      %v2063 = vpop.permute.xlu0 %2062
      %v2065 = vadd.f32 %v2055, %v2063
      %v2066 = vtanh.pop %v2065
      %2068 = vrot.lane.b32.xlu0 %v2066, 64
      %v2069 = vpop.permute.xlu0 %2068
      %v2071 = vmul.f32 %v2053, %v2069
      %v2072 = vstv %s1967
      %vm2073 = vcmp.lt.s32.totalorder %v2072, %v36
      %v2074 = vsel %vm2073, 1, 0
      %2075 = vset.pattern.permute.xlu0 0
      %2076 = vperm.xlu0 %2075, %v2074
      %v2077 = vpop.permute.xlu0 %2076
      %vm2078 = vcmp.eq.s32.totalorder %v2077, 1
      %v2079 = vsel %vm2078, %v2071, %v1964
      %v2080 = vsel %vm2078, %v2065, %v1965
      %v2081 = vsel %vm2078, %v2071, -inf
      %v2082 = vmax.f32 %v1966, %v2081
    $region81: #{res_bilstm_forward.1} parent=1 // loop_footer
      %s1963 = sadd.s32 1, %s1959
    $region82: #{res_bilstm_forward.1} parent=1 // loop_footer_branch
      %1958 = sbr.rel target = $region78
    $region83: #{res_bilstm_forward.1} parent=1 // loop_exit
      _
    %2084 = vrot.lane.b32.xlu0 %v1837, 32
    %v2085 = vpop.permute.xlu0 %2084
    %2088 = vrot.lane.b32.xlu0 %v1966, 64
    %v2089 = vpop.permute.xlu0 %2088
    %v2091 = vsel %vm533, %v2085, %v2089
    %v2092 = vld [vmem:[%s6] sm:$0xff]
    %v2093 = vld [vmem:[%s6 + $0x8] sm:$0xff]
    %v2094 = vld [vmem:[%s6 + $0x10] sm:$0xff]
    %v2095 = vld [vmem:[%s6 + $0x18] sm:$0xff]
    %v2096 = vld [vmem:[%s6 + $0x20] sm:$0xff]
    %v2097 = vld [vmem:[%s6 + $0x28] sm:$0xff]
    %v2098 = vld [vmem:[%s6 + $0x30] sm:$0xff]
    %v2099 = vld [vmem:[%s6 + $0x38] sm:$0xff]
    %v2100 = vld [vmem:[%s6 + $0x40] sm:$0xff]
    %v2101 = vld [vmem:[%s6 + $0x48] sm:$0xff]
    %v2102 = vld [vmem:[%s6 + $0x50] sm:$0xff]
    %v2103 = vld [vmem:[%s6 + $0x58] sm:$0xff]
    %v2104 = vld [vmem:[%s6 + $0x60] sm:$0xff]
    %v2105 = vld [vmem:[%s6 + $0x68] sm:$0xff]
    %v2106 = vld [vmem:[%s6 + $0x70] sm:$0xff]
    %v2107 = vld [vmem:[%s6 + $0x78] sm:$0xff]
    %v2109 = vrot.slane %v2091, 2
    %vm2110 = vcmask 523264
    %v2111 = vsel %vm2110, %v2109, 0
    %2113 = vmatprep.subr.mxu0 0.0
    %2114 = vmatpush1.msra.mxu0 %v2100
    %2115 = vmatprep.subr.mxu0 0.0
    %2116 = vmatpush1.msra.mxu0 %v2101
    %2117 = vmatprep.subr.mxu0 0.0
    %2118 = vmatpush1.msra.mxu0 %v2102
    %2119 = vmatprep.subr.mxu0 0.0
    %2120 = vmatpush1.msra.mxu0 %v2103
    %2121 = vmatprep.subr.mxu0 0.0
    %2122 = vmatpush1.msra.mxu0 %v2104
    %2123 = vmatprep.subr.mxu0 0.0
    %2124 = vmatpush1.msra.mxu0 %v2105
    %2125 = vmatprep.subr.mxu0 0.0
    %2126 = vmatpush1.msra.mxu0 %v2106
    %2127 = vmatprep.subr.mxu0 0.0
    %2128 = vmatpush1.msra.mxu0 %v2107
    %2129 = vmatprep.subr.mxu0 0.0
    %2130 = vmatpush1.msra.mxu0 0.0
    %2131 = vmatprep.subr.mxu0 0.0
    %2132 = vmatpush1.msra.mxu0 0.0
    %2133 = vmatprep.subr.mxu0 0.0
    %2134 = vmatpush1.msra.mxu0 0.0
    %2135 = vmatprep.subr.mxu0 0.0
    %2136 = vmatpush1.msra.mxu0 0.0
    %2137 = vmatprep.subr.mxu0 0.0
    %2138 = vmatpush1.msra.mxu0 0.0
    %2139 = vmatprep.subr.mxu0 0.0
    %2140 = vmatpush1.msra.mxu0 0.0
    %2141 = vmatprep.subr.mxu0 0.0
    %2142 = vmatpush1.msra.mxu0 0.0
    %2143 = vmatprep.subr.mxu0 0.0
    %2144 = vmatpush1.msra.mxu0 0.0
    %2145 = vmatprep.subr.mxu0 0.0
    %2146 = vmatpush1.msra.mxu0 0.0
    %2147 = vmatprep.subr.mxu0 0.0
    %2148 = vmatpush1.msra.mxu0 0.0
    %2149 = vmatprep.subr.mxu0 0.0
    %2150 = vmatpush1.msra.mxu0 0.0
    %2151 = vmatprep.subr.mxu0 0.0
    %2152 = vmatpush1.msra.mxu0 0.0
    %2153 = vmatprep.subr.mxu0 0.0
    %2154 = vmatpush1.msra.mxu0 0.0
    %2155 = vmatprep.subr.mxu0 0.0
    %2156 = vmatpush1.msra.mxu0 0.0
    %2157 = vmatprep.subr.mxu0 0.0
    %2158 = vmatpush1.msra.mxu0 0.0
    %2159 = vmatprep.subr.mxu0 0.0
    %2160 = vmatpush1.msra.mxu0 0.0
    %2161 = vmatprep.subr.mxu0 0.0
    %2162 = vmatpush1.msra.mxu0 0.0
    %2163 = vmatprep.subr.mxu0 0.0
    %2164 = vmatpush1.msra.mxu0 0.0
    %2165 = vmatprep.subr.mxu0 0.0
    %2166 = vmatpush1.msra.mxu0 0.0
    %2167 = vmatprep.subr.mxu0 0.0
    %2168 = vmatpush1.msra.mxu0 0.0
    %2169 = vmatprep.subr.mxu0 0.0
    %2170 = vmatpush1.msra.mxu0 0.0
    %2171 = vmatprep.subr.mxu0 0.0
    %2172 = vmatpush1.msra.mxu0 0.0
    %2173 = vmatprep.subr.mxu0 0.0
    %2174 = vmatpush1.msra.mxu0 0.0
    %2175 = vmatprep.subr.mxu0 0.0
    %2176 = vmatpush1.msra.mxu0 0.0
    %2177 = vmatprep.mubr.f32.mxu0 0.0
    %2178 = vmatmul.mubr.f32.gmra.mrb[0].mxu0 %v2111
    %v2179 = vpop.f32.mrb[0].mxu0
    %v2180 = vadd.f32 0.0, %v2179
    %v2181 = vpop.f32.mrb[0].mxu0
    %2182 = vdwg.mxu0
    %v2183 = vsel %vm2110, %v2091, 0
    %2185 = vmatprep.subr.mxu0 0.0
    %2186 = vmatpush1.msra.mxu0 %v2092
    %2187 = vmatprep.subr.mxu0 0.0
    %2188 = vmatpush1.msra.mxu0 %v2093
    %2189 = vmatprep.subr.mxu0 0.0
    %2190 = vmatpush1.msra.mxu0 %v2094
    %2191 = vmatprep.subr.mxu0 0.0
    %2192 = vmatpush1.msra.mxu0 %v2095
    %2193 = vmatprep.subr.mxu0 0.0
    %2194 = vmatpush1.msra.mxu0 %v2096
    %2195 = vmatprep.subr.mxu0 0.0
    %2196 = vmatpush1.msra.mxu0 %v2097
    %2197 = vmatprep.subr.mxu0 0.0
    %2198 = vmatpush1.msra.mxu0 %v2098
    %2199 = vmatprep.subr.mxu0 0.0
    %2200 = vmatpush1.msra.mxu0 %v2099
    %2201 = vmatprep.subr.mxu0 0.0
    %2202 = vmatpush1.msra.mxu0 0.0
    %2203 = vmatprep.subr.mxu0 0.0
    %2204 = vmatpush1.msra.mxu0 0.0
    %2205 = vmatprep.subr.mxu0 0.0
    %2206 = vmatpush1.msra.mxu0 0.0
    %2207 = vmatprep.subr.mxu0 0.0
    %2208 = vmatpush1.msra.mxu0 0.0
    %2209 = vmatprep.subr.mxu0 0.0
    %2210 = vmatpush1.msra.mxu0 0.0
    %2211 = vmatprep.subr.mxu0 0.0
    %2212 = vmatpush1.msra.mxu0 0.0
    %2213 = vmatprep.subr.mxu0 0.0
    %2214 = vmatpush1.msra.mxu0 0.0
    %2215 = vmatprep.subr.mxu0 0.0
    %2216 = vmatpush1.msra.mxu0 0.0
    %2217 = vmatprep.subr.mxu0 0.0
    %2218 = vmatpush1.msra.mxu0 0.0
    %2219 = vmatprep.subr.mxu0 0.0
    %2220 = vmatpush1.msra.mxu0 0.0
    %2221 = vmatprep.subr.mxu0 0.0
    %2222 = vmatpush1.msra.mxu0 0.0
    %2223 = vmatprep.subr.mxu0 0.0
    %2224 = vmatpush1.msra.mxu0 0.0
    %2225 = vmatprep.subr.mxu0 0.0
    %2226 = vmatpush1.msra.mxu0 0.0
    %2227 = vmatprep.subr.mxu0 0.0
    %2228 = vmatpush1.msra.mxu0 0.0
    %2229 = vmatprep.subr.mxu0 0.0
    %2230 = vmatpush1.msra.mxu0 0.0
    %2231 = vmatprep.subr.mxu0 0.0
    %2232 = vmatpush1.msra.mxu0 0.0
    %2233 = vmatprep.subr.mxu0 0.0
    %2234 = vmatpush1.msra.mxu0 0.0
    %2235 = vmatprep.subr.mxu0 0.0
    %2236 = vmatpush1.msra.mxu0 0.0
    %2237 = vmatprep.subr.mxu0 0.0
    %2238 = vmatpush1.msra.mxu0 0.0
    %2239 = vmatprep.subr.mxu0 0.0
    %2240 = vmatpush1.msra.mxu0 0.0
    %2241 = vmatprep.subr.mxu0 0.0
    %2242 = vmatpush1.msra.mxu0 0.0
    %2243 = vmatprep.subr.mxu0 0.0
    %2244 = vmatpush1.msra.mxu0 0.0
    %2245 = vmatprep.subr.mxu0 0.0
    %2246 = vmatpush1.msra.mxu0 0.0
    %2247 = vmatprep.subr.mxu0 0.0
    %2248 = vmatpush1.msra.mxu0 0.0
    %2249 = vmatprep.mubr.f32.mxu0 0.0
    %2250 = vmatmul.mubr.f32.gmra.mrb[0].mxu0 %v2183
    %v2251 = vpop.f32.mrb[0].mxu0
    %v2252 = vadd.f32 %v2180, %v2251
    %v2253 = vpop.f32.mrb[0].mxu0
    %2254 = vdwg.mxu0
    %v2256 = vsub.f32 %v2091, %v2109
    %v2257 = vand.u32 2147483647, %v2256
    %v2258 = vld [vmem:[%s6 + $0x80] sm:$0xff]
    %v2259 = vld [vmem:[%s6 + $0x88] sm:$0xff]
    %v2260 = vld [vmem:[%s6 + $0x90] sm:$0xff]
    %v2261 = vld [vmem:[%s6 + $0x98] sm:$0xff]
    %v2262 = vld [vmem:[%s6 + $0xa0] sm:$0xff]
    %v2263 = vld [vmem:[%s6 + $0xa8] sm:$0xff]
    %v2264 = vld [vmem:[%s6 + $0xb0] sm:$0xff]
    %v2265 = vld [vmem:[%s6 + $0xb8] sm:$0xff]
    %v2267 = vsel %vm2110, %v2257, 0
    %2269 = vmatprep.subr.mxu0 0.0
    %2270 = vmatpush1.msra.mxu0 %v2258
    %2271 = vmatprep.subr.mxu0 0.0
    %2272 = vmatpush1.msra.mxu0 %v2259
    %2273 = vmatprep.subr.mxu0 0.0
    %2274 = vmatpush1.msra.mxu0 %v2260
    %2275 = vmatprep.subr.mxu0 0.0
    %2276 = vmatpush1.msra.mxu0 %v2261
    %2277 = vmatprep.subr.mxu0 0.0
    %2278 = vmatpush1.msra.mxu0 %v2262
    %2279 = vmatprep.subr.mxu0 0.0
    %2280 = vmatpush1.msra.mxu0 %v2263
    %2281 = vmatprep.subr.mxu0 0.0
    %2282 = vmatpush1.msra.mxu0 %v2264
    %2283 = vmatprep.subr.mxu0 0.0
    %2284 = vmatpush1.msra.mxu0 %v2265
    %2285 = vmatprep.subr.mxu0 0.0
    %2286 = vmatpush1.msra.mxu0 0.0
    %2287 = vmatprep.subr.mxu0 0.0
    %2288 = vmatpush1.msra.mxu0 0.0
    %2289 = vmatprep.subr.mxu0 0.0
    %2290 = vmatpush1.msra.mxu0 0.0
    %2291 = vmatprep.subr.mxu0 0.0
    %2292 = vmatpush1.msra.mxu0 0.0
    %2293 = vmatprep.subr.mxu0 0.0
    %2294 = vmatpush1.msra.mxu0 0.0
    %2295 = vmatprep.subr.mxu0 0.0
    %2296 = vmatpush1.msra.mxu0 0.0
    %2297 = vmatprep.subr.mxu0 0.0
    %2298 = vmatpush1.msra.mxu0 0.0
    %2299 = vmatprep.subr.mxu0 0.0
    %2300 = vmatpush1.msra.mxu0 0.0
    %2301 = vmatprep.subr.mxu0 0.0
    %2302 = vmatpush1.msra.mxu0 0.0
    %2303 = vmatprep.subr.mxu0 0.0
    %2304 = vmatpush1.msra.mxu0 0.0
    %2305 = vmatprep.subr.mxu0 0.0
    %2306 = vmatpush1.msra.mxu0 0.0
    %2307 = vmatprep.subr.mxu0 0.0
    %2308 = vmatpush1.msra.mxu0 0.0
    %2309 = vmatprep.subr.mxu0 0.0
    %2310 = vmatpush1.msra.mxu0 0.0
    %2311 = vmatprep.subr.mxu0 0.0
    %2312 = vmatpush1.msra.mxu0 0.0
    %2313 = vmatprep.subr.mxu0 0.0
    %2314 = vmatpush1.msra.mxu0 0.0
    %2315 = vmatprep.subr.mxu0 0.0
    %2316 = vmatpush1.msra.mxu0 0.0
    %2317 = vmatprep.subr.mxu0 0.0
    %2318 = vmatpush1.msra.mxu0 0.0
    %2319 = vmatprep.subr.mxu0 0.0
    %2320 = vmatpush1.msra.mxu0 0.0
    %2321 = vmatprep.subr.mxu0 0.0
    %2322 = vmatpush1.msra.mxu0 0.0
    %2323 = vmatprep.subr.mxu0 0.0
    %2324 = vmatpush1.msra.mxu0 0.0
    %2325 = vmatprep.subr.mxu0 0.0
    %2326 = vmatpush1.msra.mxu0 0.0
    %2327 = vmatprep.subr.mxu0 0.0
    %2328 = vmatpush1.msra.mxu0 0.0
    %2329 = vmatprep.subr.mxu0 0.0
    %2330 = vmatpush1.msra.mxu0 0.0
    %2331 = vmatprep.subr.mxu0 0.0
    %2332 = vmatpush1.msra.mxu0 0.0
    %2333 = vmatprep.mubr.f32.mxu0 0.0
    %2334 = vmatmul.mubr.f32.gmra.mrb[0].mxu0 %v2267
    %v2335 = vpop.f32.mrb[0].mxu0
    %v2336 = vadd.f32 0.0, %v2335
    %v2337 = vpop.f32.mrb[0].mxu0
    %2338 = vdwg.mxu0
    %v2339 = vadd.f32 %v2252, %v2336
    %v2340 = vmul.f32 %v2091, %v2109
    %v2341 = vld [vmem:[%s6 + $0xc0] sm:$0xff]
    %v2342 = vld [vmem:[%s6 + $0xc8] sm:$0xff]
    %v2343 = vld [vmem:[%s6 + $0xd0] sm:$0xff]
    %v2344 = vld [vmem:[%s6 + $0xd8] sm:$0xff]
    %v2345 = vld [vmem:[%s6 + $0xe0] sm:$0xff]
    %v2346 = vld [vmem:[%s6 + $0xe8] sm:$0xff]
    %v2347 = vld [vmem:[%s6 + $0xf0] sm:$0xff]
    %v2348 = vld [vmem:[%s6 + $0xf8] sm:$0xff]
    %v2350 = vsel %vm2110, %v2340, 0
    %2352 = vmatprep.subr.mxu0 0.0
    %2353 = vmatpush1.msra.mxu0 %v2341
    %2354 = vmatprep.subr.mxu0 0.0
    %2355 = vmatpush1.msra.mxu0 %v2342
    %2356 = vmatprep.subr.mxu0 0.0
    %2357 = vmatpush1.msra.mxu0 %v2343
    %2358 = vmatprep.subr.mxu0 0.0
    %2359 = vmatpush1.msra.mxu0 %v2344
    %2360 = vmatprep.subr.mxu0 0.0
    %2361 = vmatpush1.msra.mxu0 %v2345
    %2362 = vmatprep.subr.mxu0 0.0
    %2363 = vmatpush1.msra.mxu0 %v2346
    %2364 = vmatprep.subr.mxu0 0.0
    %2365 = vmatpush1.msra.mxu0 %v2347
    %2366 = vmatprep.subr.mxu0 0.0
    %2367 = vmatpush1.msra.mxu0 %v2348
    %2368 = vmatprep.subr.mxu0 0.0
    %2369 = vmatpush1.msra.mxu0 0.0
    %2370 = vmatprep.subr.mxu0 0.0
    %2371 = vmatpush1.msra.mxu0 0.0
    %2372 = vmatprep.subr.mxu0 0.0
    %2373 = vmatpush1.msra.mxu0 0.0
    %2374 = vmatprep.subr.mxu0 0.0
    %2375 = vmatpush1.msra.mxu0 0.0
    %2376 = vmatprep.subr.mxu0 0.0
    %2377 = vmatpush1.msra.mxu0 0.0
    %2378 = vmatprep.subr.mxu0 0.0
    %2379 = vmatpush1.msra.mxu0 0.0
    %2380 = vmatprep.subr.mxu0 0.0
    %2381 = vmatpush1.msra.mxu0 0.0
    %2382 = vmatprep.subr.mxu0 0.0
    %2383 = vmatpush1.msra.mxu0 0.0
    %2384 = vmatprep.subr.mxu0 0.0
    %2385 = vmatpush1.msra.mxu0 0.0
    %2386 = vmatprep.subr.mxu0 0.0
    %2387 = vmatpush1.msra.mxu0 0.0
    %2388 = vmatprep.subr.mxu0 0.0
    %2389 = vmatpush1.msra.mxu0 0.0
    %2390 = vmatprep.subr.mxu0 0.0
    %2391 = vmatpush1.msra.mxu0 0.0
    %2392 = vmatprep.subr.mxu0 0.0
    %2393 = vmatpush1.msra.mxu0 0.0
    %2394 = vmatprep.subr.mxu0 0.0
    %2395 = vmatpush1.msra.mxu0 0.0
    %2396 = vmatprep.subr.mxu0 0.0
    %2397 = vmatpush1.msra.mxu0 0.0
    %2398 = vmatprep.subr.mxu0 0.0
    %2399 = vmatpush1.msra.mxu0 0.0
    %2400 = vmatprep.subr.mxu0 0.0
    %2401 = vmatpush1.msra.mxu0 0.0
    %2402 = vmatprep.subr.mxu0 0.0
    %2403 = vmatpush1.msra.mxu0 0.0
    %2404 = vmatprep.subr.mxu0 0.0
    %2405 = vmatpush1.msra.mxu0 0.0
    %2406 = vmatprep.subr.mxu0 0.0
    %2407 = vmatpush1.msra.mxu0 0.0
    %2408 = vmatprep.subr.mxu0 0.0
    %2409 = vmatpush1.msra.mxu0 0.0
    %2410 = vmatprep.subr.mxu0 0.0
    %2411 = vmatpush1.msra.mxu0 0.0
    %2412 = vmatprep.subr.mxu0 0.0
    %2413 = vmatpush1.msra.mxu0 0.0
    %2414 = vmatprep.subr.mxu0 0.0
    %2415 = vmatpush1.msra.mxu0 0.0
    %2416 = vmatprep.mubr.f32.mxu0 0.0
    %2417 = vmatmul.mubr.f32.gmra.mrb[0].mxu0 %v2350
    %v2418 = vpop.f32.mrb[0].mxu0
    %v2419 = vadd.f32 0.0, %v2418
    %v2420 = vpop.f32.mrb[0].mxu0
    %2421 = vdwg.mxu0
    %v2422 = vadd.f32 %v2339, %v2419
    %v2423 = vld [vmem:[%s7] sm:$0x1]
    %v2425 = vlaneseq
    %v2426 = vshrl.u32 %v2425, 7
    %v2427 = vsub.s32 0, %v2426
    %v2428 = vrot.slane %v2423, %v2427
    %v2430 = vadd.f32 %v2422, %v2428
    %v2431 = vmax.f32 %v2430, 0.0
    %v2432 = vld [vmem:[%s8] sm:$0xff]
    %v2433 = vld [vmem:[%s8 + $0x8] sm:$0xff]
    %v2434 = vld [vmem:[%s8 + $0x10] sm:$0xff]
    %v2435 = vld [vmem:[%s8 + $0x18] sm:$0xff]
    %v2436 = vld [vmem:[%s8 + $0x20] sm:$0xff]
    %v2437 = vld [vmem:[%s8 + $0x28] sm:$0xff]
    %v2438 = vld [vmem:[%s8 + $0x30] sm:$0xff]
    %v2439 = vld [vmem:[%s8 + $0x38] sm:$0xff]
    %v2440 = vld [vmem:[%s9] sm:$0x1]
    %v2442 = vlaneseq
    %v2443 = vshrl.u32 %v2442, 7
    %v2444 = vsub.s32 0, %v2443
    %v2445 = vrot.slane %v2440, %v2444
    %v2448 = vsel %vm2110, %v2431, 0
    %2450 = vmatprep.subr.mxu0 0.0
    %2451 = vmatpush1.msra.mxu0 %v2432
    %2452 = vmatprep.subr.mxu0 0.0
    %2453 = vmatpush1.msra.mxu0 %v2433
    %2454 = vmatprep.subr.mxu0 0.0
    %2455 = vmatpush1.msra.mxu0 %v2434
    %2456 = vmatprep.subr.mxu0 0.0
    %2457 = vmatpush1.msra.mxu0 %v2435
    %2458 = vmatprep.subr.mxu0 0.0
    %2459 = vmatpush1.msra.mxu0 %v2436
    %2460 = vmatprep.subr.mxu0 0.0
    %2461 = vmatpush1.msra.mxu0 %v2437
    %2462 = vmatprep.subr.mxu0 0.0
    %2463 = vmatpush1.msra.mxu0 %v2438
    %2464 = vmatprep.subr.mxu0 0.0
    %2465 = vmatpush1.msra.mxu0 %v2439
    %2466 = vmatprep.subr.mxu0 0.0
    %2467 = vmatpush1.msra.mxu0 0.0
    %2468 = vmatprep.subr.mxu0 0.0
    %2469 = vmatpush1.msra.mxu0 0.0
    %2470 = vmatprep.subr.mxu0 0.0
    %2471 = vmatpush1.msra.mxu0 0.0
    %2472 = vmatprep.subr.mxu0 0.0
    %2473 = vmatpush1.msra.mxu0 0.0
    %2474 = vmatprep.subr.mxu0 0.0
    %2475 = vmatpush1.msra.mxu0 0.0
    %2476 = vmatprep.subr.mxu0 0.0
    %2477 = vmatpush1.msra.mxu0 0.0
    %2478 = vmatprep.subr.mxu0 0.0
    %2479 = vmatpush1.msra.mxu0 0.0
    %2480 = vmatprep.subr.mxu0 0.0
    %2481 = vmatpush1.msra.mxu0 0.0
    %2482 = vmatprep.subr.mxu0 0.0
    %2483 = vmatpush1.msra.mxu0 0.0
    %2484 = vmatprep.subr.mxu0 0.0
    %2485 = vmatpush1.msra.mxu0 0.0
    %2486 = vmatprep.subr.mxu0 0.0
    %2487 = vmatpush1.msra.mxu0 0.0
    %2488 = vmatprep.subr.mxu0 0.0
    %2489 = vmatpush1.msra.mxu0 0.0
    %2490 = vmatprep.subr.mxu0 0.0
    %2491 = vmatpush1.msra.mxu0 0.0
    %2492 = vmatprep.subr.mxu0 0.0
    %2493 = vmatpush1.msra.mxu0 0.0
    %2494 = vmatprep.subr.mxu0 0.0
    %2495 = vmatpush1.msra.mxu0 0.0
    %2496 = vmatprep.subr.mxu0 0.0
    %2497 = vmatpush1.msra.mxu0 0.0
    %2498 = vmatprep.subr.mxu0 0.0
    %2499 = vmatpush1.msra.mxu0 0.0
    %2500 = vmatprep.subr.mxu0 0.0
    %2501 = vmatpush1.msra.mxu0 0.0
    %2502 = vmatprep.subr.mxu0 0.0
    %2503 = vmatpush1.msra.mxu0 0.0
    %2504 = vmatprep.subr.mxu0 0.0
    %2505 = vmatpush1.msra.mxu0 0.0
    %2506 = vmatprep.subr.mxu0 0.0
    %2507 = vmatpush1.msra.mxu0 0.0
    %2508 = vmatprep.subr.mxu0 0.0
    %2509 = vmatpush1.msra.mxu0 0.0
    %2510 = vmatprep.subr.mxu0 0.0
    %2511 = vmatpush1.msra.mxu0 0.0
    %2512 = vmatprep.subr.mxu0 0.0
    %2513 = vmatpush1.msra.mxu0 0.0
    %2514 = vmatprep.mubr.f32.mxu0 0.0
    %2515 = vmatmul.mubr.f32.gmra.mrb[0].mxu0 %v2448
    %v2516 = vpop.f32.mrb[0].mxu0
    %v2517 = vadd.f32 %v2445, %v2516
    %v2518 = vpop.f32.mrb[0].mxu0
    %2519 = vdwg.mxu0
    %vm2520 = vcmask 17408
    %2521 = vst.msk [vmem:[#allocation7] sm:$0x3] %vm2520, %v2517
    // Predicated region
    $region84: #{res_bilstm_forward.1} parent=1 // pred_check
      _
    $region85: #{res_bilstm_forward.1} parent=1 // pred_check_branch
      %2523 = sbr.rel (0) target = $region87
    $region86: #{res_bilstm_forward.1} parent=1 // pred_region
      %s2525 = ssub.s32 32, 32
      %2526 = vsyncadd [#allocation8], %s2525
      %s2528 = sshll.u32 [#allocation7], 4
      %s2529 = int_to_ptr.vmem [resolvable:$true] %s2528
      %2531 = dma.vmem_to_hbm [thread:$0]  %s2529, 32, %s10, [#allocation8]
    $region87: #{res_bilstm_forward.1} parent=1 // pred_fallthru
      _
    // Predicated region
    $region88: #{res_bilstm_forward.1} parent=1 // pred_check
      _
    $region89: #{res_bilstm_forward.1} parent=1 // pred_check_branch
      %2533 = sbr.rel (0) target = $region91
    $region90: #{res_bilstm_forward.1} parent=1 // pred_region
      %2534 = dma.done [#allocation8], 32
    $region91: #{res_bilstm_forward.1} parent=1 // pred_fallthru
      _
    %2535 = vsyncpa [#allocation8], 1

</llo_original>
